<compile_context>
chip_gen: v7x
topology: tpu7x:2x2x1
jax: 0.10.0
libtpu: 0.0.40
codegen_flags: <defaults>
</compile_context>

<pallas_src>
import functools

import jax
import jax.numpy as jnp
from jax import lax
from jax.experimental import pallas as pl
from jax.experimental.pallas import tpu as pltpu

_LO = 8           # ring-buffer W interior starts at sublane 8 (aligned stores)
_W_HALO_PAD = 16  # ring W extent = W + 16 (multiple of 8); halo cols LO-1, LO+W


# ------------------------------ fused kernel ---------------------------------

def _basic_block_kernel(x_ref, w1_ref, b1_ref, w2_ref, b2_ref, o_ref,
                        pack1_ref, pack2_ref, hring_ref, *, res):
    """Fused BasicBlock: conv3x3x3+BN+ReLU -> conv3x3x3+BN (+x) -> ReLU.

    Per-grid-step (one batch element) layouts, channels on the lane axis:
      x_ref    : (D, H, W, Cin)
      w1_ref   : (27*Cin, CP)   b1_ref: (1, CP)   (BN folded, tap-major K)
      w2_ref   : (27*CP,  CP)   b2_ref: (1, CP)
      o_ref    : (D, H, W, CP)
      pack1_ref: (H, W, 27*Cin)      lane-dense im2col LHS for conv1
      pack2_ref: (H*W, 27*CP)        lane-dense im2col LHS for conv2
      hring_ref: (4, H+2, W+16, CP)  rolling ring of conv1-output depth slices
                                     with an H/W halo (borders kept at zero)
    """
    D, H, W, CIN = x_ref.shape
    CP = o_ref.shape[-1]
    M = H * W
    K1 = 27 * CIN
    Wr = W + _W_HALO_PAD
    f32 = jnp.float32

    # --- one-time setup (re-done every grid step; scratch persists across steps)
    # pack1: per-tap H/W border sub-rectangles and the depth<0 taps of the first
    # slice are never written and must read as zero.
    pack1_ref[...] = jnp.zeros_like(pack1_ref)
    # hring: border-only zeroing (rows 0 / H+1, the W halo column slabs) plus
    # the depth == -1 slot interior.  Slot interiors 1..3 are always overwritten.
    hring_ref[:, 0:1, :, :] = jnp.zeros((4, 1, Wr, CP), f32)
    hring_ref[:, H + 1:H + 2, :, :] = jnp.zeros((4, 1, Wr, CP), f32)
    hring_ref[:, 1:H + 1, 0:_LO, :] = jnp.zeros((4, H, _LO, CP), f32)
    hring_ref[:, 1:H + 1, _LO + W:Wr, :] = jnp.zeros((4, H, Wr - _LO - W, CP), f32)
    hring_ref[0:1, 1:H + 1, _LO:_LO + W, :] = jnp.zeros((1, H, W, CP), f32)

    # --- biases: broadcast hoisted out of the depth loop (no per-iter broadcast)
    b1 = jnp.broadcast_to(b1_ref[...], (M, CP))
    b2 = jnp.broadcast_to(b2_ref[...], (M, CP))

    # --------------------------- conv1 helpers -------------------------------
    def pack_x_taps(t, kds):
        """Pack x windows for taps with kd in `kds` (target depth slice t)."""
        for kd in kds:
            sd = t + kd - 1                       # source depth (must be valid)
            for kh in range(3):
                h0, h1 = max(0, 1 - kh), min(H, H + 1 - kh)
                for kw in range(3):
                    w0, w1 = max(0, 1 - kw), min(W, W + 1 - kw)
                    if h1 <= h0 or w1 <= w0:
                        continue
                    tap = kd * 9 + kh * 3 + kw
                    pack1_ref[h0:h1, w0:w1, tap * CIN:(tap + 1) * CIN] = (
                        x_ref[sd, h0 + kh - 1:h1 + kh - 1,
                              w0 + kw - 1:w1 + kw - 1, :])

    def conv1_store(slot):
        """One K=27*Cin MXU matmul (BN folded) + ReLU -> ring slot interior."""
        p1 = pack1_ref[...].reshape(M, K1)
        h = jnp.dot(p1, w1_ref[...], preferred_element_type=jnp.float32) + b1
        hring_ref[slot, 1:H + 1, _LO:_LO + W, :] = (
            jnp.maximum(h, 0.0).reshape(H, W, CP))

    def zero_ring_slot(slot):
        hring_ref[slot, 1:H + 1, _LO:_LO + W, :] = jnp.zeros((H, W, CP), f32)

    # --- prologue: conv1 for depth 0 (depth -1 taps stay at their init zeros)
    pack_x_taps(0, [1, 2] if D > 1 else [1])
    conv1_store(1)                                # conv1(t) lives in slot (t+1)&3

    # --- main depth loop: produce conv1(d+1), consume conv2(d) ----------------
    @pl.loop(0, D)
    def _depth(d):
        t = d + 1                                 # conv1 target depth this step

        @pl.when(t < D)
        def _produce():
            pack_x_taps(t, [0, 1])                # depths t-1, t always valid here

            @pl.when(t + 1 < D)
            def _kd2_valid():
                pack_x_taps(t, [2])

            @pl.when(t + 1 >= D)
            def _kd2_zero():                      # depth t+1 is out of range
                pack1_ref[:, :, 18 * CIN:K1] = jnp.zeros((H, W, 9 * CIN), f32)

            conv1_store((t + 1) & 3)

        @pl.when(t >= D)
        def _virtual_zero_slice():                # ring slot for virtual depth D
            zero_ring_slot((t + 1) & 3)

        # conv2 at depth d: pack the 27 full (H, W) windows from ring slots
        # holding depths d-1, d, d+1, then one K=27*CP MXU matmul.
        for kd in range(3):
            slot = (d + kd) & 3
            for kh in range(3):
                for kw in range(3):
                    tap = kd * 9 + kh * 3 + kw
                    win = hring_ref[slot, kh:kh + H,
                                    _LO - 1 + kw:_LO - 1 + kw + W, :]
                    pack2_ref[:, tap * CP:(tap + 1) * CP] = win.reshape(M, CP)

        acc = jnp.dot(pack2_ref[...], w2_ref[...],
                      preferred_element_type=jnp.float32) + b2
        if res:
            # TODO(synk): the source's res=True branch calls undefined
            # self.conv3d and adds a tuple to a tensor; interpreted as the
            # intended residual add.
            acc = acc + x_ref[d].reshape(M, CP)
        o_ref[d] = jnp.maximum(acc, 0.0).reshape(H, W, CP).astype(o_ref.dtype)


# ------------------------------ wrappers --------------------------------------

def _fold_conv_bn(conv_w, conv_b, bn):
    """Fold inference-mode BatchNorm into the conv.

    Returns (w_packed, b): w_packed is (27*Cin, Cout), tap-major
    (k = ((kd*3+kh)*3+kw)*Cin + ci) to match the kernel's im2col packing.
    """
    scale = bn["gamma"] * lax.rsqrt(bn["var"] + bn["eps"])
    cout, cin = conv_w.shape[0], conv_w.shape[1]
    w = jnp.transpose(conv_w, (2, 3, 4, 1, 0)).reshape(27 * cin, cout)
    w = (w * scale[None, :]).astype(jnp.float32)
    b = ((conv_b - bn["mean"]) * scale + bn["beta"]).reshape(1, cout)
    return w, b.astype(jnp.float32)


def basic_block_forward_cl(x_cl, params, *, res=False):
    """BasicBlock.forward, channels-last: (N, D, H, W, Cin) -> (N, D, H, W, planes).

    Keep activations in this layout between consecutive blocks to avoid the
    NCDHW <-> channels-last HBM relayouts entirely.
    """
    N, D, H, W, CIN = x_cl.shape
    w1, b1 = _fold_conv_bn(params["conv1_w"], params["conv1_b"], params["bn1"])
    w2, b2 = _fold_conv_bn(params["conv2_w"], params["conv2_b"], params["bn2"])
    CP = w1.shape[-1]
    if res and CIN != CP:
        raise ValueError("res=True requires inplanes == planes")

    return pl.pallas_call(
        functools.partial(_basic_block_kernel, res=res),
        out_shape=jax.ShapeDtypeStruct((N, D, H, W, CP), jnp.float32),
        grid=(N,),
        in_specs=[
            pl.BlockSpec((None, D, H, W, CIN), lambda n: (n, 0, 0, 0, 0)),
            pl.BlockSpec((27 * CIN, CP), lambda n: (0, 0)),
            pl.BlockSpec((1, CP), lambda n: (0, 0)),
            pl.BlockSpec((27 * CP, CP), lambda n: (0, 0)),
            pl.BlockSpec((1, CP), lambda n: (0, 0)),
        ],
        out_specs=pl.BlockSpec((None, D, H, W, CP), lambda n: (n, 0, 0, 0, 0)),
        scratch_shapes=[
            pltpu.VMEM((H, W, 27 * CIN), jnp.float32),              # conv1 im2col
            pltpu.VMEM((H * W, 27 * CP), jnp.float32),              # conv2 im2col
            pltpu.VMEM((4, H + 2, W + _W_HALO_PAD, CP), jnp.float32),  # hidden ring
        ],
        compiler_params=pltpu.CompilerParams(
            # Batch axis is independent: DMA pipelining + v7x dual-TC sharding.
            dimension_semantics=("parallel",),
            # Above the 16/32 MiB scoped defaults, safely below v7x's 64 MiB
            # physical; the streaming design needs only a few MiB per step.
            vmem_limit_bytes=48 * 1024 * 1024,
        ),
    )(x_cl.astype(jnp.float32), w1, b1, w2, b2)


def basic_block_forward(x_ncdhw, params, *, res=False):
    """PyTorch-layout entry: (N, Cin, D, H, W) f32 -> (N, planes, D, H, W) f32."""
    x_cl = jnp.transpose(x_ncdhw, (0, 2, 3, 4, 1))
    out = basic_block_forward_cl(x_cl, params, res=res)
    return jnp.transpose(out, (0, 4, 1, 2, 3))


# ------------------------------ parameters ------------------------------------

def init_params(key, inplanes, planes, num_features=None):
    # conv / norm_layer ctor args are unspecified: Conv3d + BatchNorm3d assumed.
    num_features = planes if num_features is None else num_features
    assert num_features == planes, "norm_layer(num_features) must match planes"
    k = jax.random.split(key, 12)

    def conv_init(kw, kb, cout, cin):
        std = (cin * 27) ** -0.5
        return (std * jax.random.normal(kw, (cout, cin, 3, 3, 3), jnp.float32),
                std * jax.random.normal(kb, (cout,), jnp.float32))

    def bn_init(kg, kb2, km, kv, c):
        return {"gamma": 1.0 + 0.1 * jax.random.normal(kg, (c,), jnp.float32),
                "beta": 0.1 * jax.random.normal(kb2, (c,), jnp.float32),
                "mean": 0.1 * jax.random.normal(km, (c,), jnp.float32),
                "var": jax.random.uniform(kv, (c,), jnp.float32, 0.5, 1.5),
                "eps": jnp.float32(1e-5)}

    c1w, c1b = conv_init(k[0], k[1], planes, inplanes)
    c2w, c2b = conv_init(k[2], k[3], planes, planes)
    return {"conv1_w": c1w, "conv1_b": c1b,
            "bn1": bn_init(k[4], k[5], k[6], k[7], planes),
            "conv2_w": c2w, "conv2_b": c2b,
            "bn2": bn_init(k[8], k[9], k[10], k[11], planes)}


# ------------------------------ pure-JAX reference ----------------------------

def _ref_forward(x, params, *, res=False):
    def conv3d(x, w, b):
        y = lax.conv_general_dilated(
            x, w, window_strides=(1, 1, 1), padding="SAME",
            dimension_numbers=("NCDHW", "OIDHW", "NCDHW"),
            precision=lax.Precision.HIGHEST)
        return y + b[None, :, None, None, None]

    def bn(x, p):
        s = p["gamma"] * lax.rsqrt(p["var"] + p["eps"])
        return ((x - p["mean"][None, :, None, None, None])
                * s[None, :, None, None, None]
                + p["beta"][None, :, None, None, None])

    h = jax.nn.relu(bn(conv3d(x, params["conv1_w"], params["conv1_b"]), params["bn1"]))
    h = bn(conv3d(h, params["conv2_w"], params["conv2_b"]), params["bn2"])
    if res:
        h = h + x
    return jax.nn.relu(h)


# ------------------------------ main -------------------------------------------

if __name__ == "__main__":
    # res=False: the only executable path of the PyTorch source.
    kx, kp = jax.random.split(jax.random.PRNGKey(0))
    N, CIN, CP, D, H, W = 2, 4, 32, 8, 8, 8
    x = jax.random.normal(kx, (N, CIN, D, H, W), dtype=jnp.float32)
    params = init_params(kp, inplanes=CIN, planes=CP)

    fwd = jax.jit(functools.partial(basic_block_forward, res=False))
    out = jax.block_until_ready(fwd(x, params))
    ref = _ref_forward(x, params, res=False)
    assert out.shape == (N, CP, D, H, W), out.shape
    assert jnp.allclose(out, ref, atol=2e-2, rtol=2e-2), \
        float(jnp.max(jnp.abs(out - ref)))

    # res=True: interpreted as the intended residual block (inplanes == planes).
    kx2, kp2 = jax.random.split(jax.random.PRNGKey(1))
    x2 = jax.random.normal(kx2, (N, CP, D, H, W), dtype=jnp.float32)
    params2 = init_params(kp2, inplanes=CP, planes=CP)
    fwd_res = jax.jit(functools.partial(basic_block_forward, res=True))
    out2 = jax.block_until_ready(fwd_res(x2, params2))
    ref2 = _ref_forward(x2, params2, res=True)
    assert out2.shape == (N, CP, D, H, W), out2.shape
    assert jnp.allclose(out2, ref2, atol=2e-2, rtol=2e-2), \
        float(jnp.max(jnp.abs(out2 - ref2)))

    print("KERNEL_OK")
</pallas_src>

<mosaic_0001>
module attributes {stable_mosaic.version = 11 : i64} {
  func.func @_basic_block_kernel(%arg0: i32, %arg1: memref<1x8x8x8x4xf32, #tpu.memory_space<vmem>>, %arg2: memref<108x32xf32, #tpu.memory_space<vmem>>, %arg3: memref<1x32xf32, #tpu.memory_space<vmem>>, %arg4: memref<864x32xf32, #tpu.memory_space<vmem>>, %arg5: memref<1x32xf32, #tpu.memory_space<vmem>>, %arg6: memref<1x8x8x8x32xf32, #tpu.memory_space<vmem>>, %arg7: memref<8x8x108xf32, #tpu.memory_space<vmem>>, %arg8: memref<64x864xf32, #tpu.memory_space<vmem>>, %arg9: memref<4x10x24x32xf32, #tpu.memory_space<vmem>>) attributes {dimension_semantics = [#tpu.dimension_semantics<parallel>], iteration_bounds = array<i64: 2>, scalar_prefetch = 0 : i64, scratch_operands = 3 : i64, tpu.core_type = #tpu.core_type<tc>, window_params = [{transform_indices = @transform_0, window_bounds = array<i64: 1, 8, 8, 8, 4>}, {pipeline_mode = #tpu.pipeline_mode<synchronous>, transform_indices = @transform_1, window_bounds = array<i64: 108, 32>}, {pipeline_mode = #tpu.pipeline_mode<synchronous>, transform_indices = @transform_2, window_bounds = array<i64: 1, 32>}, {pipeline_mode = #tpu.pipeline_mode<synchronous>, transform_indices = @transform_3, window_bounds = array<i64: 864, 32>}, {pipeline_mode = #tpu.pipeline_mode<synchronous>, transform_indices = @transform_4, window_bounds = array<i64: 1, 32>}, {transform_indices = @transform_5, window_bounds = array<i64: 1, 8, 8, 8, 32>}]} {
    %cst = arith.constant 0.000000e+00 : f32
    %0 = vector.broadcast %cst : f32 to vector<8x8x108xf32>
    %c0 = arith.constant 0 : index
    %c0_0 = arith.constant 0 : index
    %c0_1 = arith.constant 0 : index
    %1 = vector.load %arg7[%c0, %c0_0, %c0_1] : memref<8x8x108xf32, #tpu.memory_space<vmem>>, vector<8x8x108xf32>
    tpu.vector_store %arg7[%c0, %c0_0, %c0_1], %0 {strides = array<i32>} : memref<8x8x108xf32, #tpu.memory_space<vmem>>, vector<8x8x108xf32>,
    %cst_2 = arith.constant 0.000000e+00 : f32
    %2 = vector.broadcast %cst_2 : f32 to vector<4x1x24x32xf32>
    %c0_3 = arith.constant 0 : index
    %c0_4 = arith.constant 0 : index
    %c0_5 = arith.constant 0 : index
    %c0_6 = arith.constant 0 : index
    %3 = vector.load %arg9[%c0_3, %c0_4, %c0_5, %c0_6] : memref<4x10x24x32xf32, #tpu.memory_space<vmem>>, vector<4x1x24x32xf32>
    tpu.vector_store %arg9[%c0_3, %c0_4, %c0_5, %c0_6], %2 {strides = array<i32>} : memref<4x10x24x32xf32, #tpu.memory_space<vmem>>, vector<4x1x24x32xf32>,
    %cst_7 = arith.constant 0.000000e+00 : f32
    %4 = vector.broadcast %cst_7 : f32 to vector<4x1x24x32xf32>
    %c0_8 = arith.constant 0 : index
    %c9 = arith.constant 9 : index
    %c0_9 = arith.constant 0 : index
    %c0_10 = arith.constant 0 : index
    %5 = vector.load %arg9[%c0_8, %c9, %c0_9, %c0_10] : memref<4x10x24x32xf32, #tpu.memory_space<vmem>>, vector<4x1x24x32xf32>
    tpu.vector_store %arg9[%c0_8, %c9, %c0_9, %c0_10], %4 {strides = array<i32>} : memref<4x10x24x32xf32, #tpu.memory_space<vmem>>, vector<4x1x24x32xf32>,
    %cst_11 = arith.constant 0.000000e+00 : f32
    %6 = vector.broadcast %cst_11 : f32 to vector<4x8x8x32xf32>
    %c0_12 = arith.constant 0 : index
    %c1 = arith.constant 1 : index
    %c0_13 = arith.constant 0 : index
    %c0_14 = arith.constant 0 : index
    %7 = vector.load %arg9[%c0_12, %c1, %c0_13, %c0_14] : memref<4x10x24x32xf32, #tpu.memory_space<vmem>>, vector<4x8x8x32xf32>
    tpu.vector_store %arg9[%c0_12, %c1, %c0_13, %c0_14], %6 {strides = array<i32>} : memref<4x10x24x32xf32, #tpu.memory_space<vmem>>, vector<4x8x8x32xf32>,
    %cst_15 = arith.constant 0.000000e+00 : f32
    %8 = vector.broadcast %cst_15 : f32 to vector<4x8x8x32xf32>
    %c0_16 = arith.constant 0 : index
    %c1_17 = arith.constant 1 : index
    %c16 = arith.constant 16 : index
    %c0_18 = arith.constant 0 : index
    %9 = vector.load %arg9[%c0_16, %c1_17, %c16, %c0_18] : memref<4x10x24x32xf32, #tpu.memory_space<vmem>>, vector<4x8x8x32xf32>
    tpu.vector_store %arg9[%c0_16, %c1_17, %c16, %c0_18], %8 {strides = array<i32>} : memref<4x10x24x32xf32, #tpu.memory_space<vmem>>, vector<4x8x8x32xf32>,
    %cst_19 = arith.constant 0.000000e+00 : f32
    %10 = vector.broadcast %cst_19 : f32 to vector<1x8x8x32xf32>
    %c0_20 = arith.constant 0 : index
    %c1_21 = arith.constant 1 : index
    %c8 = arith.constant 8 : index
    %c0_22 = arith.constant 0 : index
    %11 = vector.load %arg9[%c0_20, %c1_21, %c8, %c0_22] : memref<4x10x24x32xf32, #tpu.memory_space<vmem>>, vector<1x8x8x32xf32>
    tpu.vector_store %arg9[%c0_20, %c1_21, %c8, %c0_22], %10 {strides = array<i32>} : memref<4x10x24x32xf32, #tpu.memory_space<vmem>>, vector<1x8x8x32xf32>,
    %c0_23 = arith.constant 0 : index
    %c0_24 = arith.constant 0 : index
    %12 = vector.load %arg3[%c0_23, %c0_24] : memref<1x32xf32, #tpu.memory_space<vmem>>, vector<1x32xf32>
    %13 = vector.shape_cast %12 : vector<1x32xf32> to vector<1x32xf32>
    %14 = vector.broadcast %13 : vector<1x32xf32> to vector<64x32xf32>
    %c0_25 = arith.constant 0 : index
    %c0_26 = arith.constant 0 : index
    %15 = vector.load %arg5[%c0_25, %c0_26] : memref<1x32xf32, #tpu.memory_space<vmem>>, vector<1x32xf32>
    %16 = vector.shape_cast %15 : vector<1x32xf32> to vector<1x32xf32>
    %17 = vector.broadcast %16 : vector<1x32xf32> to vector<64x32xf32>
    %c0_27 = arith.constant 0 : index
    %c0_28 = arith.constant 0 : index
    %c0_29 = arith.constant 0 : index
    %c0_30 = arith.constant 0 : index
    %c0_31 = arith.constant 0 : index
    %18 = vector.load %arg1[%c0_27, %c0_28, %c0_29, %c0_30, %c0_31] : memref<1x8x8x8x4xf32, #tpu.memory_space<vmem>>, vector<1x1x7x7x4xf32>
    %19 = vector.shape_cast %18 : vector<1x1x7x7x4xf32> to vector<7x7x4xf32>
    %c1_32 = arith.constant 1 : index
    %c1_33 = arith.constant 1 : index
    %c36 = arith.constant 36 : index
    %20 = vector.load %arg7[%c1_32, %c1_33, %c36] : memref<8x8x108xf32, #tpu.memory_space<vmem>>, vector<7x7x4xf32>
    tpu.vector_store %arg7[%c1_32, %c1_33, %c36], %19 {strides = array<i32>} : memref<8x8x108xf32, #tpu.memory_space<vmem>>, vector<7x7x4xf32>,
    %c0_34 = arith.constant 0 : index
    %c0_35 = arith.constant 0 : index
    %c0_36 = arith.constant 0 : index
    %c0_37 = arith.constant 0 : index
    %c0_38 = arith.constant 0 : index
    %21 = vector.load %arg1[%c0_34, %c0_35, %c0_36, %c0_37, %c0_38] : memref<1x8x8x8x4xf32, #tpu.memory_space<vmem>>, vector<1x1x7x8x4xf32>
    %22 = vector.shape_cast %21 : vector<1x1x7x8x4xf32> to vector<7x8x4xf32>
    %c1_39 = arith.constant 1 : index
    %c0_40 = arith.constant 0 : index
    %c40 = arith.constant 40 : index
    %23 = vector.load %arg7[%c1_39, %c0_40, %c40] : memref<8x8x108xf32, #tpu.memory_space<vmem>>, vector<7x8x4xf32>
    tpu.vector_store %arg7[%c1_39, %c0_40, %c40], %22 {strides = array<i32>} : memref<8x8x108xf32, #tpu.memory_space<vmem>>, vector<7x8x4xf32>,
    %c0_41 = arith.constant 0 : index
    %c0_42 = arith.constant 0 : index
    %c0_43 = arith.constant 0 : index
    %c1_44 = arith.constant 1 : index
    %c0_45 = arith.constant 0 : index
    %24 = vector.load %arg1[%c0_41, %c0_42, %c0_43, %c1_44, %c0_45] : memref<1x8x8x8x4xf32, #tpu.memory_space<vmem>>, vector<1x1x7x7x4xf32>
    %25 = vector.shape_cast %24 : vector<1x1x7x7x4xf32> to vector<7x7x4xf32>
    %c1_46 = arith.constant 1 : index
    %c0_47 = arith.constant 0 : index
    %c44 = arith.constant 44 : index
    %26 = vector.load %arg7[%c1_46, %c0_47, %c44] : memref<8x8x108xf32, #tpu.memory_space<vmem>>, vector<7x7x4xf32>
    tpu.vector_store %arg7[%c1_46, %c0_47, %c44], %25 {strides = array<i32>} : memref<8x8x108xf32, #tpu.memory_space<vmem>>, vector<7x7x4xf32>,
    %c0_48 = arith.constant 0 : index
    %c0_49 = arith.constant 0 : index
    %c0_50 = arith.constant 0 : index
    %c0_51 = arith.constant 0 : index
    %c0_52 = arith.constant 0 : index
    %27 = vector.load %arg1[%c0_48, %c0_49, %c0_50, %c0_51, %c0_52] : memref<1x8x8x8x4xf32, #tpu.memory_space<vmem>>, vector<1x1x8x7x4xf32>
    %28 = vector.shape_cast %27 : vector<1x1x8x7x4xf32> to vector<8x7x4xf32>
    %c0_53 = arith.constant 0 : index
    %c1_54 = arith.constant 1 : index
    %c48 = arith.constant 48 : index
    %29 = vector.load %arg7[%c0_53, %c1_54, %c48] : memref<8x8x108xf32, #tpu.memory_space<vmem>>, vector<8x7x4xf32>
    tpu.vector_store %arg7[%c0_53, %c1_54, %c48], %28 {strides = array<i32>} : memref<8x8x108xf32, #tpu.memory_space<vmem>>, vector<8x7x4xf32>,
    %c0_55 = arith.constant 0 : index
    %c0_56 = arith.constant 0 : index
    %c0_57 = arith.constant 0 : index
    %c0_58 = arith.constant 0 : index
    %c0_59 = arith.constant 0 : index
    %30 = vector.load %arg1[%c0_55, %c0_56, %c0_57, %c0_58, %c0_59] : memref<1x8x8x8x4xf32, #tpu.memory_space<vmem>>, vector<1x1x8x8x4xf32>
    %31 = vector.shape_cast %30 : vector<1x1x8x8x4xf32> to vector<8x8x4xf32>
    %c0_60 = arith.constant 0 : index
    %c0_61 = arith.constant 0 : index
    %c52 = arith.constant 52 : index
    %32 = vector.load %arg7[%c0_60, %c0_61, %c52] : memref<8x8x108xf32, #tpu.memory_space<vmem>>, vector<8x8x4xf32>
    tpu.vector_store %arg7[%c0_60, %c0_61, %c52], %31 {strides = array<i32>} : memref<8x8x108xf32, #tpu.memory_space<vmem>>, vector<8x8x4xf32>,
    %c0_62 = arith.constant 0 : index
    %c0_63 = arith.constant 0 : index
    %c0_64 = arith.constant 0 : index
    %c1_65 = arith.constant 1 : index
    %c0_66 = arith.constant 0 : index
    %33 = vector.load %arg1[%c0_62, %c0_63, %c0_64, %c1_65, %c0_66] : memref<1x8x8x8x4xf32, #tpu.memory_space<vmem>>, vector<1x1x8x7x4xf32>
    %34 = vector.shape_cast %33 : vector<1x1x8x7x4xf32> to vector<8x7x4xf32>
    %c0_67 = arith.constant 0 : index
    %c0_68 = arith.constant 0 : index
    %c56 = arith.constant 56 : index
    %35 = vector.load %arg7[%c0_67, %c0_68, %c56] : memref<8x8x108xf32, #tpu.memory_space<vmem>>, vector<8x7x4xf32>
    tpu.vector_store %arg7[%c0_67, %c0_68, %c56], %34 {strides = array<i32>} : memref<8x8x108xf32, #tpu.memory_space<vmem>>, vector<8x7x4xf32>,
    %c0_69 = arith.constant 0 : index
    %c0_70 = arith.constant 0 : index
    %c1_71 = arith.constant 1 : index
    %c0_72 = arith.constant 0 : index
    %c0_73 = arith.constant 0 : index
    %36 = vector.load %arg1[%c0_69, %c0_70, %c1_71, %c0_72, %c0_73] : memref<1x8x8x8x4xf32, #tpu.memory_space<vmem>>, vector<1x1x7x7x4xf32>
    %37 = vector.shape_cast %36 : vector<1x1x7x7x4xf32> to vector<7x7x4xf32>
    %c0_74 = arith.constant 0 : index
    %c1_75 = arith.constant 1 : index
    %c60 = arith.constant 60 : index
    %38 = vector.load %arg7[%c0_74, %c1_75, %c60] : memref<8x8x108xf32, #tpu.memory_space<vmem>>, vector<7x7x4xf32>
    tpu.vector_store %arg7[%c0_74, %c1_75, %c60], %37 {strides = array<i32>} : memref<8x8x108xf32, #tpu.memory_space<vmem>>, vector<7x7x4xf32>,
    %c0_76 = arith.constant 0 : index
    %c0_77 = arith.constant 0 : index
    %c1_78 = arith.constant 1 : index
    %c0_79 = arith.constant 0 : index
    %c0_80 = arith.constant 0 : index
    %39 = vector.load %arg1[%c0_76, %c0_77, %c1_78, %c0_79, %c0_80] : memref<1x8x8x8x4xf32, #tpu.memory_space<vmem>>, vector<1x1x7x8x4xf32>
    %40 = vector.shape_cast %39 : vector<1x1x7x8x4xf32> to vector<7x8x4xf32>
    %c0_81 = arith.constant 0 : index
    %c0_82 = arith.constant 0 : index
    %c64 = arith.constant 64 : index
    %41 = vector.load %arg7[%c0_81, %c0_82, %c64] : memref<8x8x108xf32, #tpu.memory_space<vmem>>, vector<7x8x4xf32>
    tpu.vector_store %arg7[%c0_81, %c0_82, %c64], %40 {strides = array<i32>} : memref<8x8x108xf32, #tpu.memory_space<vmem>>, vector<7x8x4xf32>,
    %c0_83 = arith.constant 0 : index
    %c0_84 = arith.constant 0 : index
    %c1_85 = arith.constant 1 : index
    %c1_86 = arith.constant 1 : index
    %c0_87 = arith.constant 0 : index
    %42 = vector.load %arg1[%c0_83, %c0_84, %c1_85, %c1_86, %c0_87] : memref<1x8x8x8x4xf32, #tpu.memory_space<vmem>>, vector<1x1x7x7x4xf32>
    %43 = vector.shape_cast %42 : vector<1x1x7x7x4xf32> to vector<7x7x4xf32>
    %c0_88 = arith.constant 0 : index
    %c0_89 = arith.constant 0 : index
    %c68 = arith.constant 68 : index
    %44 = vector.load %arg7[%c0_88, %c0_89, %c68] : memref<8x8x108xf32, #tpu.memory_space<vmem>>, vector<7x7x4xf32>
    tpu.vector_store %arg7[%c0_88, %c0_89, %c68], %43 {strides = array<i32>} : memref<8x8x108xf32, #tpu.memory_space<vmem>>, vector<7x7x4xf32>,
    %c0_90 = arith.constant 0 : index
    %c1_91 = arith.constant 1 : index
    %c0_92 = arith.constant 0 : index
    %c0_93 = arith.constant 0 : index
    %c0_94 = arith.constant 0 : index
    %45 = vector.load %arg1[%c0_90, %c1_91, %c0_92, %c0_93, %c0_94] : memref<1x8x8x8x4xf32, #tpu.memory_space<vmem>>, vector<1x1x7x7x4xf32>
    %46 = vector.shape_cast %45 : vector<1x1x7x7x4xf32> to vector<7x7x4xf32>
    %c1_95 = arith.constant 1 : index
    %c1_96 = arith.constant 1 : index
    %c72 = arith.constant 72 : index
    %47 = vector.load %arg7[%c1_95, %c1_96, %c72] : memref<8x8x108xf32, #tpu.memory_space<vmem>>, vector<7x7x4xf32>
    tpu.vector_store %arg7[%c1_95, %c1_96, %c72], %46 {strides = array<i32>} : memref<8x8x108xf32, #tpu.memory_space<vmem>>, vector<7x7x4xf32>,
    %c0_97 = arith.constant 0 : index
    %c1_98 = arith.constant 1 : index
    %c0_99 = arith.constant 0 : index
    %c0_100 = arith.constant 0 : index
    %c0_101 = arith.constant 0 : index
    %48 = vector.load %arg1[%c0_97, %c1_98, %c0_99, %c0_100, %c0_101] : memref<1x8x8x8x4xf32, #tpu.memory_space<vmem>>, vector<1x1x7x8x4xf32>
    %49 = vector.shape_cast %48 : vector<1x1x7x8x4xf32> to vector<7x8x4xf32>
    %c1_102 = arith.constant 1 : index
    %c0_103 = arith.constant 0 : index
    %c76 = arith.constant 76 : index
    %50 = vector.load %arg7[%c1_102, %c0_103, %c76] : memref<8x8x108xf32, #tpu.memory_space<vmem>>, vector<7x8x4xf32>
    tpu.vector_store %arg7[%c1_102, %c0_103, %c76], %49 {strides = array<i32>} : memref<8x8x108xf32, #tpu.memory_space<vmem>>, vector<7x8x4xf32>,
    %c0_104 = arith.constant 0 : index
    %c1_105 = arith.constant 1 : index
    %c0_106 = arith.constant 0 : index
    %c1_107 = arith.constant 1 : index
    %c0_108 = arith.constant 0 : index
    %51 = vector.load %arg1[%c0_104, %c1_105, %c0_106, %c1_107, %c0_108] : memref<1x8x8x8x4xf32, #tpu.memory_space<vmem>>, vector<1x1x7x7x4xf32>
    %52 = vector.shape_cast %51 : vector<1x1x7x7x4xf32> to vector<7x7x4xf32>
    %c1_109 = arith.constant 1 : index
    %c0_110 = arith.constant 0 : index
    %c80 = arith.constant 80 : index
    %53 = vector.load %arg7[%c1_109, %c0_110, %c80] : memref<8x8x108xf32, #tpu.memory_space<vmem>>, vector<7x7x4xf32>
    tpu.vector_store %arg7[%c1_109, %c0_110, %c80], %52 {strides = array<i32>} : memref<8x8x108xf32, #tpu.memory_space<vmem>>, vector<7x7x4xf32>,
    %c0_111 = arith.constant 0 : index
    %c1_112 = arith.constant 1 : index
    %c0_113 = arith.constant 0 : index
    %c0_114 = arith.constant 0 : index
    %c0_115 = arith.constant 0 : index
    %54 = vector.load %arg1[%c0_111, %c1_112, %c0_113, %c0_114, %c0_115] : memref<1x8x8x8x4xf32, #tpu.memory_space<vmem>>, vector<1x1x8x7x4xf32>
    %55 = vector.shape_cast %54 : vector<1x1x8x7x4xf32> to vector<8x7x4xf32>
    %c0_116 = arith.constant 0 : index
    %c1_117 = arith.constant 1 : index
    %c84 = arith.constant 84 : index
    %56 = vector.load %arg7[%c0_116, %c1_117, %c84] : memref<8x8x108xf32, #tpu.memory_space<vmem>>, vector<8x7x4xf32>
    tpu.vector_store %arg7[%c0_116, %c1_117, %c84], %55 {strides = array<i32>} : memref<8x8x108xf32, #tpu.memory_space<vmem>>, vector<8x7x4xf32>,
    %c0_118 = arith.constant 0 : index
    %c1_119 = arith.constant 1 : index
    %c0_120 = arith.constant 0 : index
    %c0_121 = arith.constant 0 : index
    %c0_122 = arith.constant 0 : index
    %57 = vector.load %arg1[%c0_118, %c1_119, %c0_120, %c0_121, %c0_122] : memref<1x8x8x8x4xf32, #tpu.memory_space<vmem>>, vector<1x1x8x8x4xf32>
    %58 = vector.shape_cast %57 : vector<1x1x8x8x4xf32> to vector<8x8x4xf32>
    %c0_123 = arith.constant 0 : index
    %c0_124 = arith.constant 0 : index
    %c88 = arith.constant 88 : index
    %59 = vector.load %arg7[%c0_123, %c0_124, %c88] : memref<8x8x108xf32, #tpu.memory_space<vmem>>, vector<8x8x4xf32>
    tpu.vector_store %arg7[%c0_123, %c0_124, %c88], %58 {strides = array<i32>} : memref<8x8x108xf32, #tpu.memory_space<vmem>>, vector<8x8x4xf32>,
    %c0_125 = arith.constant 0 : index
    %c1_126 = arith.constant 1 : index
    %c0_127 = arith.constant 0 : index
    %c1_128 = arith.constant 1 : index
    %c0_129 = arith.constant 0 : index
    %60 = vector.load %arg1[%c0_125, %c1_126, %c0_127, %c1_128, %c0_129] : memref<1x8x8x8x4xf32, #tpu.memory_space<vmem>>, vector<1x1x8x7x4xf32>
    %61 = vector.shape_cast %60 : vector<1x1x8x7x4xf32> to vector<8x7x4xf32>
    %c0_130 = arith.constant 0 : index
    %c0_131 = arith.constant 0 : index
    %c92 = arith.constant 92 : index
    %62 = vector.load %arg7[%c0_130, %c0_131, %c92] : memref<8x8x108xf32, #tpu.memory_space<vmem>>, vector<8x7x4xf32>
    tpu.vector_store %arg7[%c0_130, %c0_131, %c92], %61 {strides = array<i32>} : memref<8x8x108xf32, #tpu.memory_space<vmem>>, vector<8x7x4xf32>,
    %c0_132 = arith.constant 0 : index
    %c1_133 = arith.constant 1 : index
    %c1_134 = arith.constant 1 : index
    %c0_135 = arith.constant 0 : index
    %c0_136 = arith.constant 0 : index
    %63 = vector.load %arg1[%c0_132, %c1_133, %c1_134, %c0_135, %c0_136] : memref<1x8x8x8x4xf32, #tpu.memory_space<vmem>>, vector<1x1x7x7x4xf32>
    %64 = vector.shape_cast %63 : vector<1x1x7x7x4xf32> to vector<7x7x4xf32>
    %c0_137 = arith.constant 0 : index
    %c1_138 = arith.constant 1 : index
    %c96 = arith.constant 96 : index
    %65 = vector.load %arg7[%c0_137, %c1_138, %c96] : memref<8x8x108xf32, #tpu.memory_space<vmem>>, vector<7x7x4xf32>
    tpu.vector_store %arg7[%c0_137, %c1_138, %c96], %64 {strides = array<i32>} : memref<8x8x108xf32, #tpu.memory_space<vmem>>, vector<7x7x4xf32>,
    %c0_139 = arith.constant 0 : index
    %c1_140 = arith.constant 1 : index
    %c1_141 = arith.constant 1 : index
    %c0_142 = arith.constant 0 : index
    %c0_143 = arith.constant 0 : index
    %66 = vector.load %arg1[%c0_139, %c1_140, %c1_141, %c0_142, %c0_143] : memref<1x8x8x8x4xf32, #tpu.memory_space<vmem>>, vector<1x1x7x8x4xf32>
    %67 = vector.shape_cast %66 : vector<1x1x7x8x4xf32> to vector<7x8x4xf32>
    %c0_144 = arith.constant 0 : index
    %c0_145 = arith.constant 0 : index
    %c100 = arith.constant 100 : index
    %68 = vector.load %arg7[%c0_144, %c0_145, %c100] : memref<8x8x108xf32, #tpu.memory_space<vmem>>, vector<7x8x4xf32>
    tpu.vector_store %arg7[%c0_144, %c0_145, %c100], %67 {strides = array<i32>} : memref<8x8x108xf32, #tpu.memory_space<vmem>>, vector<7x8x4xf32>,
    %c0_146 = arith.constant 0 : index
    %c1_147 = arith.constant 1 : index
    %c1_148 = arith.constant 1 : index
    %c1_149 = arith.constant 1 : index
    %c0_150 = arith.constant 0 : index
    %69 = vector.load %arg1[%c0_146, %c1_147, %c1_148, %c1_149, %c0_150] : memref<1x8x8x8x4xf32, #tpu.memory_space<vmem>>, vector<1x1x7x7x4xf32>
    %70 = vector.shape_cast %69 : vector<1x1x7x7x4xf32> to vector<7x7x4xf32>
    %c0_151 = arith.constant 0 : index
    %c0_152 = arith.constant 0 : index
    %c104 = arith.constant 104 : index
    %71 = vector.load %arg7[%c0_151, %c0_152, %c104] : memref<8x8x108xf32, #tpu.memory_space<vmem>>, vector<7x7x4xf32>
    tpu.vector_store %arg7[%c0_151, %c0_152, %c104], %70 {strides = array<i32>} : memref<8x8x108xf32, #tpu.memory_space<vmem>>, vector<7x7x4xf32>,
    %c0_153 = arith.constant 0 : index
    %c0_154 = arith.constant 0 : index
    %c0_155 = arith.constant 0 : index
    %72 = vector.load %arg7[%c0_153, %c0_154, %c0_155] : memref<8x8x108xf32, #tpu.memory_space<vmem>>, vector<8x8x108xf32>
    %73 = vector.shape_cast %72 : vector<8x8x108xf32> to vector<64x108xf32>
    %c0_156 = arith.constant 0 : index
    %c0_157 = arith.constant 0 : index
    %74 = vector.load %arg2[%c0_156, %c0_157] : memref<108x32xf32, #tpu.memory_space<vmem>>, vector<108x32xf32>
    %cst_158 = arith.constant dense<0.000000e+00> : vector<64x32xf32>
    %75 = tpu.matmul %73, %74, %cst_158 {dimension_numbers = #tpu.dot_dimension_numbers<[1], [0], [0], [1], [0, 0, 1, 1], [], []>} : vector<64x108xf32>, vector<108x32xf32>, vector<64x32xf32> -> vector<64x32xf32>
    %76 = arith.addf %75, %14 : vector<64x32xf32>
    %cst_159 = arith.constant 0.000000e+00 : f32
    %77 = vector.broadcast %cst_159 : f32 to vector<64x32xf32>
    %78 = arith.maximumf %76, %77 : vector<64x32xf32>
    %79 = vector.shape_cast %78 : vector<64x32xf32> to vector<8x8x32xf32>
    %c1_160 = arith.constant 1 : index
    %c1_161 = arith.constant 1 : index
    %c8_162 = arith.constant 8 : index
    %c0_163 = arith.constant 0 : index
    %80 = vector.load %arg9[%c1_160, %c1_161, %c8_162, %c0_163] : memref<4x10x24x32xf32, #tpu.memory_space<vmem>>, vector<1x8x8x32xf32>
    %81 = vector.shape_cast %80 : vector<1x8x8x32xf32> to vector<8x8x32xf32>
    %82 = vector.shape_cast %79 : vector<8x8x32xf32> to vector<1x8x8x32xf32>
    tpu.vector_store %arg9[%c1_160, %c1_161, %c8_162, %c0_163], %82 {strides = array<i32>} : memref<4x10x24x32xf32, #tpu.memory_space<vmem>>, vector<1x8x8x32xf32>,
    %c0_i32 = arith.constant 0 : i32
    %c8_i32 = arith.constant 8 : i32
    %83 = arith.addi %c0_i32, %c8_i32 : i32
    %c1_i32 = arith.constant 1 : i32
    scf.for %arg10 = %c0_i32 to %83 step %c1_i32  : i32 {
      %c1_i32_165 = arith.constant 1 : i32
      %84 = arith.muli %arg10, %c1_i32_165 : i32
      %c0_i32_166 = arith.constant 0 : i32
      %85 = arith.addi %c0_i32_166, %84 : i32
      %c1_i32_167 = arith.constant 1 : i32
      %86 = arith.addi %85, %c1_i32_167 : i32
      %c8_i32_168 = arith.constant 8 : i32
      %87 = arith.cmpi slt, %86, %c8_i32_168 : i32
      %88 = arith.extui %87 : i1 to i32
      %c0_i32_169 = arith.constant 0 : i32
      %89 = arith.cmpi ne, %88, %c0_i32_169 : i32
      scf.if %89 {
        %c0_i32_295 = arith.constant 0 : i32
        %245 = arith.addi %86, %c0_i32_295 : i32
        %c1_i32_296 = arith.constant 1 : i32
        %246 = arith.subi %245, %c1_i32_296 : i32
        %c0_297 = arith.constant 0 : index
        %247 = arith.index_cast %246 : i32 to index
        %c0_298 = arith.constant 0 : index
        %c0_299 = arith.constant 0 : index
        %c0_300 = arith.constant 0 : index
        %248 = vector.load %arg1[%c0_297, %247, %c0_298, %c0_299, %c0_300] : memref<1x8x8x8x4xf32, #tpu.memory_space<vmem>>, vector<1x1x7x7x4xf32>
        %249 = vector.shape_cast %248 : vector<1x1x7x7x4xf32> to vector<7x7x4xf32>
        %c1_301 = arith.constant 1 : index
        %c1_302 = arith.constant 1 : index
        %c0_303 = arith.constant 0 : index
        %250 = vector.load %arg7[%c1_301, %c1_302, %c0_303] : memref<8x8x108xf32, #tpu.memory_space<vmem>>, vector<7x7x4xf32>
        tpu.vector_store %arg7[%c1_301, %c1_302, %c0_303], %249 {strides = array<i32>} : memref<8x8x108xf32, #tpu.memory_space<vmem>>, vector<7x7x4xf32>,
        %c0_304 = arith.constant 0 : index
        %251 = arith.index_cast %246 : i32 to index
        %c0_305 = arith.constant 0 : index
        %c0_306 = arith.constant 0 : index
        %c0_307 = arith.constant 0 : index
        %252 = vector.load %arg1[%c0_304, %251, %c0_305, %c0_306, %c0_307] : memref<1x8x8x8x4xf32, #tpu.memory_space<vmem>>, vector<1x1x7x8x4xf32>
        %253 = vector.shape_cast %252 : vector<1x1x7x8x4xf32> to vector<7x8x4xf32>
        %c1_308 = arith.constant 1 : index
        %c0_309 = arith.constant 0 : index
        %c4 = arith.constant 4 : index
        %254 = vector.load %arg7[%c1_308, %c0_309, %c4] : memref<8x8x108xf32, #tpu.memory_space<vmem>>, vector<7x8x4xf32>
        tpu.vector_store %arg7[%c1_308, %c0_309, %c4], %253 {strides = array<i32>} : memref<8x8x108xf32, #tpu.memory_space<vmem>>, vector<7x8x4xf32>,
        %c0_310 = arith.constant 0 : index
        %255 = arith.index_cast %246 : i32 to index
        %c0_311 = arith.constant 0 : index
        %c1_312 = arith.constant 1 : index
        %c0_313 = arith.constant 0 : index
        %256 = vector.load %arg1[%c0_310, %255, %c0_311, %c1_312, %c0_313] : memref<1x8x8x8x4xf32, #tpu.memory_space<vmem>>, vector<1x1x7x7x4xf32>
        %257 = vector.shape_cast %256 : vector<1x1x7x7x4xf32> to vector<7x7x4xf32>
        %c1_314 = arith.constant 1 : index
        %c0_315 = arith.constant 0 : index
        %c8_316 = arith.constant 8 : index
        %258 = vector.load %arg7[%c1_314, %c0_315, %c8_316] : memref<8x8x108xf32, #tpu.memory_space<vmem>>, vector<7x7x4xf32>
        tpu.vector_store %arg7[%c1_314, %c0_315, %c8_316], %257 {strides = array<i32>} : memref<8x8x108xf32, #tpu.memory_space<vmem>>, vector<7x7x4xf32>,
        %c0_317 = arith.constant 0 : index
        %259 = arith.index_cast %246 : i32 to index
        %c0_318 = arith.constant 0 : index
        %c0_319 = arith.constant 0 : index
        %c0_320 = arith.constant 0 : index
        %260 = vector.load %arg1[%c0_317, %259, %c0_318, %c0_319, %c0_320] : memref<1x8x8x8x4xf32, #tpu.memory_space<vmem>>, vector<1x1x8x7x4xf32>
        %261 = vector.shape_cast %260 : vector<1x1x8x7x4xf32> to vector<8x7x4xf32>
        %c0_321 = arith.constant 0 : index
        %c1_322 = arith.constant 1 : index
        %c12 = arith.constant 12 : index
        %262 = vector.load %arg7[%c0_321, %c1_322, %c12] : memref<8x8x108xf32, #tpu.memory_space<vmem>>, vector<8x7x4xf32>
        tpu.vector_store %arg7[%c0_321, %c1_322, %c12], %261 {strides = array<i32>} : memref<8x8x108xf32, #tpu.memory_space<vmem>>, vector<8x7x4xf32>,
        %c0_323 = arith.constant 0 : index
        %263 = arith.index_cast %246 : i32 to index
        %c0_324 = arith.constant 0 : index
        %c0_325 = arith.constant 0 : index
        %c0_326 = arith.constant 0 : index
        %264 = vector.load %arg1[%c0_323, %263, %c0_324, %c0_325, %c0_326] : memref<1x8x8x8x4xf32, #tpu.memory_space<vmem>>, vector<1x1x8x8x4xf32>
        %265 = vector.shape_cast %264 : vector<1x1x8x8x4xf32> to vector<8x8x4xf32>
        %c0_327 = arith.constant 0 : index
        %c0_328 = arith.constant 0 : index
        %c16_329 = arith.constant 16 : index
        %266 = vector.load %arg7[%c0_327, %c0_328, %c16_329] : memref<8x8x108xf32, #tpu.memory_space<vmem>>, vector<8x8x4xf32>
        tpu.vector_store %arg7[%c0_327, %c0_328, %c16_329], %265 {strides = array<i32>} : memref<8x8x108xf32, #tpu.memory_space<vmem>>, vector<8x8x4xf32>,
        %c0_330 = arith.constant 0 : index
        %267 = arith.index_cast %246 : i32 to index
        %c0_331 = arith.constant 0 : index
        %c1_332 = arith.constant 1 : index
        %c0_333 = arith.constant 0 : index
        %268 = vector.load %arg1[%c0_330, %267, %c0_331, %c1_332, %c0_333] : memref<1x8x8x8x4xf32, #tpu.memory_space<vmem>>, vector<1x1x8x7x4xf32>
        %269 = vector.shape_cast %268 : vector<1x1x8x7x4xf32> to vector<8x7x4xf32>
        %c0_334 = arith.constant 0 : index
        %c0_335 = arith.constant 0 : index
        %c20 = arith.constant 20 : index
        %270 = vector.load %arg7[%c0_334, %c0_335, %c20] : memref<8x8x108xf32, #tpu.memory_space<vmem>>, vector<8x7x4xf32>
        tpu.vector_store %arg7[%c0_334, %c0_335, %c20], %269 {strides = array<i32>} : memref<8x8x108xf32, #tpu.memory_space<vmem>>, vector<8x7x4xf32>,
        %c0_336 = arith.constant 0 : index
        %271 = arith.index_cast %246 : i32 to index
        %c1_337 = arith.constant 1 : index
        %c0_338 = arith.constant 0 : index
        %c0_339 = arith.constant 0 : index
        %272 = vector.load %arg1[%c0_336, %271, %c1_337, %c0_338, %c0_339] : memref<1x8x8x8x4xf32, #tpu.memory_space<vmem>>, vector<1x1x7x7x4xf32>
        %273 = vector.shape_cast %272 : vector<1x1x7x7x4xf32> to vector<7x7x4xf32>
        %c0_340 = arith.constant 0 : index
        %c1_341 = arith.constant 1 : index
        %c24 = arith.constant 24 : index
        %274 = vector.load %arg7[%c0_340, %c1_341, %c24] : memref<8x8x108xf32, #tpu.memory_space<vmem>>, vector<7x7x4xf32>
        tpu.vector_store %arg7[%c0_340, %c1_341, %c24], %273 {strides = array<i32>} : memref<8x8x108xf32, #tpu.memory_space<vmem>>, vector<7x7x4xf32>,
        %c0_342 = arith.constant 0 : index
        %275 = arith.index_cast %246 : i32 to index
        %c1_343 = arith.constant 1 : index
        %c0_344 = arith.constant 0 : index
        %c0_345 = arith.constant 0 : index
        %276 = vector.load %arg1[%c0_342, %275, %c1_343, %c0_344, %c0_345] : memref<1x8x8x8x4xf32, #tpu.memory_space<vmem>>, vector<1x1x7x8x4xf32>
        %277 = vector.shape_cast %276 : vector<1x1x7x8x4xf32> to vector<7x8x4xf32>
        %c0_346 = arith.constant 0 : index
        %c0_347 = arith.constant 0 : index
        %c28 = arith.constant 28 : index
        %278 = vector.load %arg7[%c0_346, %c0_347, %c28] : memref<8x8x108xf32, #tpu.memory_space<vmem>>, vector<7x8x4xf32>
        tpu.vector_store %arg7[%c0_346, %c0_347, %c28], %277 {strides = array<i32>} : memref<8x8x108xf32, #tpu.memory_space<vmem>>, vector<7x8x4xf32>,
        %c0_348 = arith.constant 0 : index
        %279 = arith.index_cast %246 : i32 to index
        %c1_349 = arith.constant 1 : index
        %c1_350 = arith.constant 1 : index
        %c0_351 = arith.constant 0 : index
        %280 = vector.load %arg1[%c0_348, %279, %c1_349, %c1_350, %c0_351] : memref<1x8x8x8x4xf32, #tpu.memory_space<vmem>>, vector<1x1x7x7x4xf32>
        %281 = vector.shape_cast %280 : vector<1x1x7x7x4xf32> to vector<7x7x4xf32>
        %c0_352 = arith.constant 0 : index
        %c0_353 = arith.constant 0 : index
        %c32_354 = arith.constant 32 : index
        %282 = vector.load %arg7[%c0_352, %c0_353, %c32_354] : memref<8x8x108xf32, #tpu.memory_space<vmem>>, vector<7x7x4xf32>
        tpu.vector_store %arg7[%c0_352, %c0_353, %c32_354], %281 {strides = array<i32>} : memref<8x8x108xf32, #tpu.memory_space<vmem>>, vector<7x7x4xf32>,
        %c1_i32_355 = arith.constant 1 : i32
        %283 = arith.addi %86, %c1_i32_355 : i32
        %c1_i32_356 = arith.constant 1 : i32
        %284 = arith.subi %283, %c1_i32_356 : i32
        %c0_357 = arith.constant 0 : index
        %285 = arith.index_cast %284 : i32 to index
        %c0_358 = arith.constant 0 : index
        %c0_359 = arith.constant 0 : index
        %c0_360 = arith.constant 0 : index
        %286 = vector.load %arg1[%c0_357, %285, %c0_358, %c0_359, %c0_360] : memref<1x8x8x8x4xf32, #tpu.memory_space<vmem>>, vector<1x1x7x7x4xf32>
        %287 = vector.shape_cast %286 : vector<1x1x7x7x4xf32> to vector<7x7x4xf32>
        %c1_361 = arith.constant 1 : index
        %c1_362 = arith.constant 1 : index
        %c36_363 = arith.constant 36 : index
        %288 = vector.load %arg7[%c1_361, %c1_362, %c36_363] : memref<8x8x108xf32, #tpu.memory_space<vmem>>, vector<7x7x4xf32>
        tpu.vector_store %arg7[%c1_361, %c1_362, %c36_363], %287 {strides = array<i32>} : memref<8x8x108xf32, #tpu.memory_space<vmem>>, vector<7x7x4xf32>,
        %c0_364 = arith.constant 0 : index
        %289 = arith.index_cast %284 : i32 to index
        %c0_365 = arith.constant 0 : index
        %c0_366 = arith.constant 0 : index
        %c0_367 = arith.constant 0 : index
        %290 = vector.load %arg1[%c0_364, %289, %c0_365, %c0_366, %c0_367] : memref<1x8x8x8x4xf32, #tpu.memory_space<vmem>>, vector<1x1x7x8x4xf32>
        %291 = vector.shape_cast %290 : vector<1x1x7x8x4xf32> to vector<7x8x4xf32>
        %c1_368 = arith.constant 1 : index
        %c0_369 = arith.constant 0 : index
        %c40_370 = arith.constant 40 : index
        %292 = vector.load %arg7[%c1_368, %c0_369, %c40_370] : memref<8x8x108xf32, #tpu.memory_space<vmem>>, vector<7x8x4xf32>
        tpu.vector_store %arg7[%c1_368, %c0_369, %c40_370], %291 {strides = array<i32>} : memref<8x8x108xf32, #tpu.memory_space<vmem>>, vector<7x8x4xf32>,
        %c0_371 = arith.constant 0 : index
        %293 = arith.index_cast %284 : i32 to index
        %c0_372 = arith.constant 0 : index
        %c1_373 = arith.constant 1 : index
        %c0_374 = arith.constant 0 : index
        %294 = vector.load %arg1[%c0_371, %293, %c0_372, %c1_373, %c0_374] : memref<1x8x8x8x4xf32, #tpu.memory_space<vmem>>, vector<1x1x7x7x4xf32>
        %295 = vector.shape_cast %294 : vector<1x1x7x7x4xf32> to vector<7x7x4xf32>
        %c1_375 = arith.constant 1 : index
        %c0_376 = arith.constant 0 : index
        %c44_377 = arith.constant 44 : index
        %296 = vector.load %arg7[%c1_375, %c0_376, %c44_377] : memref<8x8x108xf32, #tpu.memory_space<vmem>>, vector<7x7x4xf32>
        tpu.vector_store %arg7[%c1_375, %c0_376, %c44_377], %295 {strides = array<i32>} : memref<8x8x108xf32, #tpu.memory_space<vmem>>, vector<7x7x4xf32>,
        %c0_378 = arith.constant 0 : index
        %297 = arith.index_cast %284 : i32 to index
        %c0_379 = arith.constant 0 : index
        %c0_380 = arith.constant 0 : index
        %c0_381 = arith.constant 0 : index
        %298 = vector.load %arg1[%c0_378, %297, %c0_379, %c0_380, %c0_381] : memref<1x8x8x8x4xf32, #tpu.memory_space<vmem>>, vector<1x1x8x7x4xf32>
        %299 = vector.shape_cast %298 : vector<1x1x8x7x4xf32> to vector<8x7x4xf32>
        %c0_382 = arith.constant 0 : index
        %c1_383 = arith.constant 1 : index
        %c48_384 = arith.constant 48 : index
        %300 = vector.load %arg7[%c0_382, %c1_383, %c48_384] : memref<8x8x108xf32, #tpu.memory_space<vmem>>, vector<8x7x4xf32>
        tpu.vector_store %arg7[%c0_382, %c1_383, %c48_384], %299 {strides = array<i32>} : memref<8x8x108xf32, #tpu.memory_space<vmem>>, vector<8x7x4xf32>,
        %c0_385 = arith.constant 0 : index
        %301 = arith.index_cast %284 : i32 to index
        %c0_386 = arith.constant 0 : index
        %c0_387 = arith.constant 0 : index
        %c0_388 = arith.constant 0 : index
        %302 = vector.load %arg1[%c0_385, %301, %c0_386, %c0_387, %c0_388] : memref<1x8x8x8x4xf32, #tpu.memory_space<vmem>>, vector<1x1x8x8x4xf32>
        %303 = vector.shape_cast %302 : vector<1x1x8x8x4xf32> to vector<8x8x4xf32>
        %c0_389 = arith.constant 0 : index
        %c0_390 = arith.constant 0 : index
        %c52_391 = arith.constant 52 : index
        %304 = vector.load %arg7[%c0_389, %c0_390, %c52_391] : memref<8x8x108xf32, #tpu.memory_space<vmem>>, vector<8x8x4xf32>
        tpu.vector_store %arg7[%c0_389, %c0_390, %c52_391], %303 {strides = array<i32>} : memref<8x8x108xf32, #tpu.memory_space<vmem>>, vector<8x8x4xf32>,
        %c0_392 = arith.constant 0 : index
        %305 = arith.index_cast %284 : i32 to index
        %c0_393 = arith.constant 0 : index
        %c1_394 = arith.constant 1 : index
        %c0_395 = arith.constant 0 : index
        %306 = vector.load %arg1[%c0_392, %305, %c0_393, %c1_394, %c0_395] : memref<1x8x8x8x4xf32, #tpu.memory_space<vmem>>, vector<1x1x8x7x4xf32>
        %307 = vector.shape_cast %306 : vector<1x1x8x7x4xf32> to vector<8x7x4xf32>
        %c0_396 = arith.constant 0 : index
        %c0_397 = arith.constant 0 : index
        %c56_398 = arith.constant 56 : index
        %308 = vector.load %arg7[%c0_396, %c0_397, %c56_398] : memref<8x8x108xf32, #tpu.memory_space<vmem>>, vector<8x7x4xf32>
        tpu.vector_store %arg7[%c0_396, %c0_397, %c56_398], %307 {strides = array<i32>} : memref<8x8x108xf32, #tpu.memory_space<vmem>>, vector<8x7x4xf32>,
        %c0_399 = arith.constant 0 : index
        %309 = arith.index_cast %284 : i32 to index
        %c1_400 = arith.constant 1 : index
        %c0_401 = arith.constant 0 : index
        %c0_402 = arith.constant 0 : index
        %310 = vector.load %arg1[%c0_399, %309, %c1_400, %c0_401, %c0_402] : memref<1x8x8x8x4xf32, #tpu.memory_space<vmem>>, vector<1x1x7x7x4xf32>
        %311 = vector.shape_cast %310 : vector<1x1x7x7x4xf32> to vector<7x7x4xf32>
        %c0_403 = arith.constant 0 : index
        %c1_404 = arith.constant 1 : index
        %c60_405 = arith.constant 60 : index
        %312 = vector.load %arg7[%c0_403, %c1_404, %c60_405] : memref<8x8x108xf32, #tpu.memory_space<vmem>>, vector<7x7x4xf32>
        tpu.vector_store %arg7[%c0_403, %c1_404, %c60_405], %311 {strides = array<i32>} : memref<8x8x108xf32, #tpu.memory_space<vmem>>, vector<7x7x4xf32>,
        %c0_406 = arith.constant 0 : index
        %313 = arith.index_cast %284 : i32 to index
        %c1_407 = arith.constant 1 : index
        %c0_408 = arith.constant 0 : index
        %c0_409 = arith.constant 0 : index
        %314 = vector.load %arg1[%c0_406, %313, %c1_407, %c0_408, %c0_409] : memref<1x8x8x8x4xf32, #tpu.memory_space<vmem>>, vector<1x1x7x8x4xf32>
        %315 = vector.shape_cast %314 : vector<1x1x7x8x4xf32> to vector<7x8x4xf32>
        %c0_410 = arith.constant 0 : index
        %c0_411 = arith.constant 0 : index
        %c64_412 = arith.constant 64 : index
        %316 = vector.load %arg7[%c0_410, %c0_411, %c64_412] : memref<8x8x108xf32, #tpu.memory_space<vmem>>, vector<7x8x4xf32>
        tpu.vector_store %arg7[%c0_410, %c0_411, %c64_412], %315 {strides = array<i32>} : memref<8x8x108xf32, #tpu.memory_space<vmem>>, vector<7x8x4xf32>,
        %c0_413 = arith.constant 0 : index
        %317 = arith.index_cast %284 : i32 to index
        %c1_414 = arith.constant 1 : index
        %c1_415 = arith.constant 1 : index
        %c0_416 = arith.constant 0 : index
        %318 = vector.load %arg1[%c0_413, %317, %c1_414, %c1_415, %c0_416] : memref<1x8x8x8x4xf32, #tpu.memory_space<vmem>>, vector<1x1x7x7x4xf32>
        %319 = vector.shape_cast %318 : vector<1x1x7x7x4xf32> to vector<7x7x4xf32>
        %c0_417 = arith.constant 0 : index
        %c0_418 = arith.constant 0 : index
        %c68_419 = arith.constant 68 : index
        %320 = vector.load %arg7[%c0_417, %c0_418, %c68_419] : memref<8x8x108xf32, #tpu.memory_space<vmem>>, vector<7x7x4xf32>
        tpu.vector_store %arg7[%c0_417, %c0_418, %c68_419], %319 {strides = array<i32>} : memref<8x8x108xf32, #tpu.memory_space<vmem>>, vector<7x7x4xf32>,
        %c1_i32_420 = arith.constant 1 : i32
        %321 = arith.addi %86, %c1_i32_420 : i32
        %c8_i32_421 = arith.constant 8 : i32
        %322 = arith.cmpi slt, %321, %c8_i32_421 : i32
        %323 = arith.extui %322 : i1 to i32
        %c0_i32_422 = arith.constant 0 : i32
        %324 = arith.cmpi ne, %323, %c0_i32_422 : i32
        scf.if %324 {
          %c2_i32_438 = arith.constant 2 : i32
          %343 = arith.addi %86, %c2_i32_438 : i32
          %c1_i32_439 = arith.constant 1 : i32
          %344 = arith.subi %343, %c1_i32_439 : i32
          %c0_440 = arith.constant 0 : index
          %345 = arith.index_cast %344 : i32 to index
          %c0_441 = arith.constant 0 : index
          %c0_442 = arith.constant 0 : index
          %c0_443 = arith.constant 0 : index
          %346 = vector.load %arg1[%c0_440, %345, %c0_441, %c0_442, %c0_443] : memref<1x8x8x8x4xf32, #tpu.memory_space<vmem>>, vector<1x1x7x7x4xf32>
          %347 = vector.shape_cast %346 : vector<1x1x7x7x4xf32> to vector<7x7x4xf32>
          %c1_444 = arith.constant 1 : index
          %c1_445 = arith.constant 1 : index
          %c72_446 = arith.constant 72 : index
          %348 = vector.load %arg7[%c1_444, %c1_445, %c72_446] : memref<8x8x108xf32, #tpu.memory_space<vmem>>, vector<7x7x4xf32>
          tpu.vector_store %arg7[%c1_444, %c1_445, %c72_446], %347 {strides = array<i32>} : memref<8x8x108xf32, #tpu.memory_space<vmem>>, vector<7x7x4xf32>,
          %c0_447 = arith.constant 0 : index
          %349 = arith.index_cast %344 : i32 to index
          %c0_448 = arith.constant 0 : index
          %c0_449 = arith.constant 0 : index
          %c0_450 = arith.constant 0 : index
          %350 = vector.load %arg1[%c0_447, %349, %c0_448, %c0_449, %c0_450] : memref<1x8x8x8x4xf32, #tpu.memory_space<vmem>>, vector<1x1x7x8x4xf32>
          %351 = vector.shape_cast %350 : vector<1x1x7x8x4xf32> to vector<7x8x4xf32>
          %c1_451 = arith.constant 1 : index
          %c0_452 = arith.constant 0 : index
          %c76_453 = arith.constant 76 : index
          %352 = vector.load %arg7[%c1_451, %c0_452, %c76_453] : memref<8x8x108xf32, #tpu.memory_space<vmem>>, vector<7x8x4xf32>
          tpu.vector_store %arg7[%c1_451, %c0_452, %c76_453], %351 {strides = array<i32>} : memref<8x8x108xf32, #tpu.memory_space<vmem>>, vector<7x8x4xf32>,
          %c0_454 = arith.constant 0 : index
          %353 = arith.index_cast %344 : i32 to index
          %c0_455 = arith.constant 0 : index
          %c1_456 = arith.constant 1 : index
          %c0_457 = arith.constant 0 : index
          %354 = vector.load %arg1[%c0_454, %353, %c0_455, %c1_456, %c0_457] : memref<1x8x8x8x4xf32, #tpu.memory_space<vmem>>, vector<1x1x7x7x4xf32>
          %355 = vector.shape_cast %354 : vector<1x1x7x7x4xf32> to vector<7x7x4xf32>
          %c1_458 = arith.constant 1 : index
          %c0_459 = arith.constant 0 : index
          %c80_460 = arith.constant 80 : index
          %356 = vector.load %arg7[%c1_458, %c0_459, %c80_460] : memref<8x8x108xf32, #tpu.memory_space<vmem>>, vector<7x7x4xf32>
          tpu.vector_store %arg7[%c1_458, %c0_459, %c80_460], %355 {strides = array<i32>} : memref<8x8x108xf32, #tpu.memory_space<vmem>>, vector<7x7x4xf32>,
          %c0_461 = arith.constant 0 : index
          %357 = arith.index_cast %344 : i32 to index
          %c0_462 = arith.constant 0 : index
          %c0_463 = arith.constant 0 : index
          %c0_464 = arith.constant 0 : index
          %358 = vector.load %arg1[%c0_461, %357, %c0_462, %c0_463, %c0_464] : memref<1x8x8x8x4xf32, #tpu.memory_space<vmem>>, vector<1x1x8x7x4xf32>
          %359 = vector.shape_cast %358 : vector<1x1x8x7x4xf32> to vector<8x7x4xf32>
          %c0_465 = arith.constant 0 : index
          %c1_466 = arith.constant 1 : index
          %c84_467 = arith.constant 84 : index
          %360 = vector.load %arg7[%c0_465, %c1_466, %c84_467] : memref<8x8x108xf32, #tpu.memory_space<vmem>>, vector<8x7x4xf32>
          tpu.vector_store %arg7[%c0_465, %c1_466, %c84_467], %359 {strides = array<i32>} : memref<8x8x108xf32, #tpu.memory_space<vmem>>, vector<8x7x4xf32>,
          %c0_468 = arith.constant 0 : index
          %361 = arith.index_cast %344 : i32 to index
          %c0_469 = arith.constant 0 : index
          %c0_470 = arith.constant 0 : index
          %c0_471 = arith.constant 0 : index
          %362 = vector.load %arg1[%c0_468, %361, %c0_469, %c0_470, %c0_471] : memref<1x8x8x8x4xf32, #tpu.memory_space<vmem>>, vector<1x1x8x8x4xf32>
          %363 = vector.shape_cast %362 : vector<1x1x8x8x4xf32> to vector<8x8x4xf32>
          %c0_472 = arith.constant 0 : index
          %c0_473 = arith.constant 0 : index
          %c88_474 = arith.constant 88 : index
          %364 = vector.load %arg7[%c0_472, %c0_473, %c88_474] : memref<8x8x108xf32, #tpu.memory_space<vmem>>, vector<8x8x4xf32>
          tpu.vector_store %arg7[%c0_472, %c0_473, %c88_474], %363 {strides = array<i32>} : memref<8x8x108xf32, #tpu.memory_space<vmem>>, vector<8x8x4xf32>,
          %c0_475 = arith.constant 0 : index
          %365 = arith.index_cast %344 : i32 to index
          %c0_476 = arith.constant 0 : index
          %c1_477 = arith.constant 1 : index
          %c0_478 = arith.constant 0 : index
          %366 = vector.load %arg1[%c0_475, %365, %c0_476, %c1_477, %c0_478] : memref<1x8x8x8x4xf32, #tpu.memory_space<vmem>>, vector<1x1x8x7x4xf32>
          %367 = vector.shape_cast %366 : vector<1x1x8x7x4xf32> to vector<8x7x4xf32>
          %c0_479 = arith.constant 0 : index
          %c0_480 = arith.constant 0 : index
          %c92_481 = arith.constant 92 : index
          %368 = vector.load %arg7[%c0_479, %c0_480, %c92_481] : memref<8x8x108xf32, #tpu.memory_space<vmem>>, vector<8x7x4xf32>
          tpu.vector_store %arg7[%c0_479, %c0_480, %c92_481], %367 {strides = array<i32>} : memref<8x8x108xf32, #tpu.memory_space<vmem>>, vector<8x7x4xf32>,
          %c0_482 = arith.constant 0 : index
          %369 = arith.index_cast %344 : i32 to index
          %c1_483 = arith.constant 1 : index
          %c0_484 = arith.constant 0 : index
          %c0_485 = arith.constant 0 : index
          %370 = vector.load %arg1[%c0_482, %369, %c1_483, %c0_484, %c0_485] : memref<1x8x8x8x4xf32, #tpu.memory_space<vmem>>, vector<1x1x7x7x4xf32>
          %371 = vector.shape_cast %370 : vector<1x1x7x7x4xf32> to vector<7x7x4xf32>
          %c0_486 = arith.constant 0 : index
          %c1_487 = arith.constant 1 : index
          %c96_488 = arith.constant 96 : index
          %372 = vector.load %arg7[%c0_486, %c1_487, %c96_488] : memref<8x8x108xf32, #tpu.memory_space<vmem>>, vector<7x7x4xf32>
          tpu.vector_store %arg7[%c0_486, %c1_487, %c96_488], %371 {strides = array<i32>} : memref<8x8x108xf32, #tpu.memory_space<vmem>>, vector<7x7x4xf32>,
          %c0_489 = arith.constant 0 : index
          %373 = arith.index_cast %344 : i32 to index
          %c1_490 = arith.constant 1 : index
          %c0_491 = arith.constant 0 : index
          %c0_492 = arith.constant 0 : index
          %374 = vector.load %arg1[%c0_489, %373, %c1_490, %c0_491, %c0_492] : memref<1x8x8x8x4xf32, #tpu.memory_space<vmem>>, vector<1x1x7x8x4xf32>
          %375 = vector.shape_cast %374 : vector<1x1x7x8x4xf32> to vector<7x8x4xf32>
          %c0_493 = arith.constant 0 : index
          %c0_494 = arith.constant 0 : index
          %c100_495 = arith.constant 100 : index
          %376 = vector.load %arg7[%c0_493, %c0_494, %c100_495] : memref<8x8x108xf32, #tpu.memory_space<vmem>>, vector<7x8x4xf32>
          tpu.vector_store %arg7[%c0_493, %c0_494, %c100_495], %375 {strides = array<i32>} : memref<8x8x108xf32, #tpu.memory_space<vmem>>, vector<7x8x4xf32>,
          %c0_496 = arith.constant 0 : index
          %377 = arith.index_cast %344 : i32 to index
          %c1_497 = arith.constant 1 : index
          %c1_498 = arith.constant 1 : index
          %c0_499 = arith.constant 0 : index
          %378 = vector.load %arg1[%c0_496, %377, %c1_497, %c1_498, %c0_499] : memref<1x8x8x8x4xf32, #tpu.memory_space<vmem>>, vector<1x1x7x7x4xf32>
          %379 = vector.shape_cast %378 : vector<1x1x7x7x4xf32> to vector<7x7x4xf32>
          %c0_500 = arith.constant 0 : index
          %c0_501 = arith.constant 0 : index
          %c104_502 = arith.constant 104 : index
          %380 = vector.load %arg7[%c0_500, %c0_501, %c104_502] : memref<8x8x108xf32, #tpu.memory_space<vmem>>, vector<7x7x4xf32>
          tpu.vector_store %arg7[%c0_500, %c0_501, %c104_502], %379 {strides = array<i32>} : memref<8x8x108xf32, #tpu.memory_space<vmem>>, vector<7x7x4xf32>,
        } else {
        }
        %c1_i32_423 = arith.constant 1 : i32
        %325 = arith.addi %86, %c1_i32_423 : i32
        %c8_i32_424 = arith.constant 8 : i32
        %326 = arith.cmpi sge, %325, %c8_i32_424 : i32
        %327 = arith.extui %326 : i1 to i32
        %c0_i32_425 = arith.constant 0 : i32
        %328 = arith.cmpi ne, %327, %c0_i32_425 : i32
        scf.if %328 {
          %cst_438 = arith.constant 0.000000e+00 : f32
          %343 = vector.broadcast %cst_438 : f32 to vector<8x8x36xf32>
          %c0_439 = arith.constant 0 : index
          %c0_440 = arith.constant 0 : index
          %c72_441 = arith.constant 72 : index
          %344 = vector.load %arg7[%c0_439, %c0_440, %c72_441] : memref<8x8x108xf32, #tpu.memory_space<vmem>>, vector<8x8x36xf32>
          tpu.vector_store %arg7[%c0_439, %c0_440, %c72_441], %343 {strides = array<i32>} : memref<8x8x108xf32, #tpu.memory_space<vmem>>, vector<8x8x36xf32>,
        } else {
        }
        %c1_i32_426 = arith.constant 1 : i32
        %329 = arith.addi %86, %c1_i32_426 : i32
        %c3_i32_427 = arith.constant 3 : i32
        %330 = arith.andi %329, %c3_i32_427 : i32
        %c0_428 = arith.constant 0 : index
        %c0_429 = arith.constant 0 : index
        %c0_430 = arith.constant 0 : index
        %331 = vector.load %arg7[%c0_428, %c0_429, %c0_430] : memref<8x8x108xf32, #tpu.memory_space<vmem>>, vector<8x8x108xf32>
        %332 = vector.shape_cast %331 : vector<8x8x108xf32> to vector<64x108xf32>
        %c0_431 = arith.constant 0 : index
        %c0_432 = arith.constant 0 : index
        %333 = vector.load %arg2[%c0_431, %c0_432] : memref<108x32xf32, #tpu.memory_space<vmem>>, vector<108x32xf32>
        %cst_433 = arith.constant dense<0.000000e+00> : vector<64x32xf32>
        %334 = tpu.matmul %332, %333, %cst_433 {dimension_numbers = #tpu.dot_dimension_numbers<[1], [0], [0], [1], [0, 0, 1, 1], [], []>} : vector<64x108xf32>, vector<108x32xf32>, vector<64x32xf32> -> vector<64x32xf32>
        %335 = arith.addf %334, %14 : vector<64x32xf32>
        %cst_434 = arith.constant 0.000000e+00 : f32
        %336 = vector.broadcast %cst_434 : f32 to vector<64x32xf32>
        %337 = arith.maximumf %335, %336 : vector<64x32xf32>
        %338 = vector.shape_cast %337 : vector<64x32xf32> to vector<8x8x32xf32>
        %339 = arith.index_cast %330 : i32 to index
        %c1_435 = arith.constant 1 : index
        %c8_436 = arith.constant 8 : index
        %c0_437 = arith.constant 0 : index
        %340 = vector.load %arg9[%339, %c1_435, %c8_436, %c0_437] : memref<4x10x24x32xf32, #tpu.memory_space<vmem>>, vector<1x8x8x32xf32>
        %341 = vector.shape_cast %340 : vector<1x8x8x32xf32> to vector<8x8x32xf32>
        %342 = vector.shape_cast %338 : vector<8x8x32xf32> to vector<1x8x8x32xf32>
        tpu.vector_store %arg9[%339, %c1_435, %c8_436, %c0_437], %342 {strides = array<i32>} : memref<4x10x24x32xf32, #tpu.memory_space<vmem>>, vector<1x8x8x32xf32>,
      } else {
      }
      %c8_i32_170 = arith.constant 8 : i32
      %90 = arith.cmpi sge, %86, %c8_i32_170 : i32
      %91 = arith.extui %90 : i1 to i32
      %c0_i32_171 = arith.constant 0 : i32
      %92 = arith.cmpi ne, %91, %c0_i32_171 : i32
      scf.if %92 {
        %c1_i32_295 = arith.constant 1 : i32
        %245 = arith.addi %86, %c1_i32_295 : i32
        %c3_i32_296 = arith.constant 3 : i32
        %246 = arith.andi %245, %c3_i32_296 : i32
        %cst_297 = arith.constant 0.000000e+00 : f32
        %247 = vector.broadcast %cst_297 : f32 to vector<8x8x32xf32>
        %248 = arith.index_cast %246 : i32 to index
        %c1_298 = arith.constant 1 : index
        %c8_299 = arith.constant 8 : index
        %c0_300 = arith.constant 0 : index
        %249 = vector.load %arg9[%248, %c1_298, %c8_299, %c0_300] : memref<4x10x24x32xf32, #tpu.memory_space<vmem>>, vector<1x8x8x32xf32>
        %250 = vector.shape_cast %249 : vector<1x8x8x32xf32> to vector<8x8x32xf32>
        %251 = vector.shape_cast %247 : vector<8x8x32xf32> to vector<1x8x8x32xf32>
        tpu.vector_store %arg9[%248, %c1_298, %c8_299, %c0_300], %251 {strides = array<i32>} : memref<4x10x24x32xf32, #tpu.memory_space<vmem>>, vector<1x8x8x32xf32>,
      } else {
      }
      %c0_i32_172 = arith.constant 0 : i32
      %93 = arith.addi %85, %c0_i32_172 : i32
      %c3_i32 = arith.constant 3 : i32
      %94 = arith.andi %93, %c3_i32 : i32
      %95 = arith.index_cast %94 : i32 to index
      %c0_173 = arith.constant 0 : index
      %c7 = arith.constant 7 : index
      %c0_174 = arith.constant 0 : index
      %96 = vector.load %arg9[%95, %c0_173, %c7, %c0_174] : memref<4x10x24x32xf32, #tpu.memory_space<vmem>>, vector<1x8x8x32xf32>
      %97 = vector.shape_cast %96 : vector<1x8x8x32xf32> to vector<8x8x32xf32>
      %98 = vector.shape_cast %97 : vector<8x8x32xf32> to vector<64x32xf32>
      %c0_175 = arith.constant 0 : index
      %c0_176 = arith.constant 0 : index
      %99 = vector.load %arg8[%c0_175, %c0_176] : memref<64x864xf32, #tpu.memory_space<vmem>>, vector<64x32xf32>
      tpu.vector_store %arg8[%c0_175, %c0_176], %98 {strides = array<i32>} : memref<64x864xf32, #tpu.memory_space<vmem>>, vector<64x32xf32>,
      %100 = arith.index_cast %94 : i32 to index
      %c0_177 = arith.constant 0 : index
      %c8_178 = arith.constant 8 : index
      %c0_179 = arith.constant 0 : index
      %101 = vector.load %arg9[%100, %c0_177, %c8_178, %c0_179] : memref<4x10x24x32xf32, #tpu.memory_space<vmem>>, vector<1x8x8x32xf32>
      %102 = vector.shape_cast %101 : vector<1x8x8x32xf32> to vector<8x8x32xf32>
      %103 = vector.shape_cast %102 : vector<8x8x32xf32> to vector<64x32xf32>
      %c0_180 = arith.constant 0 : index
      %c32 = arith.constant 32 : index
      %104 = vector.load %arg8[%c0_180, %c32] : memref<64x864xf32, #tpu.memory_space<vmem>>, vector<64x32xf32>
      tpu.vector_store %arg8[%c0_180, %c32], %103 {strides = array<i32>} : memref<64x864xf32, #tpu.memory_space<vmem>>, vector<64x32xf32>,
      %105 = arith.index_cast %94 : i32 to index
      %c0_181 = arith.constant 0 : index
      %c9_182 = arith.constant 9 : index
      %c0_183 = arith.constant 0 : index
      %106 = vector.load %arg9[%105, %c0_181, %c9_182, %c0_183] : memref<4x10x24x32xf32, #tpu.memory_space<vmem>>, vector<1x8x8x32xf32>
      %107 = vector.shape_cast %106 : vector<1x8x8x32xf32> to vector<8x8x32xf32>
      %108 = vector.shape_cast %107 : vector<8x8x32xf32> to vector<64x32xf32>
      %c0_184 = arith.constant 0 : index
      %c64_185 = arith.constant 64 : index
      %109 = vector.load %arg8[%c0_184, %c64_185] : memref<64x864xf32, #tpu.memory_space<vmem>>, vector<64x32xf32>
      tpu.vector_store %arg8[%c0_184, %c64_185], %108 {strides = array<i32>} : memref<64x864xf32, #tpu.memory_space<vmem>>, vector<64x32xf32>,
      %110 = arith.index_cast %94 : i32 to index
      %c1_186 = arith.constant 1 : index
      %c7_187 = arith.constant 7 : index
      %c0_188 = arith.constant 0 : index
      %111 = vector.load %arg9[%110, %c1_186, %c7_187, %c0_188] : memref<4x10x24x32xf32, #tpu.memory_space<vmem>>, vector<1x8x8x32xf32>
      %112 = vector.shape_cast %111 : vector<1x8x8x32xf32> to vector<8x8x32xf32>
      %113 = vector.shape_cast %112 : vector<8x8x32xf32> to vector<64x32xf32>
      %c0_189 = arith.constant 0 : index
      %c96_190 = arith.constant 96 : index
      %114 = vector.load %arg8[%c0_189, %c96_190] : memref<64x864xf32, #tpu.memory_space<vmem>>, vector<64x32xf32>
      tpu.vector_store %arg8[%c0_189, %c96_190], %113 {strides = array<i32>} : memref<64x864xf32, #tpu.memory_space<vmem>>, vector<64x32xf32>,
      %115 = arith.index_cast %94 : i32 to index
      %c1_191 = arith.constant 1 : index
      %c8_192 = arith.constant 8 : index
      %c0_193 = arith.constant 0 : index
      %116 = vector.load %arg9[%115, %c1_191, %c8_192, %c0_193] : memref<4x10x24x32xf32, #tpu.memory_space<vmem>>, vector<1x8x8x32xf32>
      %117 = vector.shape_cast %116 : vector<1x8x8x32xf32> to vector<8x8x32xf32>
      %118 = vector.shape_cast %117 : vector<8x8x32xf32> to vector<64x32xf32>
      %c0_194 = arith.constant 0 : index
      %c128 = arith.constant 128 : index
      %119 = vector.load %arg8[%c0_194, %c128] : memref<64x864xf32, #tpu.memory_space<vmem>>, vector<64x32xf32>
      tpu.vector_store %arg8[%c0_194, %c128], %118 {strides = array<i32>} : memref<64x864xf32, #tpu.memory_space<vmem>>, vector<64x32xf32>,
      %120 = arith.index_cast %94 : i32 to index
      %c1_195 = arith.constant 1 : index
      %c9_196 = arith.constant 9 : index
      %c0_197 = arith.constant 0 : index
      %121 = vector.load %arg9[%120, %c1_195, %c9_196, %c0_197] : memref<4x10x24x32xf32, #tpu.memory_space<vmem>>, vector<1x8x8x32xf32>
      %122 = vector.shape_cast %121 : vector<1x8x8x32xf32> to vector<8x8x32xf32>
      %123 = vector.shape_cast %122 : vector<8x8x32xf32> to vector<64x32xf32>
      %c0_198 = arith.constant 0 : index
      %c160 = arith.constant 160 : index
      %124 = vector.load %arg8[%c0_198, %c160] : memref<64x864xf32, #tpu.memory_space<vmem>>, vector<64x32xf32>
      tpu.vector_store %arg8[%c0_198, %c160], %123 {strides = array<i32>} : memref<64x864xf32, #tpu.memory_space<vmem>>, vector<64x32xf32>,
      %125 = arith.index_cast %94 : i32 to index
      %c2 = arith.constant 2 : index
      %c7_199 = arith.constant 7 : index
      %c0_200 = arith.constant 0 : index
      %126 = vector.load %arg9[%125, %c2, %c7_199, %c0_200] : memref<4x10x24x32xf32, #tpu.memory_space<vmem>>, vector<1x8x8x32xf32>
      %127 = vector.shape_cast %126 : vector<1x8x8x32xf32> to vector<8x8x32xf32>
      %128 = vector.shape_cast %127 : vector<8x8x32xf32> to vector<64x32xf32>
      %c0_201 = arith.constant 0 : index
      %c192 = arith.constant 192 : index
      %129 = vector.load %arg8[%c0_201, %c192] : memref<64x864xf32, #tpu.memory_space<vmem>>, vector<64x32xf32>
      tpu.vector_store %arg8[%c0_201, %c192], %128 {strides = array<i32>} : memref<64x864xf32, #tpu.memory_space<vmem>>, vector<64x32xf32>,
      %130 = arith.index_cast %94 : i32 to index
      %c2_202 = arith.constant 2 : index
      %c8_203 = arith.constant 8 : index
      %c0_204 = arith.constant 0 : index
      %131 = vector.load %arg9[%130, %c2_202, %c8_203, %c0_204] : memref<4x10x24x32xf32, #tpu.memory_space<vmem>>, vector<1x8x8x32xf32>
      %132 = vector.shape_cast %131 : vector<1x8x8x32xf32> to vector<8x8x32xf32>
      %133 = vector.shape_cast %132 : vector<8x8x32xf32> to vector<64x32xf32>
      %c0_205 = arith.constant 0 : index
      %c224 = arith.constant 224 : index
      %134 = vector.load %arg8[%c0_205, %c224] : memref<64x864xf32, #tpu.memory_space<vmem>>, vector<64x32xf32>
      tpu.vector_store %arg8[%c0_205, %c224], %133 {strides = array<i32>} : memref<64x864xf32, #tpu.memory_space<vmem>>, vector<64x32xf32>,
      %135 = arith.index_cast %94 : i32 to index
      %c2_206 = arith.constant 2 : index
      %c9_207 = arith.constant 9 : index
      %c0_208 = arith.constant 0 : index
      %136 = vector.load %arg9[%135, %c2_206, %c9_207, %c0_208] : memref<4x10x24x32xf32, #tpu.memory_space<vmem>>, vector<1x8x8x32xf32>
      %137 = vector.shape_cast %136 : vector<1x8x8x32xf32> to vector<8x8x32xf32>
      %138 = vector.shape_cast %137 : vector<8x8x32xf32> to vector<64x32xf32>
      %c0_209 = arith.constant 0 : index
      %c256 = arith.constant 256 : index
      %139 = vector.load %arg8[%c0_209, %c256] : memref<64x864xf32, #tpu.memory_space<vmem>>, vector<64x32xf32>
      tpu.vector_store %arg8[%c0_209, %c256], %138 {strides = array<i32>} : memref<64x864xf32, #tpu.memory_space<vmem>>, vector<64x32xf32>,
      %c1_i32_210 = arith.constant 1 : i32
      %140 = arith.addi %85, %c1_i32_210 : i32
      %c3_i32_211 = arith.constant 3 : i32
      %141 = arith.andi %140, %c3_i32_211 : i32
      %142 = arith.index_cast %141 : i32 to index
      %c0_212 = arith.constant 0 : index
      %c7_213 = arith.constant 7 : index
      %c0_214 = arith.constant 0 : index
      %143 = vector.load %arg9[%142, %c0_212, %c7_213, %c0_214] : memref<4x10x24x32xf32, #tpu.memory_space<vmem>>, vector<1x8x8x32xf32>
      %144 = vector.shape_cast %143 : vector<1x8x8x32xf32> to vector<8x8x32xf32>
      %145 = vector.shape_cast %144 : vector<8x8x32xf32> to vector<64x32xf32>
      %c0_215 = arith.constant 0 : index
      %c288 = arith.constant 288 : index
      %146 = vector.load %arg8[%c0_215, %c288] : memref<64x864xf32, #tpu.memory_space<vmem>>, vector<64x32xf32>
      tpu.vector_store %arg8[%c0_215, %c288], %145 {strides = array<i32>} : memref<64x864xf32, #tpu.memory_space<vmem>>, vector<64x32xf32>,
      %147 = arith.index_cast %141 : i32 to index
      %c0_216 = arith.constant 0 : index
      %c8_217 = arith.constant 8 : index
      %c0_218 = arith.constant 0 : index
      %148 = vector.load %arg9[%147, %c0_216, %c8_217, %c0_218] : memref<4x10x24x32xf32, #tpu.memory_space<vmem>>, vector<1x8x8x32xf32>
      %149 = vector.shape_cast %148 : vector<1x8x8x32xf32> to vector<8x8x32xf32>
      %150 = vector.shape_cast %149 : vector<8x8x32xf32> to vector<64x32xf32>
      %c0_219 = arith.constant 0 : index
      %c320 = arith.constant 320 : index
      %151 = vector.load %arg8[%c0_219, %c320] : memref<64x864xf32, #tpu.memory_space<vmem>>, vector<64x32xf32>
      tpu.vector_store %arg8[%c0_219, %c320], %150 {strides = array<i32>} : memref<64x864xf32, #tpu.memory_space<vmem>>, vector<64x32xf32>,
      %152 = arith.index_cast %141 : i32 to index
      %c0_220 = arith.constant 0 : index
      %c9_221 = arith.constant 9 : index
      %c0_222 = arith.constant 0 : index
      %153 = vector.load %arg9[%152, %c0_220, %c9_221, %c0_222] : memref<4x10x24x32xf32, #tpu.memory_space<vmem>>, vector<1x8x8x32xf32>
      %154 = vector.shape_cast %153 : vector<1x8x8x32xf32> to vector<8x8x32xf32>
      %155 = vector.shape_cast %154 : vector<8x8x32xf32> to vector<64x32xf32>
      %c0_223 = arith.constant 0 : index
      %c352 = arith.constant 352 : index
      %156 = vector.load %arg8[%c0_223, %c352] : memref<64x864xf32, #tpu.memory_space<vmem>>, vector<64x32xf32>
      tpu.vector_store %arg8[%c0_223, %c352], %155 {strides = array<i32>} : memref<64x864xf32, #tpu.memory_space<vmem>>, vector<64x32xf32>,
      %157 = arith.index_cast %141 : i32 to index
      %c1_224 = arith.constant 1 : index
      %c7_225 = arith.constant 7 : index
      %c0_226 = arith.constant 0 : index
      %158 = vector.load %arg9[%157, %c1_224, %c7_225, %c0_226] : memref<4x10x24x32xf32, #tpu.memory_space<vmem>>, vector<1x8x8x32xf32>
      %159 = vector.shape_cast %158 : vector<1x8x8x32xf32> to vector<8x8x32xf32>
      %160 = vector.shape_cast %159 : vector<8x8x32xf32> to vector<64x32xf32>
      %c0_227 = arith.constant 0 : index
      %c384 = arith.constant 384 : index
      %161 = vector.load %arg8[%c0_227, %c384] : memref<64x864xf32, #tpu.memory_space<vmem>>, vector<64x32xf32>
      tpu.vector_store %arg8[%c0_227, %c384], %160 {strides = array<i32>} : memref<64x864xf32, #tpu.memory_space<vmem>>, vector<64x32xf32>,
      %162 = arith.index_cast %141 : i32 to index
      %c1_228 = arith.constant 1 : index
      %c8_229 = arith.constant 8 : index
      %c0_230 = arith.constant 0 : index
      %163 = vector.load %arg9[%162, %c1_228, %c8_229, %c0_230] : memref<4x10x24x32xf32, #tpu.memory_space<vmem>>, vector<1x8x8x32xf32>
      %164 = vector.shape_cast %163 : vector<1x8x8x32xf32> to vector<8x8x32xf32>
      %165 = vector.shape_cast %164 : vector<8x8x32xf32> to vector<64x32xf32>
      %c0_231 = arith.constant 0 : index
      %c416 = arith.constant 416 : index
      %166 = vector.load %arg8[%c0_231, %c416] : memref<64x864xf32, #tpu.memory_space<vmem>>, vector<64x32xf32>
      tpu.vector_store %arg8[%c0_231, %c416], %165 {strides = array<i32>} : memref<64x864xf32, #tpu.memory_space<vmem>>, vector<64x32xf32>,
      %167 = arith.index_cast %141 : i32 to index
      %c1_232 = arith.constant 1 : index
      %c9_233 = arith.constant 9 : index
      %c0_234 = arith.constant 0 : index
      %168 = vector.load %arg9[%167, %c1_232, %c9_233, %c0_234] : memref<4x10x24x32xf32, #tpu.memory_space<vmem>>, vector<1x8x8x32xf32>
      %169 = vector.shape_cast %168 : vector<1x8x8x32xf32> to vector<8x8x32xf32>
      %170 = vector.shape_cast %169 : vector<8x8x32xf32> to vector<64x32xf32>
      %c0_235 = arith.constant 0 : index
      %c448 = arith.constant 448 : index
      %171 = vector.load %arg8[%c0_235, %c448] : memref<64x864xf32, #tpu.memory_space<vmem>>, vector<64x32xf32>
      tpu.vector_store %arg8[%c0_235, %c448], %170 {strides = array<i32>} : memref<64x864xf32, #tpu.memory_space<vmem>>, vector<64x32xf32>,
      %172 = arith.index_cast %141 : i32 to index
      %c2_236 = arith.constant 2 : index
      %c7_237 = arith.constant 7 : index
      %c0_238 = arith.constant 0 : index
      %173 = vector.load %arg9[%172, %c2_236, %c7_237, %c0_238] : memref<4x10x24x32xf32, #tpu.memory_space<vmem>>, vector<1x8x8x32xf32>
      %174 = vector.shape_cast %173 : vector<1x8x8x32xf32> to vector<8x8x32xf32>
      %175 = vector.shape_cast %174 : vector<8x8x32xf32> to vector<64x32xf32>
      %c0_239 = arith.constant 0 : index
      %c480 = arith.constant 480 : index
      %176 = vector.load %arg8[%c0_239, %c480] : memref<64x864xf32, #tpu.memory_space<vmem>>, vector<64x32xf32>
      tpu.vector_store %arg8[%c0_239, %c480], %175 {strides = array<i32>} : memref<64x864xf32, #tpu.memory_space<vmem>>, vector<64x32xf32>,
      %177 = arith.index_cast %141 : i32 to index
      %c2_240 = arith.constant 2 : index
      %c8_241 = arith.constant 8 : index
      %c0_242 = arith.constant 0 : index
      %178 = vector.load %arg9[%177, %c2_240, %c8_241, %c0_242] : memref<4x10x24x32xf32, #tpu.memory_space<vmem>>, vector<1x8x8x32xf32>
      %179 = vector.shape_cast %178 : vector<1x8x8x32xf32> to vector<8x8x32xf32>
      %180 = vector.shape_cast %179 : vector<8x8x32xf32> to vector<64x32xf32>
      %c0_243 = arith.constant 0 : index
      %c512 = arith.constant 512 : index
      %181 = vector.load %arg8[%c0_243, %c512] : memref<64x864xf32, #tpu.memory_space<vmem>>, vector<64x32xf32>
      tpu.vector_store %arg8[%c0_243, %c512], %180 {strides = array<i32>} : memref<64x864xf32, #tpu.memory_space<vmem>>, vector<64x32xf32>,
      %182 = arith.index_cast %141 : i32 to index
      %c2_244 = arith.constant 2 : index
      %c9_245 = arith.constant 9 : index
      %c0_246 = arith.constant 0 : index
      %183 = vector.load %arg9[%182, %c2_244, %c9_245, %c0_246] : memref<4x10x24x32xf32, #tpu.memory_space<vmem>>, vector<1x8x8x32xf32>
      %184 = vector.shape_cast %183 : vector<1x8x8x32xf32> to vector<8x8x32xf32>
      %185 = vector.shape_cast %184 : vector<8x8x32xf32> to vector<64x32xf32>
      %c0_247 = arith.constant 0 : index
      %c544 = arith.constant 544 : index
      %186 = vector.load %arg8[%c0_247, %c544] : memref<64x864xf32, #tpu.memory_space<vmem>>, vector<64x32xf32>
      tpu.vector_store %arg8[%c0_247, %c544], %185 {strides = array<i32>} : memref<64x864xf32, #tpu.memory_space<vmem>>, vector<64x32xf32>,
      %c2_i32 = arith.constant 2 : i32
      %187 = arith.addi %85, %c2_i32 : i32
      %c3_i32_248 = arith.constant 3 : i32
      %188 = arith.andi %187, %c3_i32_248 : i32
      %189 = arith.index_cast %188 : i32 to index
      %c0_249 = arith.constant 0 : index
      %c7_250 = arith.constant 7 : index
      %c0_251 = arith.constant 0 : index
      %190 = vector.load %arg9[%189, %c0_249, %c7_250, %c0_251] : memref<4x10x24x32xf32, #tpu.memory_space<vmem>>, vector<1x8x8x32xf32>
      %191 = vector.shape_cast %190 : vector<1x8x8x32xf32> to vector<8x8x32xf32>
      %192 = vector.shape_cast %191 : vector<8x8x32xf32> to vector<64x32xf32>
      %c0_252 = arith.constant 0 : index
      %c576 = arith.constant 576 : index
      %193 = vector.load %arg8[%c0_252, %c576] : memref<64x864xf32, #tpu.memory_space<vmem>>, vector<64x32xf32>
      tpu.vector_store %arg8[%c0_252, %c576], %192 {strides = array<i32>} : memref<64x864xf32, #tpu.memory_space<vmem>>, vector<64x32xf32>,
      %194 = arith.index_cast %188 : i32 to index
      %c0_253 = arith.constant 0 : index
      %c8_254 = arith.constant 8 : index
      %c0_255 = arith.constant 0 : index
      %195 = vector.load %arg9[%194, %c0_253, %c8_254, %c0_255] : memref<4x10x24x32xf32, #tpu.memory_space<vmem>>, vector<1x8x8x32xf32>
      %196 = vector.shape_cast %195 : vector<1x8x8x32xf32> to vector<8x8x32xf32>
      %197 = vector.shape_cast %196 : vector<8x8x32xf32> to vector<64x32xf32>
      %c0_256 = arith.constant 0 : index
      %c608 = arith.constant 608 : index
      %198 = vector.load %arg8[%c0_256, %c608] : memref<64x864xf32, #tpu.memory_space<vmem>>, vector<64x32xf32>
      tpu.vector_store %arg8[%c0_256, %c608], %197 {strides = array<i32>} : memref<64x864xf32, #tpu.memory_space<vmem>>, vector<64x32xf32>,
      %199 = arith.index_cast %188 : i32 to index
      %c0_257 = arith.constant 0 : index
      %c9_258 = arith.constant 9 : index
      %c0_259 = arith.constant 0 : index
      %200 = vector.load %arg9[%199, %c0_257, %c9_258, %c0_259] : memref<4x10x24x32xf32, #tpu.memory_space<vmem>>, vector<1x8x8x32xf32>
      %201 = vector.shape_cast %200 : vector<1x8x8x32xf32> to vector<8x8x32xf32>
      %202 = vector.shape_cast %201 : vector<8x8x32xf32> to vector<64x32xf32>
      %c0_260 = arith.constant 0 : index
      %c640 = arith.constant 640 : index
      %203 = vector.load %arg8[%c0_260, %c640] : memref<64x864xf32, #tpu.memory_space<vmem>>, vector<64x32xf32>
      tpu.vector_store %arg8[%c0_260, %c640], %202 {strides = array<i32>} : memref<64x864xf32, #tpu.memory_space<vmem>>, vector<64x32xf32>,
      %204 = arith.index_cast %188 : i32 to index
      %c1_261 = arith.constant 1 : index
      %c7_262 = arith.constant 7 : index
      %c0_263 = arith.constant 0 : index
      %205 = vector.load %arg9[%204, %c1_261, %c7_262, %c0_263] : memref<4x10x24x32xf32, #tpu.memory_space<vmem>>, vector<1x8x8x32xf32>
      %206 = vector.shape_cast %205 : vector<1x8x8x32xf32> to vector<8x8x32xf32>
      %207 = vector.shape_cast %206 : vector<8x8x32xf32> to vector<64x32xf32>
      %c0_264 = arith.constant 0 : index
      %c672 = arith.constant 672 : index
      %208 = vector.load %arg8[%c0_264, %c672] : memref<64x864xf32, #tpu.memory_space<vmem>>, vector<64x32xf32>
      tpu.vector_store %arg8[%c0_264, %c672], %207 {strides = array<i32>} : memref<64x864xf32, #tpu.memory_space<vmem>>, vector<64x32xf32>,
      %209 = arith.index_cast %188 : i32 to index
      %c1_265 = arith.constant 1 : index
      %c8_266 = arith.constant 8 : index
      %c0_267 = arith.constant 0 : index
      %210 = vector.load %arg9[%209, %c1_265, %c8_266, %c0_267] : memref<4x10x24x32xf32, #tpu.memory_space<vmem>>, vector<1x8x8x32xf32>
      %211 = vector.shape_cast %210 : vector<1x8x8x32xf32> to vector<8x8x32xf32>
      %212 = vector.shape_cast %211 : vector<8x8x32xf32> to vector<64x32xf32>
      %c0_268 = arith.constant 0 : index
      %c704 = arith.constant 704 : index
      %213 = vector.load %arg8[%c0_268, %c704] : memref<64x864xf32, #tpu.memory_space<vmem>>, vector<64x32xf32>
      tpu.vector_store %arg8[%c0_268, %c704], %212 {strides = array<i32>} : memref<64x864xf32, #tpu.memory_space<vmem>>, vector<64x32xf32>,
      %214 = arith.index_cast %188 : i32 to index
      %c1_269 = arith.constant 1 : index
      %c9_270 = arith.constant 9 : index
      %c0_271 = arith.constant 0 : index
      %215 = vector.load %arg9[%214, %c1_269, %c9_270, %c0_271] : memref<4x10x24x32xf32, #tpu.memory_space<vmem>>, vector<1x8x8x32xf32>
      %216 = vector.shape_cast %215 : vector<1x8x8x32xf32> to vector<8x8x32xf32>
      %217 = vector.shape_cast %216 : vector<8x8x32xf32> to vector<64x32xf32>
      %c0_272 = arith.constant 0 : index
      %c736 = arith.constant 736 : index
      %218 = vector.load %arg8[%c0_272, %c736] : memref<64x864xf32, #tpu.memory_space<vmem>>, vector<64x32xf32>
      tpu.vector_store %arg8[%c0_272, %c736], %217 {strides = array<i32>} : memref<64x864xf32, #tpu.memory_space<vmem>>, vector<64x32xf32>,
      %219 = arith.index_cast %188 : i32 to index
      %c2_273 = arith.constant 2 : index
      %c7_274 = arith.constant 7 : index
      %c0_275 = arith.constant 0 : index
      %220 = vector.load %arg9[%219, %c2_273, %c7_274, %c0_275] : memref<4x10x24x32xf32, #tpu.memory_space<vmem>>, vector<1x8x8x32xf32>
      %221 = vector.shape_cast %220 : vector<1x8x8x32xf32> to vector<8x8x32xf32>
      %222 = vector.shape_cast %221 : vector<8x8x32xf32> to vector<64x32xf32>
      %c0_276 = arith.constant 0 : index
      %c768 = arith.constant 768 : index
      %223 = vector.load %arg8[%c0_276, %c768] : memref<64x864xf32, #tpu.memory_space<vmem>>, vector<64x32xf32>
      tpu.vector_store %arg8[%c0_276, %c768], %222 {strides = array<i32>} : memref<64x864xf32, #tpu.memory_space<vmem>>, vector<64x32xf32>,
      %224 = arith.index_cast %188 : i32 to index
      %c2_277 = arith.constant 2 : index
      %c8_278 = arith.constant 8 : index
      %c0_279 = arith.constant 0 : index
      %225 = vector.load %arg9[%224, %c2_277, %c8_278, %c0_279] : memref<4x10x24x32xf32, #tpu.memory_space<vmem>>, vector<1x8x8x32xf32>
      %226 = vector.shape_cast %225 : vector<1x8x8x32xf32> to vector<8x8x32xf32>
      %227 = vector.shape_cast %226 : vector<8x8x32xf32> to vector<64x32xf32>
      %c0_280 = arith.constant 0 : index
      %c800 = arith.constant 800 : index
      %228 = vector.load %arg8[%c0_280, %c800] : memref<64x864xf32, #tpu.memory_space<vmem>>, vector<64x32xf32>
      tpu.vector_store %arg8[%c0_280, %c800], %227 {strides = array<i32>} : memref<64x864xf32, #tpu.memory_space<vmem>>, vector<64x32xf32>,
      %229 = arith.index_cast %188 : i32 to index
      %c2_281 = arith.constant 2 : index
      %c9_282 = arith.constant 9 : index
      %c0_283 = arith.constant 0 : index
      %230 = vector.load %arg9[%229, %c2_281, %c9_282, %c0_283] : memref<4x10x24x32xf32, #tpu.memory_space<vmem>>, vector<1x8x8x32xf32>
      %231 = vector.shape_cast %230 : vector<1x8x8x32xf32> to vector<8x8x32xf32>
      %232 = vector.shape_cast %231 : vector<8x8x32xf32> to vector<64x32xf32>
      %c0_284 = arith.constant 0 : index
      %c832 = arith.constant 832 : index
      %233 = vector.load %arg8[%c0_284, %c832] : memref<64x864xf32, #tpu.memory_space<vmem>>, vector<64x32xf32>
      tpu.vector_store %arg8[%c0_284, %c832], %232 {strides = array<i32>} : memref<64x864xf32, #tpu.memory_space<vmem>>, vector<64x32xf32>,
      %c0_285 = arith.constant 0 : index
      %c0_286 = arith.constant 0 : index
      %234 = vector.load %arg8[%c0_285, %c0_286] : memref<64x864xf32, #tpu.memory_space<vmem>>, vector<64x864xf32>
      %c0_287 = arith.constant 0 : index
      %c0_288 = arith.constant 0 : index
      %235 = vector.load %arg4[%c0_287, %c0_288] : memref<864x32xf32, #tpu.memory_space<vmem>>, vector<864x32xf32>
      %cst_289 = arith.constant dense<0.000000e+00> : vector<64x32xf32>
      %236 = tpu.matmul %234, %235, %cst_289 {dimension_numbers = #tpu.dot_dimension_numbers<[1], [0], [0], [1], [0, 0, 1, 1], [], []>} : vector<64x864xf32>, vector<864x32xf32>, vector<64x32xf32> -> vector<64x32xf32>
      %237 = arith.addf %236, %17 : vector<64x32xf32>
      %cst_290 = arith.constant 0.000000e+00 : f32
      %238 = vector.broadcast %cst_290 : f32 to vector<64x32xf32>
      %239 = arith.maximumf %237, %238 : vector<64x32xf32>
      %240 = vector.shape_cast %239 : vector<64x32xf32> to vector<8x8x32xf32>
      %c0_291 = arith.constant 0 : index
      %241 = arith.index_cast %85 : i32 to index
      %c0_292 = arith.constant 0 : index
      %c0_293 = arith.constant 0 : index
      %c0_294 = arith.constant 0 : index
      %242 = vector.load %arg6[%c0_291, %241, %c0_292, %c0_293, %c0_294] : memref<1x8x8x8x32xf32, #tpu.memory_space<vmem>>, vector<1x1x8x8x32xf32>
      %243 = vector.shape_cast %242 : vector<1x1x8x8x32xf32> to vector<8x8x32xf32>
      %244 = vector.shape_cast %240 : vector<8x8x32xf32> to vector<1x1x8x8x32xf32>
      tpu.vector_store %arg6[%c0_291, %241, %c0_292, %c0_293, %c0_294], %244 {strides = array<i32>} : memref<1x8x8x8x32xf32, #tpu.memory_space<vmem>>, vector<1x1x8x8x32xf32>,
    }
    %c8_i32_164 = arith.constant 8 : i32
    return
  }
  func.func @transform_0(%arg0: i32) -> (i32, i32, i32, i32, i32) {
    %c0_i32 = arith.constant 0 : i32
    %c0_i32_0 = arith.constant 0 : i32
    %c0_i32_1 = arith.constant 0 : i32
    %c0_i32_2 = arith.constant 0 : i32
    %c0_i32_3 = arith.constant 0 : i32
    return %arg0, %c0_i32, %c0_i32_0, %c0_i32_1, %c0_i32_2 : i32, i32, i32, i32, i32
  }
  func.func @transform_1(%arg0: i32) -> (i32, i32) {
    %c0_i32 = arith.constant 0 : i32
    %c0_i32_0 = arith.constant 0 : i32
    %c0_i32_1 = arith.constant 0 : i32
    return %c0_i32, %c0_i32_0 : i32, i32
  }
  func.func @transform_2(%arg0: i32) -> (i32, i32) {
    %c0_i32 = arith.constant 0 : i32
    %c0_i32_0 = arith.constant 0 : i32
    %c0_i32_1 = arith.constant 0 : i32
    return %c0_i32, %c0_i32_0 : i32, i32
  }
  func.func @transform_3(%arg0: i32) -> (i32, i32) {
    %c0_i32 = arith.constant 0 : i32
    %c0_i32_0 = arith.constant 0 : i32
    %c0_i32_1 = arith.constant 0 : i32
    return %c0_i32, %c0_i32_0 : i32, i32
  }
  func.func @transform_4(%arg0: i32) -> (i32, i32) {
    %c0_i32 = arith.constant 0 : i32
    %c0_i32_0 = arith.constant 0 : i32
    %c0_i32_1 = arith.constant 0 : i32
    return %c0_i32, %c0_i32_0 : i32, i32
  }
  func.func @transform_5(%arg0: i32) -> (i32, i32, i32, i32, i32) {
    %c0_i32 = arith.constant 0 : i32
    %c0_i32_0 = arith.constant 0 : i32
    %c0_i32_1 = arith.constant 0 : i32
    %c0_i32_2 = arith.constant 0 : i32
    %c0_i32_3 = arith.constant 0 : i32
    return %arg0, %c0_i32, %c0_i32_0, %c0_i32_1, %c0_i32_2 : i32, i32, i32, i32, i32
  }
}

</mosaic_0001>

<llo_original>
// kernel: basic_block_forward.1
$region0: #{basic_block_forward.1}
  #allocation0 [shape = 'u32[]', space=smem, size = 0x4, offset = 0x4, fixed_abs, tag = 'smem constant byte address 0x4 - core index']
  #allocation1 [shape = 'u32[144,128]{1,0:T(1,128)}', space=vmem, size = 0x12000, scoped, tag = 'internal scratch']
  #allocation2 [shape = 'f32[8,8,108]{2,1,0:T(8,128)}', space=vmem, size = 0x8000, scoped, tag = 'scratch operand']
  #allocation3 [shape = 'f32[64,864]{1,0:T(8,128)}', space=vmem, size = 0x38000, scoped, tag = 'scratch operand']
  #allocation4 [shape = 'f32[4,10,24,32]{3,2,1,0:T(8,128)}', space=vmem, size = 0x78000, scoped, tag = 'scratch operand']
  %s0 = inlined_call_operand.vmem [shape: f32[2,8,8,8,4], index: 0, kind: input, shape index: {}]
  %s1 = inlined_call_operand.vmem [shape: f32[108,32], index: 1, kind: input, shape index: {}]
  %s2 = inlined_call_operand.vmem [shape: f32[1,32], index: 2, kind: input, shape index: {}]
  %s3 = inlined_call_operand.vmem [shape: f32[864,32], index: 3, kind: input, shape index: {}]
  %s4 = inlined_call_operand.vmem [shape: f32[1,32], index: 4, kind: input, shape index: {}]
  %s5 = inlined_call_operand.hbm [shape: f32[2,8,8,8,32], index: 5, kind: output, shape index: {}]
  %s6 = sld [smem:[#allocation0]]
  $region76: #{basic_block_forward.1} parent=0
    _
  %s8 = ssub.s32 1, %s6
  %s9 = scalar_select 0, %s8, %s6
  $region1: #{basic_block_forward.1} parent=0
    #allocation5 [shape = 'u8[524288]{0}', space=vmem, size = 0x80000, scoped, tag = 'output window, operand 0']
    #allocation6 [shape = 's32[2]{0}', space=sflag, size = 0x8, scoped, tag = 'scoped memory for basic_block_forward.1']
    %10 = vsyncpa [#allocation6], 0
    %s11 = scalar_lea.sflag [#allocation6], 1
    %12 = vsyncpa %s11, 0
    loop: start=0, step=1, limit=4
    $region2: #{basic_block_forward.1} parent=1 // loop_pre_header
      _
    $region3: #{basic_block_forward.1} parent=1 // loop_header
      %s14 = sphi 0, %s18
      %p15 = scmp.ge.s32.totalorder %s14, 4
      %s24 = sphi 0, %s26
      %s27 = sphi 0, %s24
      %s28 = sphi 0, %s27
      %s44 = sphi 0, %s28
      %s48 = sphi 0, %s48
      %s50 = sphi 0, %s48
      %s51 = sphi 0, %s50
      %s65 = sphi 0, %s51
      %s69 = sphi 0, %s69
      %s71 = sphi 0, %s69
      %s72 = sphi 0, %s71
      %s86 = sphi 0, %s72
      %s90 = sphi 0, %s90
      %s92 = sphi 0, %s90
      %s93 = sphi 0, %s92
      %s107 = sphi 0, %s93
      %s111 = sphi 0, %s111
      %s113 = sphi 0, %s111
      %s114 = sphi 0, %s113
      %s128 = sphi 0, %s114
      %s134 = sphi 0, %s136
      %s137 = sphi 0, %s134
      %s138 = sphi 0, %s137
      %s154 = sphi 0, %s138
    $region4: #{basic_block_forward.1} parent=1 // loop_header_branch
      %17 = sbr.rel (%p15) target = $region8
    $region5: #{basic_block_forward.1} parent=1 // loop_body
      %s19 = ssub.s32 %s14, 1
      %s20 = ssub.s32 %s14, 2
      %s21 = sadd.s32 %s14, 1
      %s22 = ssub.s32 %s14, %s21
      %p23 = scmp.eq.s32.totalorder %s22, 0
      %s25 = sadd.s32 %s24, 1
      %s26 = scalar_select %p23, %s24, %s25
      %p29 = pneg %p23
      %p30 = scmp.eq.s32.totalorder %s14, 1
      %p31 = por %p29, %p30
      %p32 = scmp.ne.s32.totalorder %s24, %s27
      %p33 = scmp.eq.s32.totalorder %s14, 0
      %p34 = por %p32, %p33
      %p35 = scmp.ne.s32.totalorder %s24, %s27
      %p36 = scmp.eq.s32.totalorder %s19, 1
      %p37 = por %p35, %p36
      %p38 = scmp.ne.s32.totalorder %s27, %s28
      %p39 = scmp.eq.s32.totalorder %s19, 0
      %p40 = por %p38, %p39
      %p41 = scmp.ne.s32.totalorder %s27, %s28
      %p42 = scmp.eq.s32.totalorder %s20, 1
      %p43 = por %p41, %p42
      %p45 = scmp.ne.s32.totalorder %s28, %s44
      %p46 = scmp.eq.s32.totalorder %s20, 0
      %p47 = por %p45, %p46
      %s49 = sadd.s32 %s48, 1
      %p52 = scmp.eq.s32.totalorder %s14, 1
      %p53 = scmp.ne.s32.totalorder %s48, %s50
      %p54 = scmp.eq.s32.totalorder %s14, 0
      %p55 = por %p53, %p54
      %p56 = scmp.ne.s32.totalorder %s48, %s50
      %p57 = scmp.eq.s32.totalorder %s19, 1
      %p58 = por %p56, %p57
      %p59 = scmp.ne.s32.totalorder %s50, %s51
      %p60 = scmp.eq.s32.totalorder %s19, 0
      %p61 = por %p59, %p60
      %p62 = scmp.ne.s32.totalorder %s50, %s51
      %p63 = scmp.eq.s32.totalorder %s20, 1
      %p64 = por %p62, %p63
      %p66 = scmp.ne.s32.totalorder %s51, %s65
      %p67 = scmp.eq.s32.totalorder %s20, 0
      %p68 = por %p66, %p67
      %s70 = sadd.s32 %s69, 1
      %p73 = scmp.eq.s32.totalorder %s14, 1
      %p74 = scmp.ne.s32.totalorder %s69, %s71
      %p75 = scmp.eq.s32.totalorder %s14, 0
      %p76 = por %p74, %p75
      %p77 = scmp.ne.s32.totalorder %s69, %s71
      %p78 = scmp.eq.s32.totalorder %s19, 1
      %p79 = por %p77, %p78
      %p80 = scmp.ne.s32.totalorder %s71, %s72
      %p81 = scmp.eq.s32.totalorder %s19, 0
      %p82 = por %p80, %p81
      %p83 = scmp.ne.s32.totalorder %s71, %s72
      %p84 = scmp.eq.s32.totalorder %s20, 1
      %p85 = por %p83, %p84
      %p87 = scmp.ne.s32.totalorder %s72, %s86
      %p88 = scmp.eq.s32.totalorder %s20, 0
      %p89 = por %p87, %p88
      %s91 = sadd.s32 %s90, 1
      %p94 = scmp.eq.s32.totalorder %s14, 1
      %p95 = scmp.ne.s32.totalorder %s90, %s92
      %p96 = scmp.eq.s32.totalorder %s14, 0
      %p97 = por %p95, %p96
      %p98 = scmp.ne.s32.totalorder %s90, %s92
      %p99 = scmp.eq.s32.totalorder %s19, 1
      %p100 = por %p98, %p99
      %p101 = scmp.ne.s32.totalorder %s92, %s93
      %p102 = scmp.eq.s32.totalorder %s19, 0
      %p103 = por %p101, %p102
      %p104 = scmp.ne.s32.totalorder %s92, %s93
      %p105 = scmp.eq.s32.totalorder %s20, 1
      %p106 = por %p104, %p105
      %p108 = scmp.ne.s32.totalorder %s93, %s107
      %p109 = scmp.eq.s32.totalorder %s20, 0
      %p110 = por %p108, %p109
      %s112 = sadd.s32 %s111, 1
      %p115 = scmp.eq.s32.totalorder %s14, 1
      %p116 = scmp.ne.s32.totalorder %s111, %s113
      %p117 = scmp.eq.s32.totalorder %s14, 0
      %p118 = por %p116, %p117
      %p119 = scmp.ne.s32.totalorder %s111, %s113
      %p120 = scmp.eq.s32.totalorder %s19, 1
      %p121 = por %p119, %p120
      %p122 = scmp.ne.s32.totalorder %s113, %s114
      %p123 = scmp.eq.s32.totalorder %s19, 0
      %p124 = por %p122, %p123
      %p125 = scmp.ne.s32.totalorder %s113, %s114
      %p126 = scmp.eq.s32.totalorder %s20, 1
      %p127 = por %p125, %p126
      %p129 = scmp.ne.s32.totalorder %s114, %s128
      %p130 = scmp.eq.s32.totalorder %s20, 0
      %p131 = por %p129, %p130
      %s132 = ssub.s32 %s14, %s21
      %p133 = scmp.eq.s32.totalorder %s132, 0
      %s135 = sadd.s32 %s134, 1
      %s136 = scalar_select %p133, %s134, %s135
      %p139 = pneg %p133
      %p140 = scmp.eq.s32.totalorder %s14, 1
      %p141 = por %p139, %p140
      %p142 = scmp.ne.s32.totalorder %s134, %s137
      %p143 = scmp.eq.s32.totalorder %s14, 0
      %p144 = por %p142, %p143
      %p145 = scmp.ne.s32.totalorder %s134, %s137
      %p146 = scmp.eq.s32.totalorder %s19, 1
      %p147 = por %p145, %p146
      %p148 = scmp.ne.s32.totalorder %s137, %s138
      %p149 = scmp.eq.s32.totalorder %s19, 0
      %p150 = por %p148, %p149
      %p151 = scmp.ne.s32.totalorder %s137, %s138
      %p152 = scmp.eq.s32.totalorder %s20, 1
      %p153 = por %p151, %p152
      %p155 = scmp.ne.s32.totalorder %s138, %s154
      %p156 = scmp.eq.s32.totalorder %s20, 0
      %p157 = por %p155, %p156
      %p158 = scmp.le.s32.totalorder 1, %s14
      %p159 = scmp.lt.s32.totalorder %s14, 3
      %p160 = pnand %p158, %p159
      %p161 = pneg %p160
      // Predicated region
      $region9: #{basic_block_forward.1} parent=5 // pred_check
        _
      $region10: #{basic_block_forward.1} parent=5 // pred_check_branch
        %163 = sbr.rel (%p160) target = $region12
      $region11: #{basic_block_forward.1} parent=5 // pred_region
        %s164 = ssub.s32 %s14, 1
        // Predicated region
        $region13: #{basic_block_forward.1} parent=11 // pred_check
          %p165 = pneg %p61
        $region14: #{basic_block_forward.1} parent=11 // pred_check_branch
          %167 = sbr.rel (%p165) target = $region16
        $region15: #{basic_block_forward.1} parent=11 // pred_region
          _
        $region16: #{basic_block_forward.1} parent=11 // pred_fallthru
          _
        // Predicated region
        $region17: #{basic_block_forward.1} parent=11 // pred_check
          %p168 = pneg %p82
        $region18: #{basic_block_forward.1} parent=11 // pred_check_branch
          %170 = sbr.rel (%p168) target = $region20
        $region19: #{basic_block_forward.1} parent=11 // pred_region
          _
        $region20: #{basic_block_forward.1} parent=11 // pred_fallthru
          _
        // Predicated region
        $region21: #{basic_block_forward.1} parent=11 // pred_check
          %p171 = pneg %p103
        $region22: #{basic_block_forward.1} parent=11 // pred_check_branch
          %173 = sbr.rel (%p171) target = $region24
        $region23: #{basic_block_forward.1} parent=11 // pred_region
          _
        $region24: #{basic_block_forward.1} parent=11 // pred_fallthru
          _
        // Predicated region
        $region25: #{basic_block_forward.1} parent=11 // pred_check
          %p174 = pneg %p124
        $region26: #{basic_block_forward.1} parent=11 // pred_check_branch
          %176 = sbr.rel (%p174) target = $region28
        $region27: #{basic_block_forward.1} parent=11 // pred_region
          _
        $region28: #{basic_block_forward.1} parent=11 // pred_fallthru
          _
      $region12: #{basic_block_forward.1} parent=5 // pred_fallthru
        _
      %p177 = scmp.lt.s32.totalorder %s14, 2
      // Predicated region
      $region29: #{basic_block_forward.1} parent=5 // pred_check
        %p178 = pneg %p177
      $region30: #{basic_block_forward.1} parent=5 // pred_check_branch
        %180 = sbr.rel (%p178) target = $region32
      $region31: #{basic_block_forward.1} parent=5 // pred_region
        // Predicated region
        $region33: #{basic_block_forward.1} parent=31 // pred_check
          %p181 = pneg %p34
        $region34: #{basic_block_forward.1} parent=31 // pred_check_branch
          %183 = sbr.rel (%p181) target = $region36
        $region35: #{basic_block_forward.1} parent=31 // pred_region
          %p184 = scmp.lt.s32.totalorder %s14, 1
          %s185 = scalar_select %p184, %s14, 1
          %s186 = smul.addr %s185, 64
          %s187 = smul.addr %s186, 8
          %s188 = scalar_lea.vmem %s0, %s187
        $region36: #{basic_block_forward.1} parent=31 // pred_fallthru
          _
      $region32: #{basic_block_forward.1} parent=5 // pred_fallthru
        _
      %p189 = scmp.le.s32.totalorder 1, %s14
      %p190 = scmp.lt.s32.totalorder %s14, 3
      %p191 = pnand %p189, %p190
      %p192 = pneg %p191
      // Predicated region
      $region37: #{basic_block_forward.1} parent=5 // pred_check
        _
      $region38: #{basic_block_forward.1} parent=5 // pred_check_branch
        %194 = sbr.rel (%p191) target = $region40
      $region39: #{basic_block_forward.1} parent=5 // pred_region
        %s195 = ssub.s32 %s14, 1
        %p196 = scmp.lt.s32.totalorder %s19, 1
        %s197 = scalar_select %p196, %s19, 1
        %s198 = smul.addr %s197, 64
        %s199 = smul.addr %s198, 8
        %s200 = scalar_lea.vmem %s0, %s199
        %p201 = pneg %p40
        %p202 = pneg %p37
        %p203 = pneg %p61
        %p204 = pneg %p58
        %p205 = pneg %p82
        %p206 = pneg %p79
        %p207 = pneg %p103
        %p208 = pneg %p100
        %p209 = pneg %p124
        %p210 = pneg %p121
        %p211 = pneg %p150
        %p212 = pneg %p147
        %s213 = sand.u32 %s137, 1
        %s214 = scalar_lea.sflag [#allocation6], %s213
        %s215 = sand.u32 %s137, 1
        %s216 = smul.addr %s215, 512
        %s217 = scalar_lea.vmem [#allocation5], %s216
        %p218 = scmp.lt.s32.totalorder %s19, 1
        %s219 = scalar_select %p218, %s19, 1
        %s220 = smul.addr %s219, 64
        %s221 = smul.addr %s220, 8
        %s222 = scalar_lea.vmem %s0, %s221
        %vm223 = vcmask 883712
        %224 = vst.msk [vmem:[#allocation2] sm:$0xff] %vm223, 0.0
        %225 = vst.msk [vmem:[#allocation2 + $0x8] sm:$0xff] %vm223, 0.0
        %226 = vst.msk [vmem:[#allocation2 + $0x10] sm:$0xff] %vm223, 0.0
        %227 = vst.msk [vmem:[#allocation2 + $0x18] sm:$0xff] %vm223, 0.0
        %228 = vst.msk [vmem:[#allocation2 + $0x20] sm:$0xff] %vm223, 0.0
        %229 = vst.msk [vmem:[#allocation2 + $0x28] sm:$0xff] %vm223, 0.0
        %230 = vst.msk [vmem:[#allocation2 + $0x30] sm:$0xff] %vm223, 0.0
        %231 = vst.msk [vmem:[#allocation2 + $0x38] sm:$0xff] %vm223, 0.0
        %vm232 = vcmask 261120
        %233 = vst.msk [vmem:[#allocation4] sm:$0xff] %vm232, 0.0
        %234 = vst.msk [vmem:[#allocation4 + $0x8] sm:$0xff] %vm232, 0.0
        %235 = vst.msk [vmem:[#allocation4 + $0x10] sm:$0xff] %vm232, 0.0
        %236 = vst.msk [vmem:[#allocation4 + $0xf0] sm:$0xff] %vm232, 0.0
        %237 = vst.msk [vmem:[#allocation4 + $0xf8] sm:$0xff] %vm232, 0.0
        %238 = vst.msk [vmem:[#allocation4 + $0x100] sm:$0xff] %vm232, 0.0
        %239 = vst.msk [vmem:[#allocation4 + $0x1e0] sm:$0xff] %vm232, 0.0
        %240 = vst.msk [vmem:[#allocation4 + $0x1e8] sm:$0xff] %vm232, 0.0
        %241 = vst.msk [vmem:[#allocation4 + $0x1f0] sm:$0xff] %vm232, 0.0
        %242 = vst.msk [vmem:[#allocation4 + $0x2d0] sm:$0xff] %vm232, 0.0
        %243 = vst.msk [vmem:[#allocation4 + $0x2d8] sm:$0xff] %vm232, 0.0
        %244 = vst.msk [vmem:[#allocation4 + $0x2e0] sm:$0xff] %vm232, 0.0
        %s245 = scalar_lea.vmem [#allocation4], 216
        %246 = vst.msk [vmem:[%s245] sm:$0xff] %vm232, 0.0
        %247 = vst.msk [vmem:[%s245 + $0x8] sm:$0xff] %vm232, 0.0
        %248 = vst.msk [vmem:[%s245 + $0x10] sm:$0xff] %vm232, 0.0
        %249 = vst.msk [vmem:[%s245 + $0xf0] sm:$0xff] %vm232, 0.0
        %250 = vst.msk [vmem:[%s245 + $0xf8] sm:$0xff] %vm232, 0.0
        %251 = vst.msk [vmem:[%s245 + $0x100] sm:$0xff] %vm232, 0.0
        %252 = vst.msk [vmem:[%s245 + $0x1e0] sm:$0xff] %vm232, 0.0
        %253 = vst.msk [vmem:[%s245 + $0x1e8] sm:$0xff] %vm232, 0.0
        %254 = vst.msk [vmem:[%s245 + $0x1f0] sm:$0xff] %vm232, 0.0
        %255 = vst.msk [vmem:[%s245 + $0x2d0] sm:$0xff] %vm232, 0.0
        %256 = vst.msk [vmem:[%s245 + $0x2d8] sm:$0xff] %vm232, 0.0
        %257 = vst.msk [vmem:[%s245 + $0x2e0] sm:$0xff] %vm232, 0.0
        %s258 = scalar_lea.vmem [#allocation4], 24
        %259 = vst.msk [vmem:[%s258] sm:$0xff] %vm232, 0.0
        %260 = vst.msk [vmem:[%s258 + $0x18] sm:$0xff] %vm232, 0.0
        %261 = vst.msk [vmem:[%s258 + $0x30] sm:$0xff] %vm232, 0.0
        %262 = vst.msk [vmem:[%s258 + $0x48] sm:$0xff] %vm232, 0.0
        %263 = vst.msk [vmem:[%s258 + $0x60] sm:$0xff] %vm232, 0.0
        %264 = vst.msk [vmem:[%s258 + $0x78] sm:$0xff] %vm232, 0.0
        %265 = vst.msk [vmem:[%s258 + $0x90] sm:$0xff] %vm232, 0.0
        %266 = vst.msk [vmem:[%s258 + $0xa8] sm:$0xff] %vm232, 0.0
        %267 = vst.msk [vmem:[%s258 + $0xf0] sm:$0xff] %vm232, 0.0
        %268 = vst.msk [vmem:[%s258 + $0x108] sm:$0xff] %vm232, 0.0
        %269 = vst.msk [vmem:[%s258 + $0x120] sm:$0xff] %vm232, 0.0
        %270 = vst.msk [vmem:[%s258 + $0x138] sm:$0xff] %vm232, 0.0
        %271 = vst.msk [vmem:[%s258 + $0x150] sm:$0xff] %vm232, 0.0
        %272 = vst.msk [vmem:[%s258 + $0x168] sm:$0xff] %vm232, 0.0
        %273 = vst.msk [vmem:[%s258 + $0x180] sm:$0xff] %vm232, 0.0
        %274 = vst.msk [vmem:[%s258 + $0x198] sm:$0xff] %vm232, 0.0
        %275 = vst.msk [vmem:[%s258 + $0x1e0] sm:$0xff] %vm232, 0.0
        %276 = vst.msk [vmem:[%s258 + $0x1f8] sm:$0xff] %vm232, 0.0
        %277 = vst.msk [vmem:[%s258 + $0x210] sm:$0xff] %vm232, 0.0
        %278 = vst.msk [vmem:[%s258 + $0x228] sm:$0xff] %vm232, 0.0
        %279 = vst.msk [vmem:[%s258 + $0x240] sm:$0xff] %vm232, 0.0
        %280 = vst.msk [vmem:[%s258 + $0x258] sm:$0xff] %vm232, 0.0
        %281 = vst.msk [vmem:[%s258 + $0x270] sm:$0xff] %vm232, 0.0
        %282 = vst.msk [vmem:[%s258 + $0x288] sm:$0xff] %vm232, 0.0
        %283 = vst.msk [vmem:[%s258 + $0x2d0] sm:$0xff] %vm232, 0.0
        %284 = vst.msk [vmem:[%s258 + $0x2e8] sm:$0xff] %vm232, 0.0
        %285 = vst.msk [vmem:[%s258 + $0x300] sm:$0xff] %vm232, 0.0
        %286 = vst.msk [vmem:[%s258 + $0x318] sm:$0xff] %vm232, 0.0
        %287 = vst.msk [vmem:[%s258 + $0x330] sm:$0xff] %vm232, 0.0
        %288 = vst.msk [vmem:[%s258 + $0x348] sm:$0xff] %vm232, 0.0
        %289 = vst.msk [vmem:[%s258 + $0x360] sm:$0xff] %vm232, 0.0
        %290 = vst.msk [vmem:[%s258 + $0x378] sm:$0xff] %vm232, 0.0
        %291 = vst.msk [vmem:[%s258 + $0x10] sm:$0xff] %vm232, 0.0
        %292 = vst.msk [vmem:[%s258 + $0x28] sm:$0xff] %vm232, 0.0
        %293 = vst.msk [vmem:[%s258 + $0x40] sm:$0xff] %vm232, 0.0
        %294 = vst.msk [vmem:[%s258 + $0x58] sm:$0xff] %vm232, 0.0
        %295 = vst.msk [vmem:[%s258 + $0x70] sm:$0xff] %vm232, 0.0
        %296 = vst.msk [vmem:[%s258 + $0x88] sm:$0xff] %vm232, 0.0
        %297 = vst.msk [vmem:[%s258 + $0xa0] sm:$0xff] %vm232, 0.0
        %298 = vst.msk [vmem:[%s258 + $0xb8] sm:$0xff] %vm232, 0.0
        %299 = vst.msk [vmem:[%s258 + $0x100] sm:$0xff] %vm232, 0.0
        %300 = vst.msk [vmem:[%s258 + $0x118] sm:$0xff] %vm232, 0.0
        %301 = vst.msk [vmem:[%s258 + $0x130] sm:$0xff] %vm232, 0.0
        %302 = vst.msk [vmem:[%s258 + $0x148] sm:$0xff] %vm232, 0.0
        %303 = vst.msk [vmem:[%s258 + $0x160] sm:$0xff] %vm232, 0.0
        %304 = vst.msk [vmem:[%s258 + $0x178] sm:$0xff] %vm232, 0.0
        %305 = vst.msk [vmem:[%s258 + $0x190] sm:$0xff] %vm232, 0.0
        %306 = vst.msk [vmem:[%s258 + $0x1a8] sm:$0xff] %vm232, 0.0
        %307 = vst.msk [vmem:[%s258 + $0x1f0] sm:$0xff] %vm232, 0.0
        %308 = vst.msk [vmem:[%s258 + $0x208] sm:$0xff] %vm232, 0.0
        %309 = vst.msk [vmem:[%s258 + $0x220] sm:$0xff] %vm232, 0.0
        %310 = vst.msk [vmem:[%s258 + $0x238] sm:$0xff] %vm232, 0.0
        %311 = vst.msk [vmem:[%s258 + $0x250] sm:$0xff] %vm232, 0.0
        %312 = vst.msk [vmem:[%s258 + $0x268] sm:$0xff] %vm232, 0.0
        %313 = vst.msk [vmem:[%s258 + $0x280] sm:$0xff] %vm232, 0.0
        %314 = vst.msk [vmem:[%s258 + $0x298] sm:$0xff] %vm232, 0.0
        %315 = vst.msk [vmem:[%s258 + $0x2e0] sm:$0xff] %vm232, 0.0
        %316 = vst.msk [vmem:[%s258 + $0x2f8] sm:$0xff] %vm232, 0.0
        %317 = vst.msk [vmem:[%s258 + $0x310] sm:$0xff] %vm232, 0.0
        %318 = vst.msk [vmem:[%s258 + $0x328] sm:$0xff] %vm232, 0.0
        %319 = vst.msk [vmem:[%s258 + $0x340] sm:$0xff] %vm232, 0.0
        %320 = vst.msk [vmem:[%s258 + $0x358] sm:$0xff] %vm232, 0.0
        %321 = vst.msk [vmem:[%s258 + $0x370] sm:$0xff] %vm232, 0.0
        %322 = vst.msk [vmem:[%s258 + $0x388] sm:$0xff] %vm232, 0.0
        %323 = vst.msk [vmem:[%s258 + $0x8] sm:$0xff] %vm232, 0.0
        %324 = vst.msk [vmem:[%s258 + $0x20] sm:$0xff] %vm232, 0.0
        %325 = vst.msk [vmem:[%s258 + $0x38] sm:$0xff] %vm232, 0.0
        %326 = vst.msk [vmem:[%s258 + $0x50] sm:$0xff] %vm232, 0.0
        %327 = vst.msk [vmem:[%s258 + $0x68] sm:$0xff] %vm232, 0.0
        %328 = vst.msk [vmem:[%s258 + $0x80] sm:$0xff] %vm232, 0.0
        %329 = vst.msk [vmem:[%s258 + $0x98] sm:$0xff] %vm232, 0.0
        %330 = vst.msk [vmem:[%s258 + $0xb0] sm:$0xff] %vm232, 0.0
        %v331 = vld [vmem:[%s2] sm:$0x1]
        %v333 = vlaneseq
        %v334 = vshrl.u32 %v333, 7
        %v335 = vsub.s32 0, %v334
        %v336 = vrot.slane %v331, %v335
        %v338 = vld [vmem:[%s4] sm:$0x1]
        %v340 = vlaneseq
        %v341 = vshrl.u32 %v340, 7
        %v342 = vsub.s32 0, %v341
        %v343 = vrot.slane %v338, %v342
        %v345 = vld [vmem:[%s222] sm:$0x7f]
        %v346 = vld [vmem:[%s222 + $0x8] sm:$0x7f]
        %v347 = vld [vmem:[%s222 + $0x10] sm:$0x7f]
        %v348 = vld [vmem:[%s222 + $0x18] sm:$0x7f]
        %v349 = vld [vmem:[%s222 + $0x20] sm:$0x7f]
        %v350 = vld [vmem:[%s222 + $0x28] sm:$0x7f]
        %v351 = vld [vmem:[%s222 + $0x30] sm:$0x7f]
        %359 = vrot.lane.b32.xlu0 %v345, 36
        %v360 = vpop.permute.xlu0 %359
        %361 = vrot.lane.b32.xlu0 %v346, 36
        %v362 = vpop.permute.xlu0 %361
        %363 = vrot.lane.b32.xlu0 %v347, 36
        %v364 = vpop.permute.xlu0 %363
        %365 = vrot.lane.b32.xlu0 %v348, 36
        %v366 = vpop.permute.xlu0 %365
        %367 = vrot.lane.b32.xlu0 %v349, 36
        %v368 = vpop.permute.xlu0 %367
        %369 = vrot.lane.b32.xlu0 %v350, 36
        %v370 = vpop.permute.xlu0 %369
        %371 = vrot.lane.b32.xlu0 %v351, 36
        %v372 = vpop.permute.xlu0 %371
        %s380 = scalar_lea.vmem [#allocation2], 8
        %vm381 = vcmask 325920
        %382 = vst.msk [vmem:[%s380 + $0x1] sm:$0x7f] %vm381, %v360
        %383 = vst.msk [vmem:[%s380 + $0x9] sm:$0x7f] %vm381, %v362
        %384 = vst.msk [vmem:[%s380 + $0x11] sm:$0x7f] %vm381, %v364
        %385 = vst.msk [vmem:[%s380 + $0x19] sm:$0x7f] %vm381, %v366
        %386 = vst.msk [vmem:[%s380 + $0x21] sm:$0x7f] %vm381, %v368
        %387 = vst.msk [vmem:[%s380 + $0x29] sm:$0x7f] %vm381, %v370
        %388 = vst.msk [vmem:[%s380 + $0x31] sm:$0x7f] %vm381, %v372
        %v389 = vld [vmem:[%s222] sm:$0xff]
        %v390 = vld [vmem:[%s222 + $0x8] sm:$0xff]
        %v391 = vld [vmem:[%s222 + $0x10] sm:$0xff]
        %v392 = vld [vmem:[%s222 + $0x18] sm:$0xff]
        %v393 = vld [vmem:[%s222 + $0x20] sm:$0xff]
        %v394 = vld [vmem:[%s222 + $0x28] sm:$0xff]
        %v395 = vld [vmem:[%s222 + $0x30] sm:$0xff]
        %403 = vrot.lane.b32.xlu0 %v389, 40
        %v404 = vpop.permute.xlu0 %403
        %405 = vrot.lane.b32.xlu0 %v390, 40
        %v406 = vpop.permute.xlu0 %405
        %407 = vrot.lane.b32.xlu0 %v391, 40
        %v408 = vpop.permute.xlu0 %407
        %409 = vrot.lane.b32.xlu0 %v392, 40
        %v410 = vpop.permute.xlu0 %409
        %411 = vrot.lane.b32.xlu0 %v393, 40
        %v412 = vpop.permute.xlu0 %411
        %413 = vrot.lane.b32.xlu0 %v394, 40
        %v414 = vpop.permute.xlu0 %413
        %415 = vrot.lane.b32.xlu0 %v395, 40
        %v416 = vpop.permute.xlu0 %415
        %vm424 = vcmask 359744
        %425 = vst.msk [vmem:[%s380] sm:$0xff] %vm424, %v404
        %426 = vst.msk [vmem:[%s380 + $0x8] sm:$0xff] %vm424, %v406
        %427 = vst.msk [vmem:[%s380 + $0x10] sm:$0xff] %vm424, %v408
        %428 = vst.msk [vmem:[%s380 + $0x18] sm:$0xff] %vm424, %v410
        %429 = vst.msk [vmem:[%s380 + $0x20] sm:$0xff] %vm424, %v412
        %430 = vst.msk [vmem:[%s380 + $0x28] sm:$0xff] %vm424, %v414
        %431 = vst.msk [vmem:[%s380 + $0x30] sm:$0xff] %vm424, %v416
        %v432 = vld [vmem:[%s222 + $0x1] sm:$0x7f]
        %v433 = vld [vmem:[%s222 + $0x9] sm:$0x7f]
        %v434 = vld [vmem:[%s222 + $0x11] sm:$0x7f]
        %v435 = vld [vmem:[%s222 + $0x19] sm:$0x7f]
        %v436 = vld [vmem:[%s222 + $0x21] sm:$0x7f]
        %v437 = vld [vmem:[%s222 + $0x29] sm:$0x7f]
        %v438 = vld [vmem:[%s222 + $0x31] sm:$0x7f]
        %446 = vrot.lane.b32.xlu0 %v432, 44
        %v447 = vpop.permute.xlu0 %446
        %448 = vrot.lane.b32.xlu0 %v433, 44
        %v449 = vpop.permute.xlu0 %448
        %450 = vrot.lane.b32.xlu0 %v434, 44
        %v451 = vpop.permute.xlu0 %450
        %452 = vrot.lane.b32.xlu0 %v435, 44
        %v453 = vpop.permute.xlu0 %452
        %454 = vrot.lane.b32.xlu0 %v436, 44
        %v455 = vpop.permute.xlu0 %454
        %456 = vrot.lane.b32.xlu0 %v437, 44
        %v457 = vpop.permute.xlu0 %456
        %458 = vrot.lane.b32.xlu0 %v438, 44
        %v459 = vpop.permute.xlu0 %458
        %vm467 = vcmask 391520
        %468 = vst.msk [vmem:[%s380] sm:$0x7f] %vm467, %v447
        %469 = vst.msk [vmem:[%s380 + $0x8] sm:$0x7f] %vm467, %v449
        %470 = vst.msk [vmem:[%s380 + $0x10] sm:$0x7f] %vm467, %v451
        %471 = vst.msk [vmem:[%s380 + $0x18] sm:$0x7f] %vm467, %v453
        %472 = vst.msk [vmem:[%s380 + $0x20] sm:$0x7f] %vm467, %v455
        %473 = vst.msk [vmem:[%s380 + $0x28] sm:$0x7f] %vm467, %v457
        %474 = vst.msk [vmem:[%s380 + $0x30] sm:$0x7f] %vm467, %v459
        %v475 = vld [vmem:[%s222] sm:$0x7f]
        %v476 = vld [vmem:[%s222 + $0x8] sm:$0x7f]
        %v477 = vld [vmem:[%s222 + $0x10] sm:$0x7f]
        %v478 = vld [vmem:[%s222 + $0x18] sm:$0x7f]
        %v479 = vld [vmem:[%s222 + $0x20] sm:$0x7f]
        %v480 = vld [vmem:[%s222 + $0x28] sm:$0x7f]
        %v481 = vld [vmem:[%s222 + $0x30] sm:$0x7f]
        %v482 = vld [vmem:[%s222 + $0x38] sm:$0x7f]
        %491 = vrot.lane.b32.xlu0 %v475, 48
        %v492 = vpop.permute.xlu0 %491
        %493 = vrot.lane.b32.xlu0 %v476, 48
        %v494 = vpop.permute.xlu0 %493
        %495 = vrot.lane.b32.xlu0 %v477, 48
        %v496 = vpop.permute.xlu0 %495
        %497 = vrot.lane.b32.xlu0 %v478, 48
        %v498 = vpop.permute.xlu0 %497
        %499 = vrot.lane.b32.xlu0 %v479, 48
        %v500 = vpop.permute.xlu0 %499
        %501 = vrot.lane.b32.xlu0 %v480, 48
        %v502 = vpop.permute.xlu0 %501
        %503 = vrot.lane.b32.xlu0 %v481, 48
        %v504 = vpop.permute.xlu0 %503
        %505 = vrot.lane.b32.xlu0 %v482, 48
        %v506 = vpop.permute.xlu0 %505
        %vm515 = vcmask 424320
        %516 = vst.msk [vmem:[#allocation2 + $0x1] sm:$0x7f] %vm515, %v492
        %517 = vst.msk [vmem:[#allocation2 + $0x9] sm:$0x7f] %vm515, %v494
        %518 = vst.msk [vmem:[#allocation2 + $0x11] sm:$0x7f] %vm515, %v496
        %519 = vst.msk [vmem:[#allocation2 + $0x19] sm:$0x7f] %vm515, %v498
        %520 = vst.msk [vmem:[#allocation2 + $0x21] sm:$0x7f] %vm515, %v500
        %521 = vst.msk [vmem:[#allocation2 + $0x29] sm:$0x7f] %vm515, %v502
        %522 = vst.msk [vmem:[#allocation2 + $0x31] sm:$0x7f] %vm515, %v504
        %523 = vst.msk [vmem:[#allocation2 + $0x39] sm:$0x7f] %vm515, %v506
        %v524 = vld [vmem:[%s222] sm:$0xff]
        %v525 = vld [vmem:[%s222 + $0x8] sm:$0xff]
        %v526 = vld [vmem:[%s222 + $0x10] sm:$0xff]
        %v527 = vld [vmem:[%s222 + $0x18] sm:$0xff]
        %v528 = vld [vmem:[%s222 + $0x20] sm:$0xff]
        %v529 = vld [vmem:[%s222 + $0x28] sm:$0xff]
        %v530 = vld [vmem:[%s222 + $0x30] sm:$0xff]
        %v531 = vld [vmem:[%s222 + $0x38] sm:$0xff]
        %540 = vrot.lane.b32.xlu0 %v524, 52
        %v541 = vpop.permute.xlu0 %540
        %542 = vrot.lane.b32.xlu0 %v525, 52
        %v543 = vpop.permute.xlu0 %542
        %544 = vrot.lane.b32.xlu0 %v526, 52
        %v545 = vpop.permute.xlu0 %544
        %546 = vrot.lane.b32.xlu0 %v527, 52
        %v547 = vpop.permute.xlu0 %546
        %548 = vrot.lane.b32.xlu0 %v528, 52
        %v549 = vpop.permute.xlu0 %548
        %550 = vrot.lane.b32.xlu0 %v529, 52
        %v551 = vpop.permute.xlu0 %550
        %552 = vrot.lane.b32.xlu0 %v530, 52
        %v553 = vpop.permute.xlu0 %552
        %554 = vrot.lane.b32.xlu0 %v531, 52
        %v555 = vpop.permute.xlu0 %554
        %vm564 = vcmask 458144
        %565 = vst.msk [vmem:[#allocation2] sm:$0xff] %vm564, %v541
        %566 = vst.msk [vmem:[#allocation2 + $0x8] sm:$0xff] %vm564, %v543
        %567 = vst.msk [vmem:[#allocation2 + $0x10] sm:$0xff] %vm564, %v545
        %568 = vst.msk [vmem:[#allocation2 + $0x18] sm:$0xff] %vm564, %v547
        %569 = vst.msk [vmem:[#allocation2 + $0x20] sm:$0xff] %vm564, %v549
        %570 = vst.msk [vmem:[#allocation2 + $0x28] sm:$0xff] %vm564, %v551
        %571 = vst.msk [vmem:[#allocation2 + $0x30] sm:$0xff] %vm564, %v553
        %572 = vst.msk [vmem:[#allocation2 + $0x38] sm:$0xff] %vm564, %v555
        %v573 = vld [vmem:[%s222 + $0x1] sm:$0x7f]
        %v574 = vld [vmem:[%s222 + $0x9] sm:$0x7f]
        %v575 = vld [vmem:[%s222 + $0x11] sm:$0x7f]
        %v576 = vld [vmem:[%s222 + $0x19] sm:$0x7f]
        %v577 = vld [vmem:[%s222 + $0x21] sm:$0x7f]
        %v578 = vld [vmem:[%s222 + $0x29] sm:$0x7f]
        %v579 = vld [vmem:[%s222 + $0x31] sm:$0x7f]
        %v580 = vld [vmem:[%s222 + $0x39] sm:$0x7f]
        %589 = vrot.lane.b32.xlu0 %v573, 56
        %v590 = vpop.permute.xlu0 %589
        %591 = vrot.lane.b32.xlu0 %v574, 56
        %v592 = vpop.permute.xlu0 %591
        %593 = vrot.lane.b32.xlu0 %v575, 56
        %v594 = vpop.permute.xlu0 %593
        %595 = vrot.lane.b32.xlu0 %v576, 56
        %v596 = vpop.permute.xlu0 %595
        %597 = vrot.lane.b32.xlu0 %v577, 56
        %v598 = vpop.permute.xlu0 %597
        %599 = vrot.lane.b32.xlu0 %v578, 56
        %v600 = vpop.permute.xlu0 %599
        %601 = vrot.lane.b32.xlu0 %v579, 56
        %v602 = vpop.permute.xlu0 %601
        %603 = vrot.lane.b32.xlu0 %v580, 56
        %v604 = vpop.permute.xlu0 %603
        %vm613 = vcmask 489920
        %614 = vst.msk [vmem:[#allocation2] sm:$0x7f] %vm613, %v590
        %615 = vst.msk [vmem:[#allocation2 + $0x8] sm:$0x7f] %vm613, %v592
        %616 = vst.msk [vmem:[#allocation2 + $0x10] sm:$0x7f] %vm613, %v594
        %617 = vst.msk [vmem:[#allocation2 + $0x18] sm:$0x7f] %vm613, %v596
        %618 = vst.msk [vmem:[#allocation2 + $0x20] sm:$0x7f] %vm613, %v598
        %619 = vst.msk [vmem:[#allocation2 + $0x28] sm:$0x7f] %vm613, %v600
        %620 = vst.msk [vmem:[#allocation2 + $0x30] sm:$0x7f] %vm613, %v602
        %621 = vst.msk [vmem:[#allocation2 + $0x38] sm:$0x7f] %vm613, %v604
        %s622 = scalar_lea.vmem %s222, 8
        %v623 = vld [vmem:[%s622] sm:$0x7f]
        %v624 = vld [vmem:[%s622 + $0x8] sm:$0x7f]
        %v625 = vld [vmem:[%s622 + $0x10] sm:$0x7f]
        %v626 = vld [vmem:[%s622 + $0x18] sm:$0x7f]
        %v627 = vld [vmem:[%s622 + $0x20] sm:$0x7f]
        %v628 = vld [vmem:[%s622 + $0x28] sm:$0x7f]
        %v629 = vld [vmem:[%s622 + $0x30] sm:$0x7f]
        %637 = vrot.lane.b32.xlu0 %v623, 60
        %v638 = vpop.permute.xlu0 %637
        %639 = vrot.lane.b32.xlu0 %v624, 60
        %v640 = vpop.permute.xlu0 %639
        %641 = vrot.lane.b32.xlu0 %v625, 60
        %v642 = vpop.permute.xlu0 %641
        %643 = vrot.lane.b32.xlu0 %v626, 60
        %v644 = vpop.permute.xlu0 %643
        %645 = vrot.lane.b32.xlu0 %v627, 60
        %v646 = vpop.permute.xlu0 %645
        %647 = vrot.lane.b32.xlu0 %v628, 60
        %v648 = vpop.permute.xlu0 %647
        %649 = vrot.lane.b32.xlu0 %v629, 60
        %v650 = vpop.permute.xlu0 %649
        %vm658 = vcmask 522720
        %659 = vst.msk [vmem:[#allocation2 + $0x1] sm:$0x7f] %vm658, %v638
        %660 = vst.msk [vmem:[#allocation2 + $0x9] sm:$0x7f] %vm658, %v640
        %661 = vst.msk [vmem:[#allocation2 + $0x11] sm:$0x7f] %vm658, %v642
        %662 = vst.msk [vmem:[#allocation2 + $0x19] sm:$0x7f] %vm658, %v644
        %663 = vst.msk [vmem:[#allocation2 + $0x21] sm:$0x7f] %vm658, %v646
        %664 = vst.msk [vmem:[#allocation2 + $0x29] sm:$0x7f] %vm658, %v648
        %665 = vst.msk [vmem:[#allocation2 + $0x31] sm:$0x7f] %vm658, %v650
        %v666 = vld [vmem:[%s622] sm:$0xff]
        %v667 = vld [vmem:[%s622 + $0x8] sm:$0xff]
        %v668 = vld [vmem:[%s622 + $0x10] sm:$0xff]
        %v669 = vld [vmem:[%s622 + $0x18] sm:$0xff]
        %v670 = vld [vmem:[%s622 + $0x20] sm:$0xff]
        %v671 = vld [vmem:[%s622 + $0x28] sm:$0xff]
        %v672 = vld [vmem:[%s622 + $0x30] sm:$0xff]
        %680 = vrot.lane.b32.xlu0 %v666, 64
        %v681 = vpop.permute.xlu0 %680
        %682 = vrot.lane.b32.xlu0 %v667, 64
        %v683 = vpop.permute.xlu0 %682
        %684 = vrot.lane.b32.xlu0 %v668, 64
        %v685 = vpop.permute.xlu0 %684
        %686 = vrot.lane.b32.xlu0 %v669, 64
        %v687 = vpop.permute.xlu0 %686
        %688 = vrot.lane.b32.xlu0 %v670, 64
        %v689 = vpop.permute.xlu0 %688
        %690 = vrot.lane.b32.xlu0 %v671, 64
        %v691 = vpop.permute.xlu0 %690
        %692 = vrot.lane.b32.xlu0 %v672, 64
        %v693 = vpop.permute.xlu0 %692
        %vm701 = vcmask 556544
        %702 = vst.msk [vmem:[#allocation2] sm:$0xff] %vm701, %v681
        %703 = vst.msk [vmem:[#allocation2 + $0x8] sm:$0xff] %vm701, %v683
        %704 = vst.msk [vmem:[#allocation2 + $0x10] sm:$0xff] %vm701, %v685
        %705 = vst.msk [vmem:[#allocation2 + $0x18] sm:$0xff] %vm701, %v687
        %706 = vst.msk [vmem:[#allocation2 + $0x20] sm:$0xff] %vm701, %v689
        %707 = vst.msk [vmem:[#allocation2 + $0x28] sm:$0xff] %vm701, %v691
        %708 = vst.msk [vmem:[#allocation2 + $0x30] sm:$0xff] %vm701, %v693
        %v709 = vld [vmem:[%s622 + $0x1] sm:$0x7f]
        %v710 = vld [vmem:[%s622 + $0x9] sm:$0x7f]
        %v711 = vld [vmem:[%s622 + $0x11] sm:$0x7f]
        %v712 = vld [vmem:[%s622 + $0x19] sm:$0x7f]
        %v713 = vld [vmem:[%s622 + $0x21] sm:$0x7f]
        %v714 = vld [vmem:[%s622 + $0x29] sm:$0x7f]
        %v715 = vld [vmem:[%s622 + $0x31] sm:$0x7f]
        %723 = vrot.lane.b32.xlu0 %v709, 68
        %v724 = vpop.permute.xlu0 %723
        %725 = vrot.lane.b32.xlu0 %v710, 68
        %v726 = vpop.permute.xlu0 %725
        %727 = vrot.lane.b32.xlu0 %v711, 68
        %v728 = vpop.permute.xlu0 %727
        %729 = vrot.lane.b32.xlu0 %v712, 68
        %v730 = vpop.permute.xlu0 %729
        %731 = vrot.lane.b32.xlu0 %v713, 68
        %v732 = vpop.permute.xlu0 %731
        %733 = vrot.lane.b32.xlu0 %v714, 68
        %v734 = vpop.permute.xlu0 %733
        %735 = vrot.lane.b32.xlu0 %v715, 68
        %v736 = vpop.permute.xlu0 %735
        %vm744 = vcmask 588320
        %745 = vst.msk [vmem:[#allocation2] sm:$0x7f] %vm744, %v724
        %746 = vst.msk [vmem:[#allocation2 + $0x8] sm:$0x7f] %vm744, %v726
        %747 = vst.msk [vmem:[#allocation2 + $0x10] sm:$0x7f] %vm744, %v728
        %748 = vst.msk [vmem:[#allocation2 + $0x18] sm:$0x7f] %vm744, %v730
        %749 = vst.msk [vmem:[#allocation2 + $0x20] sm:$0x7f] %vm744, %v732
        %750 = vst.msk [vmem:[#allocation2 + $0x28] sm:$0x7f] %vm744, %v734
        %751 = vst.msk [vmem:[#allocation2 + $0x30] sm:$0x7f] %vm744, %v736
        %s752 = scalar_lea.vmem %s222, 64
        %v753 = vld [vmem:[%s752] sm:$0x7f]
        %v754 = vld [vmem:[%s752 + $0x8] sm:$0x7f]
        %v755 = vld [vmem:[%s752 + $0x10] sm:$0x7f]
        %v756 = vld [vmem:[%s752 + $0x18] sm:$0x7f]
        %v757 = vld [vmem:[%s752 + $0x20] sm:$0x7f]
        %v758 = vld [vmem:[%s752 + $0x28] sm:$0x7f]
        %v759 = vld [vmem:[%s752 + $0x30] sm:$0x7f]
        %767 = vrot.lane.b32.xlu0 %v753, 72
        %v768 = vpop.permute.xlu0 %767
        %769 = vrot.lane.b32.xlu0 %v754, 72
        %v770 = vpop.permute.xlu0 %769
        %771 = vrot.lane.b32.xlu0 %v755, 72
        %v772 = vpop.permute.xlu0 %771
        %773 = vrot.lane.b32.xlu0 %v756, 72
        %v774 = vpop.permute.xlu0 %773
        %775 = vrot.lane.b32.xlu0 %v757, 72
        %v776 = vpop.permute.xlu0 %775
        %777 = vrot.lane.b32.xlu0 %v758, 72
        %v778 = vpop.permute.xlu0 %777
        %779 = vrot.lane.b32.xlu0 %v759, 72
        %v780 = vpop.permute.xlu0 %779
        %vm788 = vcmask 621120
        %789 = vst.msk [vmem:[%s380 + $0x1] sm:$0x7f] %vm788, %v768
        %790 = vst.msk [vmem:[%s380 + $0x9] sm:$0x7f] %vm788, %v770
        %791 = vst.msk [vmem:[%s380 + $0x11] sm:$0x7f] %vm788, %v772
        %792 = vst.msk [vmem:[%s380 + $0x19] sm:$0x7f] %vm788, %v774
        %793 = vst.msk [vmem:[%s380 + $0x21] sm:$0x7f] %vm788, %v776
        %794 = vst.msk [vmem:[%s380 + $0x29] sm:$0x7f] %vm788, %v778
        %795 = vst.msk [vmem:[%s380 + $0x31] sm:$0x7f] %vm788, %v780
        %v796 = vld [vmem:[%s752] sm:$0xff]
        %v797 = vld [vmem:[%s752 + $0x8] sm:$0xff]
        %v798 = vld [vmem:[%s752 + $0x10] sm:$0xff]
        %v799 = vld [vmem:[%s752 + $0x18] sm:$0xff]
        %v800 = vld [vmem:[%s752 + $0x20] sm:$0xff]
        %v801 = vld [vmem:[%s752 + $0x28] sm:$0xff]
        %v802 = vld [vmem:[%s752 + $0x30] sm:$0xff]
        %810 = vrot.lane.b32.xlu0 %v796, 76
        %v811 = vpop.permute.xlu0 %810
        %812 = vrot.lane.b32.xlu0 %v797, 76
        %v813 = vpop.permute.xlu0 %812
        %814 = vrot.lane.b32.xlu0 %v798, 76
        %v815 = vpop.permute.xlu0 %814
        %816 = vrot.lane.b32.xlu0 %v799, 76
        %v817 = vpop.permute.xlu0 %816
        %818 = vrot.lane.b32.xlu0 %v800, 76
        %v819 = vpop.permute.xlu0 %818
        %820 = vrot.lane.b32.xlu0 %v801, 76
        %v821 = vpop.permute.xlu0 %820
        %822 = vrot.lane.b32.xlu0 %v802, 76
        %v823 = vpop.permute.xlu0 %822
        %vm831 = vcmask 654944
        %832 = vst.msk [vmem:[%s380] sm:$0xff] %vm831, %v811
        %833 = vst.msk [vmem:[%s380 + $0x8] sm:$0xff] %vm831, %v813
        %834 = vst.msk [vmem:[%s380 + $0x10] sm:$0xff] %vm831, %v815
        %835 = vst.msk [vmem:[%s380 + $0x18] sm:$0xff] %vm831, %v817
        %836 = vst.msk [vmem:[%s380 + $0x20] sm:$0xff] %vm831, %v819
        %837 = vst.msk [vmem:[%s380 + $0x28] sm:$0xff] %vm831, %v821
        %838 = vst.msk [vmem:[%s380 + $0x30] sm:$0xff] %vm831, %v823
        %v839 = vld [vmem:[%s752 + $0x1] sm:$0x7f]
        %v840 = vld [vmem:[%s752 + $0x9] sm:$0x7f]
        %v841 = vld [vmem:[%s752 + $0x11] sm:$0x7f]
        %v842 = vld [vmem:[%s752 + $0x19] sm:$0x7f]
        %v843 = vld [vmem:[%s752 + $0x21] sm:$0x7f]
        %v844 = vld [vmem:[%s752 + $0x29] sm:$0x7f]
        %v845 = vld [vmem:[%s752 + $0x31] sm:$0x7f]
        %853 = vrot.lane.b32.xlu0 %v839, 80
        %v854 = vpop.permute.xlu0 %853
        %855 = vrot.lane.b32.xlu0 %v840, 80
        %v856 = vpop.permute.xlu0 %855
        %857 = vrot.lane.b32.xlu0 %v841, 80
        %v858 = vpop.permute.xlu0 %857
        %859 = vrot.lane.b32.xlu0 %v842, 80
        %v860 = vpop.permute.xlu0 %859
        %861 = vrot.lane.b32.xlu0 %v843, 80
        %v862 = vpop.permute.xlu0 %861
        %863 = vrot.lane.b32.xlu0 %v844, 80
        %v864 = vpop.permute.xlu0 %863
        %865 = vrot.lane.b32.xlu0 %v845, 80
        %v866 = vpop.permute.xlu0 %865
        %vm874 = vcmask 686720
        %875 = vst.msk [vmem:[%s380] sm:$0x7f] %vm874, %v854
        %876 = vst.msk [vmem:[%s380 + $0x8] sm:$0x7f] %vm874, %v856
        %877 = vst.msk [vmem:[%s380 + $0x10] sm:$0x7f] %vm874, %v858
        %878 = vst.msk [vmem:[%s380 + $0x18] sm:$0x7f] %vm874, %v860
        %879 = vst.msk [vmem:[%s380 + $0x20] sm:$0x7f] %vm874, %v862
        %880 = vst.msk [vmem:[%s380 + $0x28] sm:$0x7f] %vm874, %v864
        %881 = vst.msk [vmem:[%s380 + $0x30] sm:$0x7f] %vm874, %v866
        %v882 = vld [vmem:[%s752] sm:$0x7f]
        %v883 = vld [vmem:[%s752 + $0x8] sm:$0x7f]
        %v884 = vld [vmem:[%s752 + $0x10] sm:$0x7f]
        %v885 = vld [vmem:[%s752 + $0x18] sm:$0x7f]
        %v886 = vld [vmem:[%s752 + $0x20] sm:$0x7f]
        %v887 = vld [vmem:[%s752 + $0x28] sm:$0x7f]
        %v888 = vld [vmem:[%s752 + $0x30] sm:$0x7f]
        %v889 = vld [vmem:[%s752 + $0x38] sm:$0x7f]
        %898 = vrot.lane.b32.xlu0 %v882, 84
        %v899 = vpop.permute.xlu0 %898
        %900 = vrot.lane.b32.xlu0 %v883, 84
        %v901 = vpop.permute.xlu0 %900
        %902 = vrot.lane.b32.xlu0 %v884, 84
        %v903 = vpop.permute.xlu0 %902
        %904 = vrot.lane.b32.xlu0 %v885, 84
        %v905 = vpop.permute.xlu0 %904
        %906 = vrot.lane.b32.xlu0 %v886, 84
        %v907 = vpop.permute.xlu0 %906
        %908 = vrot.lane.b32.xlu0 %v887, 84
        %v909 = vpop.permute.xlu0 %908
        %910 = vrot.lane.b32.xlu0 %v888, 84
        %v911 = vpop.permute.xlu0 %910
        %912 = vrot.lane.b32.xlu0 %v889, 84
        %v913 = vpop.permute.xlu0 %912
        %vm922 = vcmask 719520
        %923 = vst.msk [vmem:[#allocation2 + $0x1] sm:$0x7f] %vm922, %v899
        %924 = vst.msk [vmem:[#allocation2 + $0x9] sm:$0x7f] %vm922, %v901
        %925 = vst.msk [vmem:[#allocation2 + $0x11] sm:$0x7f] %vm922, %v903
        %926 = vst.msk [vmem:[#allocation2 + $0x19] sm:$0x7f] %vm922, %v905
        %927 = vst.msk [vmem:[#allocation2 + $0x21] sm:$0x7f] %vm922, %v907
        %928 = vst.msk [vmem:[#allocation2 + $0x29] sm:$0x7f] %vm922, %v909
        %929 = vst.msk [vmem:[#allocation2 + $0x31] sm:$0x7f] %vm922, %v911
        %930 = vst.msk [vmem:[#allocation2 + $0x39] sm:$0x7f] %vm922, %v913
        %v931 = vld [vmem:[%s752] sm:$0xff]
        %v932 = vld [vmem:[%s752 + $0x8] sm:$0xff]
        %v933 = vld [vmem:[%s752 + $0x10] sm:$0xff]
        %v934 = vld [vmem:[%s752 + $0x18] sm:$0xff]
        %v935 = vld [vmem:[%s752 + $0x20] sm:$0xff]
        %v936 = vld [vmem:[%s752 + $0x28] sm:$0xff]
        %v937 = vld [vmem:[%s752 + $0x30] sm:$0xff]
        %v938 = vld [vmem:[%s752 + $0x38] sm:$0xff]
        %947 = vrot.lane.b32.xlu0 %v931, 88
        %v948 = vpop.permute.xlu0 %947
        %949 = vrot.lane.b32.xlu0 %v932, 88
        %v950 = vpop.permute.xlu0 %949
        %951 = vrot.lane.b32.xlu0 %v933, 88
        %v952 = vpop.permute.xlu0 %951
        %953 = vrot.lane.b32.xlu0 %v934, 88
        %v954 = vpop.permute.xlu0 %953
        %955 = vrot.lane.b32.xlu0 %v935, 88
        %v956 = vpop.permute.xlu0 %955
        %957 = vrot.lane.b32.xlu0 %v936, 88
        %v958 = vpop.permute.xlu0 %957
        %959 = vrot.lane.b32.xlu0 %v937, 88
        %v960 = vpop.permute.xlu0 %959
        %961 = vrot.lane.b32.xlu0 %v938, 88
        %v962 = vpop.permute.xlu0 %961
        %vm971 = vcmask 753344
        %972 = vst.msk [vmem:[#allocation2] sm:$0xff] %vm971, %v948
        %973 = vst.msk [vmem:[#allocation2 + $0x8] sm:$0xff] %vm971, %v950
        %974 = vst.msk [vmem:[#allocation2 + $0x10] sm:$0xff] %vm971, %v952
        %975 = vst.msk [vmem:[#allocation2 + $0x18] sm:$0xff] %vm971, %v954
        %976 = vst.msk [vmem:[#allocation2 + $0x20] sm:$0xff] %vm971, %v956
        %977 = vst.msk [vmem:[#allocation2 + $0x28] sm:$0xff] %vm971, %v958
        %978 = vst.msk [vmem:[#allocation2 + $0x30] sm:$0xff] %vm971, %v960
        %979 = vst.msk [vmem:[#allocation2 + $0x38] sm:$0xff] %vm971, %v962
        %v980 = vld [vmem:[%s752 + $0x1] sm:$0x7f]
        %v981 = vld [vmem:[%s752 + $0x9] sm:$0x7f]
        %v982 = vld [vmem:[%s752 + $0x11] sm:$0x7f]
        %v983 = vld [vmem:[%s752 + $0x19] sm:$0x7f]
        %v984 = vld [vmem:[%s752 + $0x21] sm:$0x7f]
        %v985 = vld [vmem:[%s752 + $0x29] sm:$0x7f]
        %v986 = vld [vmem:[%s752 + $0x31] sm:$0x7f]
        %v987 = vld [vmem:[%s752 + $0x39] sm:$0x7f]
        %996 = vrot.lane.b32.xlu0 %v980, 92
        %v997 = vpop.permute.xlu0 %996
        %998 = vrot.lane.b32.xlu0 %v981, 92
        %v999 = vpop.permute.xlu0 %998
        %1000 = vrot.lane.b32.xlu0 %v982, 92
        %v1001 = vpop.permute.xlu0 %1000
        %1002 = vrot.lane.b32.xlu0 %v983, 92
        %v1003 = vpop.permute.xlu0 %1002
        %1004 = vrot.lane.b32.xlu0 %v984, 92
        %v1005 = vpop.permute.xlu0 %1004
        %1006 = vrot.lane.b32.xlu0 %v985, 92
        %v1007 = vpop.permute.xlu0 %1006
        %1008 = vrot.lane.b32.xlu0 %v986, 92
        %v1009 = vpop.permute.xlu0 %1008
        %1010 = vrot.lane.b32.xlu0 %v987, 92
        %v1011 = vpop.permute.xlu0 %1010
        %vm1020 = vcmask 785120
        %1021 = vst.msk [vmem:[#allocation2] sm:$0x7f] %vm1020, %v997
        %1022 = vst.msk [vmem:[#allocation2 + $0x8] sm:$0x7f] %vm1020, %v999
        %1023 = vst.msk [vmem:[#allocation2 + $0x10] sm:$0x7f] %vm1020, %v1001
        %1024 = vst.msk [vmem:[#allocation2 + $0x18] sm:$0x7f] %vm1020, %v1003
        %1025 = vst.msk [vmem:[#allocation2 + $0x20] sm:$0x7f] %vm1020, %v1005
        %1026 = vst.msk [vmem:[#allocation2 + $0x28] sm:$0x7f] %vm1020, %v1007
        %1027 = vst.msk [vmem:[#allocation2 + $0x30] sm:$0x7f] %vm1020, %v1009
        %1028 = vst.msk [vmem:[#allocation2 + $0x38] sm:$0x7f] %vm1020, %v1011
        %s1029 = scalar_lea.vmem %s222, 72
        %v1030 = vld [vmem:[%s1029] sm:$0x7f]
        %v1031 = vld [vmem:[%s1029 + $0x8] sm:$0x7f]
        %v1032 = vld [vmem:[%s1029 + $0x10] sm:$0x7f]
        %v1033 = vld [vmem:[%s1029 + $0x18] sm:$0x7f]
        %v1034 = vld [vmem:[%s1029 + $0x20] sm:$0x7f]
        %v1035 = vld [vmem:[%s1029 + $0x28] sm:$0x7f]
        %v1036 = vld [vmem:[%s1029 + $0x30] sm:$0x7f]
        %1044 = vrot.lane.b32.xlu0 %v1030, 96
        %v1045 = vpop.permute.xlu0 %1044
        %1046 = vrot.lane.b32.xlu0 %v1031, 96
        %v1047 = vpop.permute.xlu0 %1046
        %1048 = vrot.lane.b32.xlu0 %v1032, 96
        %v1049 = vpop.permute.xlu0 %1048
        %1050 = vrot.lane.b32.xlu0 %v1033, 96
        %v1051 = vpop.permute.xlu0 %1050
        %1052 = vrot.lane.b32.xlu0 %v1034, 96
        %v1053 = vpop.permute.xlu0 %1052
        %1054 = vrot.lane.b32.xlu0 %v1035, 96
        %v1055 = vpop.permute.xlu0 %1054
        %1056 = vrot.lane.b32.xlu0 %v1036, 96
        %v1057 = vpop.permute.xlu0 %1056
        %vm1065 = vcmask 817920
        %1066 = vst.msk [vmem:[#allocation2 + $0x1] sm:$0x7f] %vm1065, %v1045
        %1067 = vst.msk [vmem:[#allocation2 + $0x9] sm:$0x7f] %vm1065, %v1047
        %1068 = vst.msk [vmem:[#allocation2 + $0x11] sm:$0x7f] %vm1065, %v1049
        %1069 = vst.msk [vmem:[#allocation2 + $0x19] sm:$0x7f] %vm1065, %v1051
        %1070 = vst.msk [vmem:[#allocation2 + $0x21] sm:$0x7f] %vm1065, %v1053
        %1071 = vst.msk [vmem:[#allocation2 + $0x29] sm:$0x7f] %vm1065, %v1055
        %1072 = vst.msk [vmem:[#allocation2 + $0x31] sm:$0x7f] %vm1065, %v1057
        %v1073 = vld [vmem:[%s1029] sm:$0xff]
        %v1074 = vld [vmem:[%s1029 + $0x8] sm:$0xff]
        %v1075 = vld [vmem:[%s1029 + $0x10] sm:$0xff]
        %v1076 = vld [vmem:[%s1029 + $0x18] sm:$0xff]
        %v1077 = vld [vmem:[%s1029 + $0x20] sm:$0xff]
        %v1078 = vld [vmem:[%s1029 + $0x28] sm:$0xff]
        %v1079 = vld [vmem:[%s1029 + $0x30] sm:$0xff]
        %1087 = vrot.lane.b32.xlu0 %v1073, 100
        %v1088 = vpop.permute.xlu0 %1087
        %1089 = vrot.lane.b32.xlu0 %v1074, 100
        %v1090 = vpop.permute.xlu0 %1089
        %1091 = vrot.lane.b32.xlu0 %v1075, 100
        %v1092 = vpop.permute.xlu0 %1091
        %1093 = vrot.lane.b32.xlu0 %v1076, 100
        %v1094 = vpop.permute.xlu0 %1093
        %1095 = vrot.lane.b32.xlu0 %v1077, 100
        %v1096 = vpop.permute.xlu0 %1095
        %1097 = vrot.lane.b32.xlu0 %v1078, 100
        %v1098 = vpop.permute.xlu0 %1097
        %1099 = vrot.lane.b32.xlu0 %v1079, 100
        %v1100 = vpop.permute.xlu0 %1099
        %vm1108 = vcmask 851744
        %1109 = vst.msk [vmem:[#allocation2] sm:$0xff] %vm1108, %v1088
        %1110 = vst.msk [vmem:[#allocation2 + $0x8] sm:$0xff] %vm1108, %v1090
        %1111 = vst.msk [vmem:[#allocation2 + $0x10] sm:$0xff] %vm1108, %v1092
        %1112 = vst.msk [vmem:[#allocation2 + $0x18] sm:$0xff] %vm1108, %v1094
        %1113 = vst.msk [vmem:[#allocation2 + $0x20] sm:$0xff] %vm1108, %v1096
        %1114 = vst.msk [vmem:[#allocation2 + $0x28] sm:$0xff] %vm1108, %v1098
        %1115 = vst.msk [vmem:[#allocation2 + $0x30] sm:$0xff] %vm1108, %v1100
        %v1116 = vld [vmem:[%s1029 + $0x1] sm:$0x7f]
        %v1117 = vld [vmem:[%s1029 + $0x9] sm:$0x7f]
        %v1118 = vld [vmem:[%s1029 + $0x11] sm:$0x7f]
        %v1119 = vld [vmem:[%s1029 + $0x19] sm:$0x7f]
        %v1120 = vld [vmem:[%s1029 + $0x21] sm:$0x7f]
        %v1121 = vld [vmem:[%s1029 + $0x29] sm:$0x7f]
        %v1122 = vld [vmem:[%s1029 + $0x31] sm:$0x7f]
        %1130 = vrot.lane.b32.xlu0 %v1116, 104
        %v1131 = vpop.permute.xlu0 %1130
        %1132 = vrot.lane.b32.xlu0 %v1117, 104
        %v1133 = vpop.permute.xlu0 %1132
        %1134 = vrot.lane.b32.xlu0 %v1118, 104
        %v1135 = vpop.permute.xlu0 %1134
        %1136 = vrot.lane.b32.xlu0 %v1119, 104
        %v1137 = vpop.permute.xlu0 %1136
        %1138 = vrot.lane.b32.xlu0 %v1120, 104
        %v1139 = vpop.permute.xlu0 %1138
        %1140 = vrot.lane.b32.xlu0 %v1121, 104
        %v1141 = vpop.permute.xlu0 %1140
        %1142 = vrot.lane.b32.xlu0 %v1122, 104
        %v1143 = vpop.permute.xlu0 %1142
        %vm1151 = vcmask 883520
        %1152 = vst.msk [vmem:[#allocation2] sm:$0x7f] %vm1151, %v1131
        %1153 = vst.msk [vmem:[#allocation2 + $0x8] sm:$0x7f] %vm1151, %v1133
        %1154 = vst.msk [vmem:[#allocation2 + $0x10] sm:$0x7f] %vm1151, %v1135
        %1155 = vst.msk [vmem:[#allocation2 + $0x18] sm:$0x7f] %vm1151, %v1137
        %1156 = vst.msk [vmem:[#allocation2 + $0x20] sm:$0x7f] %vm1151, %v1139
        %1157 = vst.msk [vmem:[#allocation2 + $0x28] sm:$0x7f] %vm1151, %v1141
        %1158 = vst.msk [vmem:[#allocation2 + $0x30] sm:$0x7f] %vm1151, %v1143
        %v1159 = vld [vmem:[#allocation2] sm:$0xff]
        %v1160 = vld [vmem:[#allocation2 + $0x8] sm:$0xff]
        %v1161 = vld [vmem:[#allocation2 + $0x10] sm:$0xff]
        %v1162 = vld [vmem:[#allocation2 + $0x18] sm:$0xff]
        %v1163 = vld [vmem:[#allocation2 + $0x20] sm:$0xff]
        %v1164 = vld [vmem:[#allocation2 + $0x28] sm:$0xff]
        %v1165 = vld [vmem:[#allocation2 + $0x30] sm:$0xff]
        %v1166 = vld [vmem:[#allocation2 + $0x38] sm:$0xff]
        %v1167 = vld [vmem:[%s1] sm:$0xff]
        %v1168 = vld [vmem:[%s1 + $0x8] sm:$0xff]
        %v1169 = vld [vmem:[%s1 + $0x10] sm:$0xff]
        %v1170 = vld [vmem:[%s1 + $0x18] sm:$0xff]
        %v1171 = vld [vmem:[%s1 + $0x20] sm:$0xff]
        %v1172 = vld [vmem:[%s1 + $0x28] sm:$0xff]
        %v1173 = vld [vmem:[%s1 + $0x30] sm:$0xff]
        %v1174 = vld [vmem:[%s1 + $0x38] sm:$0xff]
        %v1175 = vld [vmem:[%s1 + $0x40] sm:$0xff]
        %v1176 = vld [vmem:[%s1 + $0x48] sm:$0xff]
        %v1177 = vld [vmem:[%s1 + $0x50] sm:$0xff]
        %v1178 = vld [vmem:[%s1 + $0x58] sm:$0xff]
        %v1179 = vld [vmem:[%s1 + $0x60] sm:$0xff]
        %v1180 = vld [vmem:[%s1 + $0x68] sm:$0xf]
        %v1182 = vsel %vm223, %v1159, 0
        %v1185 = vsel %vm223, %v1160, 0
        %v1188 = vsel %vm223, %v1161, 0
        %v1191 = vsel %vm223, %v1162, 0
        %v1194 = vsel %vm223, %v1163, 0
        %v1197 = vsel %vm223, %v1164, 0
        %v1200 = vsel %vm223, %v1165, 0
        %v1203 = vsel %vm223, %v1166, 0
        %vm1205 = vcmask 1043456
        %v1207 = vsel %vm1205, %v1180, 0
        %1209 = vmatprep.subr.mxu0 0.0
        %1210 = vmatpush1.msra.mxu0 %v1167
        %1211 = vmatprep.subr.mxu0 0.0
        %1212 = vmatpush1.msra.mxu0 %v1168
        %1213 = vmatprep.subr.mxu0 0.0
        %1214 = vmatpush1.msra.mxu0 %v1169
        %1215 = vmatprep.subr.mxu0 0.0
        %1216 = vmatpush1.msra.mxu0 %v1170
        %1217 = vmatprep.subr.mxu0 0.0
        %1218 = vmatpush1.msra.mxu0 %v1171
        %1219 = vmatprep.subr.mxu0 0.0
        %1220 = vmatpush1.msra.mxu0 %v1172
        %1221 = vmatprep.subr.mxu0 0.0
        %1222 = vmatpush1.msra.mxu0 %v1173
        %1223 = vmatprep.subr.mxu0 0.0
        %1224 = vmatpush1.msra.mxu0 %v1174
        %1225 = vmatprep.subr.mxu0 0.0
        %1226 = vmatpush1.msra.mxu0 %v1175
        %1227 = vmatprep.subr.mxu0 0.0
        %1228 = vmatpush1.msra.mxu0 %v1176
        %1229 = vmatprep.subr.mxu0 0.0
        %1230 = vmatpush1.msra.mxu0 %v1177
        %1231 = vmatprep.subr.mxu0 0.0
        %1232 = vmatpush1.msra.mxu0 %v1178
        %1233 = vmatprep.subr.mxu0 0.0
        %1234 = vmatpush1.msra.mxu0 %v1179
        %1235 = vmatprep.subr.mxu0 0.0
        %1236 = vmatpush1.msra.mxu0 %v1207
        %1237 = vmatprep.subr.mxu0 0.0
        %1238 = vmatpush1.msra.mxu0 0.0
        %1239 = vmatprep.subr.mxu0 0.0
        %1240 = vmatpush1.msra.mxu0 0.0
        %1241 = vmatprep.subr.mxu0 0.0
        %1242 = vmatpush1.msra.mxu0 0.0
        %1243 = vmatprep.subr.mxu0 0.0
        %1244 = vmatpush1.msra.mxu0 0.0
        %1245 = vmatprep.subr.mxu0 0.0
        %1246 = vmatpush1.msra.mxu0 0.0
        %1247 = vmatprep.subr.mxu0 0.0
        %1248 = vmatpush1.msra.mxu0 0.0
        %1249 = vmatprep.subr.mxu0 0.0
        %1250 = vmatpush1.msra.mxu0 0.0
        %1251 = vmatprep.subr.mxu0 0.0
        %1252 = vmatpush1.msra.mxu0 0.0
        %1253 = vmatprep.subr.mxu0 0.0
        %1254 = vmatpush1.msra.mxu0 0.0
        %1255 = vmatprep.subr.mxu0 0.0
        %1256 = vmatpush1.msra.mxu0 0.0
        %1257 = vmatprep.subr.mxu0 0.0
        %1258 = vmatpush1.msra.mxu0 0.0
        %1259 = vmatprep.subr.mxu0 0.0
        %1260 = vmatpush1.msra.mxu0 0.0
        %1261 = vmatprep.subr.mxu0 0.0
        %1262 = vmatpush1.msra.mxu0 0.0
        %1263 = vmatprep.subr.mxu0 0.0
        %1264 = vmatpush1.msra.mxu0 0.0
        %1265 = vmatprep.subr.mxu0 0.0
        %1266 = vmatpush1.msra.mxu0 0.0
        %1267 = vmatprep.subr.mxu0 0.0
        %1268 = vmatpush1.msra.mxu0 0.0
        %1269 = vmatprep.subr.mxu0 0.0
        %1270 = vmatpush1.msra.mxu0 0.0
        %1271 = vmatprep.subr.mxu0 0.0
        %1272 = vmatpush1.msra.mxu0 0.0
        %1273 = vmatprep.mubr.f32.mxu0 0.0
        %1274 = vmatmul.mubr.f32.gmra.mrb[0].mxu0 %v1182
        %v1275 = vpop.f32.mrb[0].mxu0
        %v1276 = vadd.f32 %v336, %v1275
        %v1277 = vpop.f32.mrb[0].mxu0
        %1278 = vmatprep.mubr.f32.mxu0 0.0
        %1279 = vmatmul.mubr.f32.gmra.mrb[0].mxu0 %v1185
        %v1280 = vpop.f32.mrb[0].mxu0
        %v1281 = vadd.f32 %v336, %v1280
        %v1282 = vpop.f32.mrb[0].mxu0
        %1283 = vmatprep.mubr.f32.mxu0 0.0
        %1284 = vmatmul.mubr.f32.gmra.mrb[0].mxu0 %v1188
        %v1285 = vpop.f32.mrb[0].mxu0
        %v1286 = vadd.f32 %v336, %v1285
        %v1287 = vpop.f32.mrb[0].mxu0
        %1288 = vmatprep.mubr.f32.mxu0 0.0
        %1289 = vmatmul.mubr.f32.gmra.mrb[0].mxu0 %v1191
        %v1290 = vpop.f32.mrb[0].mxu0
        %v1291 = vadd.f32 %v336, %v1290
        %v1292 = vpop.f32.mrb[0].mxu0
        %1293 = vmatprep.mubr.f32.mxu0 0.0
        %1294 = vmatmul.mubr.f32.gmra.mrb[0].mxu0 %v1194
        %v1295 = vpop.f32.mrb[0].mxu0
        %v1296 = vadd.f32 %v336, %v1295
        %v1297 = vpop.f32.mrb[0].mxu0
        %1298 = vmatprep.mubr.f32.mxu0 0.0
        %1299 = vmatmul.mubr.f32.gmra.mrb[0].mxu0 %v1197
        %v1300 = vpop.f32.mrb[0].mxu0
        %v1301 = vadd.f32 %v336, %v1300
        %v1302 = vpop.f32.mrb[0].mxu0
        %1303 = vmatprep.mubr.f32.mxu0 0.0
        %1304 = vmatmul.mubr.f32.gmra.mrb[0].mxu0 %v1200
        %v1305 = vpop.f32.mrb[0].mxu0
        %v1306 = vadd.f32 %v336, %v1305
        %v1307 = vpop.f32.mrb[0].mxu0
        %1308 = vmatprep.mubr.f32.mxu0 0.0
        %1309 = vmatmul.mubr.f32.gmra.mrb[0].mxu0 %v1203
        %v1310 = vpop.f32.mrb[0].mxu0
        %v1311 = vadd.f32 %v336, %v1310
        %v1312 = vpop.f32.mrb[0].mxu0
        %1313 = vdwg.mxu0
        %v1314 = vmax.f32 %v1276, 0.0
        %v1315 = vmax.f32 %v1281, 0.0
        %v1316 = vmax.f32 %v1286, 0.0
        %v1317 = vmax.f32 %v1291, 0.0
        %v1318 = vmax.f32 %v1296, 0.0
        %v1319 = vmax.f32 %v1301, 0.0
        %v1320 = vmax.f32 %v1306, 0.0
        %v1321 = vmax.f32 %v1311, 0.0
        %s1322 = scalar_lea.vmem [#allocation4], 264
        %1323 = vst.msk [vmem:[%s1322 + $0x8] sm:$0xff] %vm232, %v1314
        %1324 = vst.msk [vmem:[%s1322 + $0x20] sm:$0xff] %vm232, %v1315
        %1325 = vst.msk [vmem:[%s1322 + $0x38] sm:$0xff] %vm232, %v1316
        %1326 = vst.msk [vmem:[%s1322 + $0x50] sm:$0xff] %vm232, %v1317
        %1327 = vst.msk [vmem:[%s1322 + $0x68] sm:$0xff] %vm232, %v1318
        %1328 = vst.msk [vmem:[%s1322 + $0x80] sm:$0xff] %vm232, %v1319
        %1329 = vst.msk [vmem:[%s1322 + $0x98] sm:$0xff] %vm232, %v1320
        %1330 = vst.msk [vmem:[%s1322 + $0xb0] sm:$0xff] %vm232, %v1321
        loop: start=0, step=1, limit=8
        $region41: #{basic_block_forward.1} parent=39 // loop_pre_header
          _
        $region42: #{basic_block_forward.1} parent=39 // loop_header
          %s1332 = sphi 0, %s1336
          %p1333 = scmp.ge.s32.totalorder %s1332, 8
        $region43: #{basic_block_forward.1} parent=39 // loop_header_branch
          %1335 = sbr.rel (%p1333) target = $region47
        $region44: #{basic_block_forward.1} parent=39 // loop_body
          %s1337 = sadd.s32 %s1332, 1
          %p1338 = scmp.lt.s32.totalorder %s1337, 8
          // Predicated region
          $region48: #{basic_block_forward.1} parent=44 // pred_check
            %p1339 = pneg %p1338
          $region49: #{basic_block_forward.1} parent=44 // pred_check_branch
            %1341 = sbr.rel (%p1339) target = $region51
          $region50: #{basic_block_forward.1} parent=44 // pred_region
            %s1342 = smul.u32 %s1332, 64
            %s1343 = scalar_lea.vmem %s222, %s1342
            %v1344 = vld [vmem:[%s1343] sm:$0x7f]
            %v1345 = vld [vmem:[%s1343 + $0x8] sm:$0x7f]
            %v1346 = vld [vmem:[%s1343 + $0x10] sm:$0x7f]
            %v1347 = vld [vmem:[%s1343 + $0x18] sm:$0x7f]
            %v1348 = vld [vmem:[%s1343 + $0x20] sm:$0x7f]
            %v1349 = vld [vmem:[%s1343 + $0x28] sm:$0x7f]
            %v1350 = vld [vmem:[%s1343 + $0x30] sm:$0x7f]
            %vm1351 = vcmask 30720
            %1352 = vst.msk [vmem:[%s380 + $0x1] sm:$0x7f] %vm1351, %v1344
            %1353 = vst.msk [vmem:[%s380 + $0x9] sm:$0x7f] %vm1351, %v1345
            %1354 = vst.msk [vmem:[%s380 + $0x11] sm:$0x7f] %vm1351, %v1346
            %1355 = vst.msk [vmem:[%s380 + $0x19] sm:$0x7f] %vm1351, %v1347
            %1356 = vst.msk [vmem:[%s380 + $0x21] sm:$0x7f] %vm1351, %v1348
            %1357 = vst.msk [vmem:[%s380 + $0x29] sm:$0x7f] %vm1351, %v1349
            %1358 = vst.msk [vmem:[%s380 + $0x31] sm:$0x7f] %vm1351, %v1350
            %v1359 = vld [vmem:[%s1343] sm:$0xff]
            %v1360 = vld [vmem:[%s1343 + $0x8] sm:$0xff]
            %v1361 = vld [vmem:[%s1343 + $0x10] sm:$0xff]
            %v1362 = vld [vmem:[%s1343 + $0x18] sm:$0xff]
            %v1363 = vld [vmem:[%s1343 + $0x20] sm:$0xff]
            %v1364 = vld [vmem:[%s1343 + $0x28] sm:$0xff]
            %v1365 = vld [vmem:[%s1343 + $0x30] sm:$0xff]
            %1373 = vrot.lane.b32.xlu0 %v1359, 4
            %v1374 = vpop.permute.xlu0 %1373
            %1375 = vrot.lane.b32.xlu0 %v1360, 4
            %v1376 = vpop.permute.xlu0 %1375
            %1377 = vrot.lane.b32.xlu0 %v1361, 4
            %v1378 = vpop.permute.xlu0 %1377
            %1379 = vrot.lane.b32.xlu0 %v1362, 4
            %v1380 = vpop.permute.xlu0 %1379
            %1381 = vrot.lane.b32.xlu0 %v1363, 4
            %v1382 = vpop.permute.xlu0 %1381
            %1383 = vrot.lane.b32.xlu0 %v1364, 4
            %v1384 = vpop.permute.xlu0 %1383
            %1385 = vrot.lane.b32.xlu0 %v1365, 4
            %v1386 = vpop.permute.xlu0 %1385
            %vm1394 = vcmask 64544
            %1395 = vst.msk [vmem:[%s380] sm:$0xff] %vm1394, %v1374
            %1396 = vst.msk [vmem:[%s380 + $0x8] sm:$0xff] %vm1394, %v1376
            %1397 = vst.msk [vmem:[%s380 + $0x10] sm:$0xff] %vm1394, %v1378
            %1398 = vst.msk [vmem:[%s380 + $0x18] sm:$0xff] %vm1394, %v1380
            %1399 = vst.msk [vmem:[%s380 + $0x20] sm:$0xff] %vm1394, %v1382
            %1400 = vst.msk [vmem:[%s380 + $0x28] sm:$0xff] %vm1394, %v1384
            %1401 = vst.msk [vmem:[%s380 + $0x30] sm:$0xff] %vm1394, %v1386
            %v1402 = vld [vmem:[%s1343 + $0x1] sm:$0x7f]
            %v1403 = vld [vmem:[%s1343 + $0x9] sm:$0x7f]
            %v1404 = vld [vmem:[%s1343 + $0x11] sm:$0x7f]
            %v1405 = vld [vmem:[%s1343 + $0x19] sm:$0x7f]
            %v1406 = vld [vmem:[%s1343 + $0x21] sm:$0x7f]
            %v1407 = vld [vmem:[%s1343 + $0x29] sm:$0x7f]
            %v1408 = vld [vmem:[%s1343 + $0x31] sm:$0x7f]
            %1416 = vrot.lane.b32.xlu0 %v1402, 8
            %v1417 = vpop.permute.xlu0 %1416
            %1418 = vrot.lane.b32.xlu0 %v1403, 8
            %v1419 = vpop.permute.xlu0 %1418
            %1420 = vrot.lane.b32.xlu0 %v1404, 8
            %v1421 = vpop.permute.xlu0 %1420
            %1422 = vrot.lane.b32.xlu0 %v1405, 8
            %v1423 = vpop.permute.xlu0 %1422
            %1424 = vrot.lane.b32.xlu0 %v1406, 8
            %v1425 = vpop.permute.xlu0 %1424
            %1426 = vrot.lane.b32.xlu0 %v1407, 8
            %v1427 = vpop.permute.xlu0 %1426
            %1428 = vrot.lane.b32.xlu0 %v1408, 8
            %v1429 = vpop.permute.xlu0 %1428
            %vm1437 = vcmask 96320
            %1438 = vst.msk [vmem:[%s380] sm:$0x7f] %vm1437, %v1417
            %1439 = vst.msk [vmem:[%s380 + $0x8] sm:$0x7f] %vm1437, %v1419
            %1440 = vst.msk [vmem:[%s380 + $0x10] sm:$0x7f] %vm1437, %v1421
            %1441 = vst.msk [vmem:[%s380 + $0x18] sm:$0x7f] %vm1437, %v1423
            %1442 = vst.msk [vmem:[%s380 + $0x20] sm:$0x7f] %vm1437, %v1425
            %1443 = vst.msk [vmem:[%s380 + $0x28] sm:$0x7f] %vm1437, %v1427
            %1444 = vst.msk [vmem:[%s380 + $0x30] sm:$0x7f] %vm1437, %v1429
            %v1445 = vld [vmem:[%s1343] sm:$0x7f]
            %v1446 = vld [vmem:[%s1343 + $0x8] sm:$0x7f]
            %v1447 = vld [vmem:[%s1343 + $0x10] sm:$0x7f]
            %v1448 = vld [vmem:[%s1343 + $0x18] sm:$0x7f]
            %v1449 = vld [vmem:[%s1343 + $0x20] sm:$0x7f]
            %v1450 = vld [vmem:[%s1343 + $0x28] sm:$0x7f]
            %v1451 = vld [vmem:[%s1343 + $0x30] sm:$0x7f]
            %v1452 = vld [vmem:[%s1343 + $0x38] sm:$0x7f]
            %1461 = vrot.lane.b32.xlu0 %v1445, 12
            %v1462 = vpop.permute.xlu0 %1461
            %1463 = vrot.lane.b32.xlu0 %v1446, 12
            %v1464 = vpop.permute.xlu0 %1463
            %1465 = vrot.lane.b32.xlu0 %v1447, 12
            %v1466 = vpop.permute.xlu0 %1465
            %1467 = vrot.lane.b32.xlu0 %v1448, 12
            %v1468 = vpop.permute.xlu0 %1467
            %1469 = vrot.lane.b32.xlu0 %v1449, 12
            %v1470 = vpop.permute.xlu0 %1469
            %1471 = vrot.lane.b32.xlu0 %v1450, 12
            %v1472 = vpop.permute.xlu0 %1471
            %1473 = vrot.lane.b32.xlu0 %v1451, 12
            %v1474 = vpop.permute.xlu0 %1473
            %1475 = vrot.lane.b32.xlu0 %v1452, 12
            %v1476 = vpop.permute.xlu0 %1475
            %vm1485 = vcmask 129120
            %1486 = vst.msk [vmem:[#allocation2 + $0x1] sm:$0x7f] %vm1485, %v1462
            %1487 = vst.msk [vmem:[#allocation2 + $0x9] sm:$0x7f] %vm1485, %v1464
            %1488 = vst.msk [vmem:[#allocation2 + $0x11] sm:$0x7f] %vm1485, %v1466
            %1489 = vst.msk [vmem:[#allocation2 + $0x19] sm:$0x7f] %vm1485, %v1468
            %1490 = vst.msk [vmem:[#allocation2 + $0x21] sm:$0x7f] %vm1485, %v1470
            %1491 = vst.msk [vmem:[#allocation2 + $0x29] sm:$0x7f] %vm1485, %v1472
            %1492 = vst.msk [vmem:[#allocation2 + $0x31] sm:$0x7f] %vm1485, %v1474
            %1493 = vst.msk [vmem:[#allocation2 + $0x39] sm:$0x7f] %vm1485, %v1476
            %v1494 = vld [vmem:[%s1343] sm:$0xff]
            %v1495 = vld [vmem:[%s1343 + $0x8] sm:$0xff]
            %v1496 = vld [vmem:[%s1343 + $0x10] sm:$0xff]
            %v1497 = vld [vmem:[%s1343 + $0x18] sm:$0xff]
            %v1498 = vld [vmem:[%s1343 + $0x20] sm:$0xff]
            %v1499 = vld [vmem:[%s1343 + $0x28] sm:$0xff]
            %v1500 = vld [vmem:[%s1343 + $0x30] sm:$0xff]
            %v1501 = vld [vmem:[%s1343 + $0x38] sm:$0xff]
            %1510 = vrot.lane.b32.xlu0 %v1494, 16
            %v1511 = vpop.permute.xlu0 %1510
            %1512 = vrot.lane.b32.xlu0 %v1495, 16
            %v1513 = vpop.permute.xlu0 %1512
            %1514 = vrot.lane.b32.xlu0 %v1496, 16
            %v1515 = vpop.permute.xlu0 %1514
            %1516 = vrot.lane.b32.xlu0 %v1497, 16
            %v1517 = vpop.permute.xlu0 %1516
            %1518 = vrot.lane.b32.xlu0 %v1498, 16
            %v1519 = vpop.permute.xlu0 %1518
            %1520 = vrot.lane.b32.xlu0 %v1499, 16
            %v1521 = vpop.permute.xlu0 %1520
            %1522 = vrot.lane.b32.xlu0 %v1500, 16
            %v1523 = vpop.permute.xlu0 %1522
            %1524 = vrot.lane.b32.xlu0 %v1501, 16
            %v1525 = vpop.permute.xlu0 %1524
            %vm1534 = vcmask 162944
            %1535 = vst.msk [vmem:[#allocation2] sm:$0xff] %vm1534, %v1511
            %1536 = vst.msk [vmem:[#allocation2 + $0x8] sm:$0xff] %vm1534, %v1513
            %1537 = vst.msk [vmem:[#allocation2 + $0x10] sm:$0xff] %vm1534, %v1515
            %1538 = vst.msk [vmem:[#allocation2 + $0x18] sm:$0xff] %vm1534, %v1517
            %1539 = vst.msk [vmem:[#allocation2 + $0x20] sm:$0xff] %vm1534, %v1519
            %1540 = vst.msk [vmem:[#allocation2 + $0x28] sm:$0xff] %vm1534, %v1521
            %1541 = vst.msk [vmem:[#allocation2 + $0x30] sm:$0xff] %vm1534, %v1523
            %1542 = vst.msk [vmem:[#allocation2 + $0x38] sm:$0xff] %vm1534, %v1525
            %v1543 = vld [vmem:[%s1343 + $0x1] sm:$0x7f]
            %v1544 = vld [vmem:[%s1343 + $0x9] sm:$0x7f]
            %v1545 = vld [vmem:[%s1343 + $0x11] sm:$0x7f]
            %v1546 = vld [vmem:[%s1343 + $0x19] sm:$0x7f]
            %v1547 = vld [vmem:[%s1343 + $0x21] sm:$0x7f]
            %v1548 = vld [vmem:[%s1343 + $0x29] sm:$0x7f]
            %v1549 = vld [vmem:[%s1343 + $0x31] sm:$0x7f]
            %v1550 = vld [vmem:[%s1343 + $0x39] sm:$0x7f]
            %1559 = vrot.lane.b32.xlu0 %v1543, 20
            %v1560 = vpop.permute.xlu0 %1559
            %1561 = vrot.lane.b32.xlu0 %v1544, 20
            %v1562 = vpop.permute.xlu0 %1561
            %1563 = vrot.lane.b32.xlu0 %v1545, 20
            %v1564 = vpop.permute.xlu0 %1563
            %1565 = vrot.lane.b32.xlu0 %v1546, 20
            %v1566 = vpop.permute.xlu0 %1565
            %1567 = vrot.lane.b32.xlu0 %v1547, 20
            %v1568 = vpop.permute.xlu0 %1567
            %1569 = vrot.lane.b32.xlu0 %v1548, 20
            %v1570 = vpop.permute.xlu0 %1569
            %1571 = vrot.lane.b32.xlu0 %v1549, 20
            %v1572 = vpop.permute.xlu0 %1571
            %1573 = vrot.lane.b32.xlu0 %v1550, 20
            %v1574 = vpop.permute.xlu0 %1573
            %vm1583 = vcmask 194720
            %1584 = vst.msk [vmem:[#allocation2] sm:$0x7f] %vm1583, %v1560
            %1585 = vst.msk [vmem:[#allocation2 + $0x8] sm:$0x7f] %vm1583, %v1562
            %1586 = vst.msk [vmem:[#allocation2 + $0x10] sm:$0x7f] %vm1583, %v1564
            %1587 = vst.msk [vmem:[#allocation2 + $0x18] sm:$0x7f] %vm1583, %v1566
            %1588 = vst.msk [vmem:[#allocation2 + $0x20] sm:$0x7f] %vm1583, %v1568
            %1589 = vst.msk [vmem:[#allocation2 + $0x28] sm:$0x7f] %vm1583, %v1570
            %1590 = vst.msk [vmem:[#allocation2 + $0x30] sm:$0x7f] %vm1583, %v1572
            %1591 = vst.msk [vmem:[#allocation2 + $0x38] sm:$0x7f] %vm1583, %v1574
            %s1592 = sadd.s32 8, %s1342
            %s1593 = scalar_lea.vmem %s222, %s1592
            %v1594 = vld [vmem:[%s1593] sm:$0x7f]
            %v1595 = vld [vmem:[%s1593 + $0x8] sm:$0x7f]
            %v1596 = vld [vmem:[%s1593 + $0x10] sm:$0x7f]
            %v1597 = vld [vmem:[%s1593 + $0x18] sm:$0x7f]
            %v1598 = vld [vmem:[%s1593 + $0x20] sm:$0x7f]
            %v1599 = vld [vmem:[%s1593 + $0x28] sm:$0x7f]
            %v1600 = vld [vmem:[%s1593 + $0x30] sm:$0x7f]
            %1608 = vrot.lane.b32.xlu0 %v1594, 24
            %v1609 = vpop.permute.xlu0 %1608
            %1610 = vrot.lane.b32.xlu0 %v1595, 24
            %v1611 = vpop.permute.xlu0 %1610
            %1612 = vrot.lane.b32.xlu0 %v1596, 24
            %v1613 = vpop.permute.xlu0 %1612
            %1614 = vrot.lane.b32.xlu0 %v1597, 24
            %v1615 = vpop.permute.xlu0 %1614
            %1616 = vrot.lane.b32.xlu0 %v1598, 24
            %v1617 = vpop.permute.xlu0 %1616
            %1618 = vrot.lane.b32.xlu0 %v1599, 24
            %v1619 = vpop.permute.xlu0 %1618
            %1620 = vrot.lane.b32.xlu0 %v1600, 24
            %v1621 = vpop.permute.xlu0 %1620
            %vm1629 = vcmask 227520
            %1630 = vst.msk [vmem:[#allocation2 + $0x1] sm:$0x7f] %vm1629, %v1609
            %1631 = vst.msk [vmem:[#allocation2 + $0x9] sm:$0x7f] %vm1629, %v1611
            %1632 = vst.msk [vmem:[#allocation2 + $0x11] sm:$0x7f] %vm1629, %v1613
            %1633 = vst.msk [vmem:[#allocation2 + $0x19] sm:$0x7f] %vm1629, %v1615
            %1634 = vst.msk [vmem:[#allocation2 + $0x21] sm:$0x7f] %vm1629, %v1617
            %1635 = vst.msk [vmem:[#allocation2 + $0x29] sm:$0x7f] %vm1629, %v1619
            %1636 = vst.msk [vmem:[#allocation2 + $0x31] sm:$0x7f] %vm1629, %v1621
            %v1637 = vld [vmem:[%s1593] sm:$0xff]
            %v1638 = vld [vmem:[%s1593 + $0x8] sm:$0xff]
            %v1639 = vld [vmem:[%s1593 + $0x10] sm:$0xff]
            %v1640 = vld [vmem:[%s1593 + $0x18] sm:$0xff]
            %v1641 = vld [vmem:[%s1593 + $0x20] sm:$0xff]
            %v1642 = vld [vmem:[%s1593 + $0x28] sm:$0xff]
            %v1643 = vld [vmem:[%s1593 + $0x30] sm:$0xff]
            %1651 = vrot.lane.b32.xlu0 %v1637, 28
            %v1652 = vpop.permute.xlu0 %1651
            %1653 = vrot.lane.b32.xlu0 %v1638, 28
            %v1654 = vpop.permute.xlu0 %1653
            %1655 = vrot.lane.b32.xlu0 %v1639, 28
            %v1656 = vpop.permute.xlu0 %1655
            %1657 = vrot.lane.b32.xlu0 %v1640, 28
            %v1658 = vpop.permute.xlu0 %1657
            %1659 = vrot.lane.b32.xlu0 %v1641, 28
            %v1660 = vpop.permute.xlu0 %1659
            %1661 = vrot.lane.b32.xlu0 %v1642, 28
            %v1662 = vpop.permute.xlu0 %1661
            %1663 = vrot.lane.b32.xlu0 %v1643, 28
            %v1664 = vpop.permute.xlu0 %1663
            %vm1672 = vcmask 261344
            %1673 = vst.msk [vmem:[#allocation2] sm:$0xff] %vm1672, %v1652
            %1674 = vst.msk [vmem:[#allocation2 + $0x8] sm:$0xff] %vm1672, %v1654
            %1675 = vst.msk [vmem:[#allocation2 + $0x10] sm:$0xff] %vm1672, %v1656
            %1676 = vst.msk [vmem:[#allocation2 + $0x18] sm:$0xff] %vm1672, %v1658
            %1677 = vst.msk [vmem:[#allocation2 + $0x20] sm:$0xff] %vm1672, %v1660
            %1678 = vst.msk [vmem:[#allocation2 + $0x28] sm:$0xff] %vm1672, %v1662
            %1679 = vst.msk [vmem:[#allocation2 + $0x30] sm:$0xff] %vm1672, %v1664
            %v1680 = vld [vmem:[%s1593 + $0x1] sm:$0x7f]
            %v1681 = vld [vmem:[%s1593 + $0x9] sm:$0x7f]
            %v1682 = vld [vmem:[%s1593 + $0x11] sm:$0x7f]
            %v1683 = vld [vmem:[%s1593 + $0x19] sm:$0x7f]
            %v1684 = vld [vmem:[%s1593 + $0x21] sm:$0x7f]
            %v1685 = vld [vmem:[%s1593 + $0x29] sm:$0x7f]
            %v1686 = vld [vmem:[%s1593 + $0x31] sm:$0x7f]
            %1694 = vrot.lane.b32.xlu0 %v1680, 32
            %v1695 = vpop.permute.xlu0 %1694
            %1696 = vrot.lane.b32.xlu0 %v1681, 32
            %v1697 = vpop.permute.xlu0 %1696
            %1698 = vrot.lane.b32.xlu0 %v1682, 32
            %v1699 = vpop.permute.xlu0 %1698
            %1700 = vrot.lane.b32.xlu0 %v1683, 32
            %v1701 = vpop.permute.xlu0 %1700
            %1702 = vrot.lane.b32.xlu0 %v1684, 32
            %v1703 = vpop.permute.xlu0 %1702
            %1704 = vrot.lane.b32.xlu0 %v1685, 32
            %v1705 = vpop.permute.xlu0 %1704
            %1706 = vrot.lane.b32.xlu0 %v1686, 32
            %v1707 = vpop.permute.xlu0 %1706
            %vm1715 = vcmask 293120
            %1716 = vst.msk [vmem:[#allocation2] sm:$0x7f] %vm1715, %v1695
            %1717 = vst.msk [vmem:[#allocation2 + $0x8] sm:$0x7f] %vm1715, %v1697
            %1718 = vst.msk [vmem:[#allocation2 + $0x10] sm:$0x7f] %vm1715, %v1699
            %1719 = vst.msk [vmem:[#allocation2 + $0x18] sm:$0x7f] %vm1715, %v1701
            %1720 = vst.msk [vmem:[#allocation2 + $0x20] sm:$0x7f] %vm1715, %v1703
            %1721 = vst.msk [vmem:[#allocation2 + $0x28] sm:$0x7f] %vm1715, %v1705
            %1722 = vst.msk [vmem:[#allocation2 + $0x30] sm:$0x7f] %vm1715, %v1707
            %s1723 = smul.u32 %s1337, 64
            %s1724 = scalar_lea.vmem %s222, %s1723
            %v1725 = vld [vmem:[%s1724] sm:$0x7f]
            %v1726 = vld [vmem:[%s1724 + $0x8] sm:$0x7f]
            %v1727 = vld [vmem:[%s1724 + $0x10] sm:$0x7f]
            %v1728 = vld [vmem:[%s1724 + $0x18] sm:$0x7f]
            %v1729 = vld [vmem:[%s1724 + $0x20] sm:$0x7f]
            %v1730 = vld [vmem:[%s1724 + $0x28] sm:$0x7f]
            %v1731 = vld [vmem:[%s1724 + $0x30] sm:$0x7f]
            %1739 = vrot.lane.b32.xlu0 %v1725, 36
            %v1740 = vpop.permute.xlu0 %1739
            %1741 = vrot.lane.b32.xlu0 %v1726, 36
            %v1742 = vpop.permute.xlu0 %1741
            %1743 = vrot.lane.b32.xlu0 %v1727, 36
            %v1744 = vpop.permute.xlu0 %1743
            %1745 = vrot.lane.b32.xlu0 %v1728, 36
            %v1746 = vpop.permute.xlu0 %1745
            %1747 = vrot.lane.b32.xlu0 %v1729, 36
            %v1748 = vpop.permute.xlu0 %1747
            %1749 = vrot.lane.b32.xlu0 %v1730, 36
            %v1750 = vpop.permute.xlu0 %1749
            %1751 = vrot.lane.b32.xlu0 %v1731, 36
            %v1752 = vpop.permute.xlu0 %1751
            %1760 = vst.msk [vmem:[%s380 + $0x1] sm:$0x7f] %vm381, %v1740
            %1761 = vst.msk [vmem:[%s380 + $0x9] sm:$0x7f] %vm381, %v1742
            %1762 = vst.msk [vmem:[%s380 + $0x11] sm:$0x7f] %vm381, %v1744
            %1763 = vst.msk [vmem:[%s380 + $0x19] sm:$0x7f] %vm381, %v1746
            %1764 = vst.msk [vmem:[%s380 + $0x21] sm:$0x7f] %vm381, %v1748
            %1765 = vst.msk [vmem:[%s380 + $0x29] sm:$0x7f] %vm381, %v1750
            %1766 = vst.msk [vmem:[%s380 + $0x31] sm:$0x7f] %vm381, %v1752
            %v1767 = vld [vmem:[%s1724] sm:$0xff]
            %v1768 = vld [vmem:[%s1724 + $0x8] sm:$0xff]
            %v1769 = vld [vmem:[%s1724 + $0x10] sm:$0xff]
            %v1770 = vld [vmem:[%s1724 + $0x18] sm:$0xff]
            %v1771 = vld [vmem:[%s1724 + $0x20] sm:$0xff]
            %v1772 = vld [vmem:[%s1724 + $0x28] sm:$0xff]
            %v1773 = vld [vmem:[%s1724 + $0x30] sm:$0xff]
            %1781 = vrot.lane.b32.xlu0 %v1767, 40
            %v1782 = vpop.permute.xlu0 %1781
            %1783 = vrot.lane.b32.xlu0 %v1768, 40
            %v1784 = vpop.permute.xlu0 %1783
            %1785 = vrot.lane.b32.xlu0 %v1769, 40
            %v1786 = vpop.permute.xlu0 %1785
            %1787 = vrot.lane.b32.xlu0 %v1770, 40
            %v1788 = vpop.permute.xlu0 %1787
            %1789 = vrot.lane.b32.xlu0 %v1771, 40
            %v1790 = vpop.permute.xlu0 %1789
            %1791 = vrot.lane.b32.xlu0 %v1772, 40
            %v1792 = vpop.permute.xlu0 %1791
            %1793 = vrot.lane.b32.xlu0 %v1773, 40
            %v1794 = vpop.permute.xlu0 %1793
            %1802 = vst.msk [vmem:[%s380] sm:$0xff] %vm424, %v1782
            %1803 = vst.msk [vmem:[%s380 + $0x8] sm:$0xff] %vm424, %v1784
            %1804 = vst.msk [vmem:[%s380 + $0x10] sm:$0xff] %vm424, %v1786
            %1805 = vst.msk [vmem:[%s380 + $0x18] sm:$0xff] %vm424, %v1788
            %1806 = vst.msk [vmem:[%s380 + $0x20] sm:$0xff] %vm424, %v1790
            %1807 = vst.msk [vmem:[%s380 + $0x28] sm:$0xff] %vm424, %v1792
            %1808 = vst.msk [vmem:[%s380 + $0x30] sm:$0xff] %vm424, %v1794
            %v1809 = vld [vmem:[%s1724 + $0x1] sm:$0x7f]
            %v1810 = vld [vmem:[%s1724 + $0x9] sm:$0x7f]
            %v1811 = vld [vmem:[%s1724 + $0x11] sm:$0x7f]
            %v1812 = vld [vmem:[%s1724 + $0x19] sm:$0x7f]
            %v1813 = vld [vmem:[%s1724 + $0x21] sm:$0x7f]
            %v1814 = vld [vmem:[%s1724 + $0x29] sm:$0x7f]
            %v1815 = vld [vmem:[%s1724 + $0x31] sm:$0x7f]
            %1823 = vrot.lane.b32.xlu0 %v1809, 44
            %v1824 = vpop.permute.xlu0 %1823
            %1825 = vrot.lane.b32.xlu0 %v1810, 44
            %v1826 = vpop.permute.xlu0 %1825
            %1827 = vrot.lane.b32.xlu0 %v1811, 44
            %v1828 = vpop.permute.xlu0 %1827
            %1829 = vrot.lane.b32.xlu0 %v1812, 44
            %v1830 = vpop.permute.xlu0 %1829
            %1831 = vrot.lane.b32.xlu0 %v1813, 44
            %v1832 = vpop.permute.xlu0 %1831
            %1833 = vrot.lane.b32.xlu0 %v1814, 44
            %v1834 = vpop.permute.xlu0 %1833
            %1835 = vrot.lane.b32.xlu0 %v1815, 44
            %v1836 = vpop.permute.xlu0 %1835
            %1844 = vst.msk [vmem:[%s380] sm:$0x7f] %vm467, %v1824
            %1845 = vst.msk [vmem:[%s380 + $0x8] sm:$0x7f] %vm467, %v1826
            %1846 = vst.msk [vmem:[%s380 + $0x10] sm:$0x7f] %vm467, %v1828
            %1847 = vst.msk [vmem:[%s380 + $0x18] sm:$0x7f] %vm467, %v1830
            %1848 = vst.msk [vmem:[%s380 + $0x20] sm:$0x7f] %vm467, %v1832
            %1849 = vst.msk [vmem:[%s380 + $0x28] sm:$0x7f] %vm467, %v1834
            %1850 = vst.msk [vmem:[%s380 + $0x30] sm:$0x7f] %vm467, %v1836
            %v1851 = vld [vmem:[%s1724] sm:$0x7f]
            %v1852 = vld [vmem:[%s1724 + $0x8] sm:$0x7f]
            %v1853 = vld [vmem:[%s1724 + $0x10] sm:$0x7f]
            %v1854 = vld [vmem:[%s1724 + $0x18] sm:$0x7f]
            %v1855 = vld [vmem:[%s1724 + $0x20] sm:$0x7f]
            %v1856 = vld [vmem:[%s1724 + $0x28] sm:$0x7f]
            %v1857 = vld [vmem:[%s1724 + $0x30] sm:$0x7f]
            %v1858 = vld [vmem:[%s1724 + $0x38] sm:$0x7f]
            %1867 = vrot.lane.b32.xlu0 %v1851, 48
            %v1868 = vpop.permute.xlu0 %1867
            %1869 = vrot.lane.b32.xlu0 %v1852, 48
            %v1870 = vpop.permute.xlu0 %1869
            %1871 = vrot.lane.b32.xlu0 %v1853, 48
            %v1872 = vpop.permute.xlu0 %1871
            %1873 = vrot.lane.b32.xlu0 %v1854, 48
            %v1874 = vpop.permute.xlu0 %1873
            %1875 = vrot.lane.b32.xlu0 %v1855, 48
            %v1876 = vpop.permute.xlu0 %1875
            %1877 = vrot.lane.b32.xlu0 %v1856, 48
            %v1878 = vpop.permute.xlu0 %1877
            %1879 = vrot.lane.b32.xlu0 %v1857, 48
            %v1880 = vpop.permute.xlu0 %1879
            %1881 = vrot.lane.b32.xlu0 %v1858, 48
            %v1882 = vpop.permute.xlu0 %1881
            %1891 = vst.msk [vmem:[#allocation2 + $0x1] sm:$0x7f] %vm515, %v1868
            %1892 = vst.msk [vmem:[#allocation2 + $0x9] sm:$0x7f] %vm515, %v1870
            %1893 = vst.msk [vmem:[#allocation2 + $0x11] sm:$0x7f] %vm515, %v1872
            %1894 = vst.msk [vmem:[#allocation2 + $0x19] sm:$0x7f] %vm515, %v1874
            %1895 = vst.msk [vmem:[#allocation2 + $0x21] sm:$0x7f] %vm515, %v1876
            %1896 = vst.msk [vmem:[#allocation2 + $0x29] sm:$0x7f] %vm515, %v1878
            %1897 = vst.msk [vmem:[#allocation2 + $0x31] sm:$0x7f] %vm515, %v1880
            %1898 = vst.msk [vmem:[#allocation2 + $0x39] sm:$0x7f] %vm515, %v1882
            %v1899 = vld [vmem:[%s1724] sm:$0xff]
            %v1900 = vld [vmem:[%s1724 + $0x8] sm:$0xff]
            %v1901 = vld [vmem:[%s1724 + $0x10] sm:$0xff]
            %v1902 = vld [vmem:[%s1724 + $0x18] sm:$0xff]
            %v1903 = vld [vmem:[%s1724 + $0x20] sm:$0xff]
            %v1904 = vld [vmem:[%s1724 + $0x28] sm:$0xff]
            %v1905 = vld [vmem:[%s1724 + $0x30] sm:$0xff]
            %v1906 = vld [vmem:[%s1724 + $0x38] sm:$0xff]
            %1915 = vrot.lane.b32.xlu0 %v1899, 52
            %v1916 = vpop.permute.xlu0 %1915
            %1917 = vrot.lane.b32.xlu0 %v1900, 52
            %v1918 = vpop.permute.xlu0 %1917
            %1919 = vrot.lane.b32.xlu0 %v1901, 52
            %v1920 = vpop.permute.xlu0 %1919
            %1921 = vrot.lane.b32.xlu0 %v1902, 52
            %v1922 = vpop.permute.xlu0 %1921
            %1923 = vrot.lane.b32.xlu0 %v1903, 52
            %v1924 = vpop.permute.xlu0 %1923
            %1925 = vrot.lane.b32.xlu0 %v1904, 52
            %v1926 = vpop.permute.xlu0 %1925
            %1927 = vrot.lane.b32.xlu0 %v1905, 52
            %v1928 = vpop.permute.xlu0 %1927
            %1929 = vrot.lane.b32.xlu0 %v1906, 52
            %v1930 = vpop.permute.xlu0 %1929
            %1939 = vst.msk [vmem:[#allocation2] sm:$0xff] %vm564, %v1916
            %1940 = vst.msk [vmem:[#allocation2 + $0x8] sm:$0xff] %vm564, %v1918
            %1941 = vst.msk [vmem:[#allocation2 + $0x10] sm:$0xff] %vm564, %v1920
            %1942 = vst.msk [vmem:[#allocation2 + $0x18] sm:$0xff] %vm564, %v1922
            %1943 = vst.msk [vmem:[#allocation2 + $0x20] sm:$0xff] %vm564, %v1924
            %1944 = vst.msk [vmem:[#allocation2 + $0x28] sm:$0xff] %vm564, %v1926
            %1945 = vst.msk [vmem:[#allocation2 + $0x30] sm:$0xff] %vm564, %v1928
            %1946 = vst.msk [vmem:[#allocation2 + $0x38] sm:$0xff] %vm564, %v1930
            %v1947 = vld [vmem:[%s1724 + $0x1] sm:$0x7f]
            %v1948 = vld [vmem:[%s1724 + $0x9] sm:$0x7f]
            %v1949 = vld [vmem:[%s1724 + $0x11] sm:$0x7f]
            %v1950 = vld [vmem:[%s1724 + $0x19] sm:$0x7f]
            %v1951 = vld [vmem:[%s1724 + $0x21] sm:$0x7f]
            %v1952 = vld [vmem:[%s1724 + $0x29] sm:$0x7f]
            %v1953 = vld [vmem:[%s1724 + $0x31] sm:$0x7f]
            %v1954 = vld [vmem:[%s1724 + $0x39] sm:$0x7f]
            %1963 = vrot.lane.b32.xlu0 %v1947, 56
            %v1964 = vpop.permute.xlu0 %1963
            %1965 = vrot.lane.b32.xlu0 %v1948, 56
            %v1966 = vpop.permute.xlu0 %1965
            %1967 = vrot.lane.b32.xlu0 %v1949, 56
            %v1968 = vpop.permute.xlu0 %1967
            %1969 = vrot.lane.b32.xlu0 %v1950, 56
            %v1970 = vpop.permute.xlu0 %1969
            %1971 = vrot.lane.b32.xlu0 %v1951, 56
            %v1972 = vpop.permute.xlu0 %1971
            %1973 = vrot.lane.b32.xlu0 %v1952, 56
            %v1974 = vpop.permute.xlu0 %1973
            %1975 = vrot.lane.b32.xlu0 %v1953, 56
            %v1976 = vpop.permute.xlu0 %1975
            %1977 = vrot.lane.b32.xlu0 %v1954, 56
            %v1978 = vpop.permute.xlu0 %1977
            %1987 = vst.msk [vmem:[#allocation2] sm:$0x7f] %vm613, %v1964
            %1988 = vst.msk [vmem:[#allocation2 + $0x8] sm:$0x7f] %vm613, %v1966
            %1989 = vst.msk [vmem:[#allocation2 + $0x10] sm:$0x7f] %vm613, %v1968
            %1990 = vst.msk [vmem:[#allocation2 + $0x18] sm:$0x7f] %vm613, %v1970
            %1991 = vst.msk [vmem:[#allocation2 + $0x20] sm:$0x7f] %vm613, %v1972
            %1992 = vst.msk [vmem:[#allocation2 + $0x28] sm:$0x7f] %vm613, %v1974
            %1993 = vst.msk [vmem:[#allocation2 + $0x30] sm:$0x7f] %vm613, %v1976
            %1994 = vst.msk [vmem:[#allocation2 + $0x38] sm:$0x7f] %vm613, %v1978
            %s1995 = sadd.s32 8, %s1723
            %s1996 = scalar_lea.vmem %s222, %s1995
            %v1997 = vld [vmem:[%s1996] sm:$0x7f]
            %v1998 = vld [vmem:[%s1996 + $0x8] sm:$0x7f]
            %v1999 = vld [vmem:[%s1996 + $0x10] sm:$0x7f]
            %v2000 = vld [vmem:[%s1996 + $0x18] sm:$0x7f]
            %v2001 = vld [vmem:[%s1996 + $0x20] sm:$0x7f]
            %v2002 = vld [vmem:[%s1996 + $0x28] sm:$0x7f]
            %v2003 = vld [vmem:[%s1996 + $0x30] sm:$0x7f]
            %2011 = vrot.lane.b32.xlu0 %v1997, 60
            %v2012 = vpop.permute.xlu0 %2011
            %2013 = vrot.lane.b32.xlu0 %v1998, 60
            %v2014 = vpop.permute.xlu0 %2013
            %2015 = vrot.lane.b32.xlu0 %v1999, 60
            %v2016 = vpop.permute.xlu0 %2015
            %2017 = vrot.lane.b32.xlu0 %v2000, 60
            %v2018 = vpop.permute.xlu0 %2017
            %2019 = vrot.lane.b32.xlu0 %v2001, 60
            %v2020 = vpop.permute.xlu0 %2019
            %2021 = vrot.lane.b32.xlu0 %v2002, 60
            %v2022 = vpop.permute.xlu0 %2021
            %2023 = vrot.lane.b32.xlu0 %v2003, 60
            %v2024 = vpop.permute.xlu0 %2023
            %2032 = vst.msk [vmem:[#allocation2 + $0x1] sm:$0x7f] %vm658, %v2012
            %2033 = vst.msk [vmem:[#allocation2 + $0x9] sm:$0x7f] %vm658, %v2014
            %2034 = vst.msk [vmem:[#allocation2 + $0x11] sm:$0x7f] %vm658, %v2016
            %2035 = vst.msk [vmem:[#allocation2 + $0x19] sm:$0x7f] %vm658, %v2018
            %2036 = vst.msk [vmem:[#allocation2 + $0x21] sm:$0x7f] %vm658, %v2020
            %2037 = vst.msk [vmem:[#allocation2 + $0x29] sm:$0x7f] %vm658, %v2022
            %2038 = vst.msk [vmem:[#allocation2 + $0x31] sm:$0x7f] %vm658, %v2024
            %v2039 = vld [vmem:[%s1996] sm:$0xff]
            %v2040 = vld [vmem:[%s1996 + $0x8] sm:$0xff]
            %v2041 = vld [vmem:[%s1996 + $0x10] sm:$0xff]
            %v2042 = vld [vmem:[%s1996 + $0x18] sm:$0xff]
            %v2043 = vld [vmem:[%s1996 + $0x20] sm:$0xff]
            %v2044 = vld [vmem:[%s1996 + $0x28] sm:$0xff]
            %v2045 = vld [vmem:[%s1996 + $0x30] sm:$0xff]
            %2053 = vrot.lane.b32.xlu0 %v2039, 64
            %v2054 = vpop.permute.xlu0 %2053
            %2055 = vrot.lane.b32.xlu0 %v2040, 64
            %v2056 = vpop.permute.xlu0 %2055
            %2057 = vrot.lane.b32.xlu0 %v2041, 64
            %v2058 = vpop.permute.xlu0 %2057
            %2059 = vrot.lane.b32.xlu0 %v2042, 64
            %v2060 = vpop.permute.xlu0 %2059
            %2061 = vrot.lane.b32.xlu0 %v2043, 64
            %v2062 = vpop.permute.xlu0 %2061
            %2063 = vrot.lane.b32.xlu0 %v2044, 64
            %v2064 = vpop.permute.xlu0 %2063
            %2065 = vrot.lane.b32.xlu0 %v2045, 64
            %v2066 = vpop.permute.xlu0 %2065
            %2074 = vst.msk [vmem:[#allocation2] sm:$0xff] %vm701, %v2054
            %2075 = vst.msk [vmem:[#allocation2 + $0x8] sm:$0xff] %vm701, %v2056
            %2076 = vst.msk [vmem:[#allocation2 + $0x10] sm:$0xff] %vm701, %v2058
            %2077 = vst.msk [vmem:[#allocation2 + $0x18] sm:$0xff] %vm701, %v2060
            %2078 = vst.msk [vmem:[#allocation2 + $0x20] sm:$0xff] %vm701, %v2062
            %2079 = vst.msk [vmem:[#allocation2 + $0x28] sm:$0xff] %vm701, %v2064
            %2080 = vst.msk [vmem:[#allocation2 + $0x30] sm:$0xff] %vm701, %v2066
            %v2081 = vld [vmem:[%s1996 + $0x1] sm:$0x7f]
            %v2082 = vld [vmem:[%s1996 + $0x9] sm:$0x7f]
            %v2083 = vld [vmem:[%s1996 + $0x11] sm:$0x7f]
            %v2084 = vld [vmem:[%s1996 + $0x19] sm:$0x7f]
            %v2085 = vld [vmem:[%s1996 + $0x21] sm:$0x7f]
            %v2086 = vld [vmem:[%s1996 + $0x29] sm:$0x7f]
            %v2087 = vld [vmem:[%s1996 + $0x31] sm:$0x7f]
            %2095 = vrot.lane.b32.xlu0 %v2081, 68
            %v2096 = vpop.permute.xlu0 %2095
            %2097 = vrot.lane.b32.xlu0 %v2082, 68
            %v2098 = vpop.permute.xlu0 %2097
            %2099 = vrot.lane.b32.xlu0 %v2083, 68
            %v2100 = vpop.permute.xlu0 %2099
            %2101 = vrot.lane.b32.xlu0 %v2084, 68
            %v2102 = vpop.permute.xlu0 %2101
            %2103 = vrot.lane.b32.xlu0 %v2085, 68
            %v2104 = vpop.permute.xlu0 %2103
            %2105 = vrot.lane.b32.xlu0 %v2086, 68
            %v2106 = vpop.permute.xlu0 %2105
            %2107 = vrot.lane.b32.xlu0 %v2087, 68
            %v2108 = vpop.permute.xlu0 %2107
            %2116 = vst.msk [vmem:[#allocation2] sm:$0x7f] %vm744, %v2096
            %2117 = vst.msk [vmem:[#allocation2 + $0x8] sm:$0x7f] %vm744, %v2098
            %2118 = vst.msk [vmem:[#allocation2 + $0x10] sm:$0x7f] %vm744, %v2100
            %2119 = vst.msk [vmem:[#allocation2 + $0x18] sm:$0x7f] %vm744, %v2102
            %2120 = vst.msk [vmem:[#allocation2 + $0x20] sm:$0x7f] %vm744, %v2104
            %2121 = vst.msk [vmem:[#allocation2 + $0x28] sm:$0x7f] %vm744, %v2106
            %2122 = vst.msk [vmem:[#allocation2 + $0x30] sm:$0x7f] %vm744, %v2108
            %s2123 = sadd.s32 %s1332, 2
            %p2124 = scmp.lt.s32.totalorder %s2123, 8
            // Predicated region
            $region52: #{basic_block_forward.1} parent=50 // pred_check
              %p2125 = pneg %p2124
            $region53: #{basic_block_forward.1} parent=50 // pred_check_branch
              %2127 = sbr.rel (%p2125) target = $region55
            $region54: #{basic_block_forward.1} parent=50 // pred_region
              %s2128 = smul.u32 %s2123, 64
              %s2129 = scalar_lea.vmem %s222, %s2128
              %v2130 = vld [vmem:[%s2129] sm:$0x7f]
              %v2131 = vld [vmem:[%s2129 + $0x8] sm:$0x7f]
              %v2132 = vld [vmem:[%s2129 + $0x10] sm:$0x7f]
              %v2133 = vld [vmem:[%s2129 + $0x18] sm:$0x7f]
              %v2134 = vld [vmem:[%s2129 + $0x20] sm:$0x7f]
              %v2135 = vld [vmem:[%s2129 + $0x28] sm:$0x7f]
              %v2136 = vld [vmem:[%s2129 + $0x30] sm:$0x7f]
              %2144 = vrot.lane.b32.xlu0 %v2130, 72
              %v2145 = vpop.permute.xlu0 %2144
              %2146 = vrot.lane.b32.xlu0 %v2131, 72
              %v2147 = vpop.permute.xlu0 %2146
              %2148 = vrot.lane.b32.xlu0 %v2132, 72
              %v2149 = vpop.permute.xlu0 %2148
              %2150 = vrot.lane.b32.xlu0 %v2133, 72
              %v2151 = vpop.permute.xlu0 %2150
              %2152 = vrot.lane.b32.xlu0 %v2134, 72
              %v2153 = vpop.permute.xlu0 %2152
              %2154 = vrot.lane.b32.xlu0 %v2135, 72
              %v2155 = vpop.permute.xlu0 %2154
              %2156 = vrot.lane.b32.xlu0 %v2136, 72
              %v2157 = vpop.permute.xlu0 %2156
              %2165 = vst.msk [vmem:[%s380 + $0x1] sm:$0x7f] %vm788, %v2145
              %2166 = vst.msk [vmem:[%s380 + $0x9] sm:$0x7f] %vm788, %v2147
              %2167 = vst.msk [vmem:[%s380 + $0x11] sm:$0x7f] %vm788, %v2149
              %2168 = vst.msk [vmem:[%s380 + $0x19] sm:$0x7f] %vm788, %v2151
              %2169 = vst.msk [vmem:[%s380 + $0x21] sm:$0x7f] %vm788, %v2153
              %2170 = vst.msk [vmem:[%s380 + $0x29] sm:$0x7f] %vm788, %v2155
              %2171 = vst.msk [vmem:[%s380 + $0x31] sm:$0x7f] %vm788, %v2157
              %v2172 = vld [vmem:[%s2129] sm:$0xff]
              %v2173 = vld [vmem:[%s2129 + $0x8] sm:$0xff]
              %v2174 = vld [vmem:[%s2129 + $0x10] sm:$0xff]
              %v2175 = vld [vmem:[%s2129 + $0x18] sm:$0xff]
              %v2176 = vld [vmem:[%s2129 + $0x20] sm:$0xff]
              %v2177 = vld [vmem:[%s2129 + $0x28] sm:$0xff]
              %v2178 = vld [vmem:[%s2129 + $0x30] sm:$0xff]
              %2186 = vrot.lane.b32.xlu0 %v2172, 76
              %v2187 = vpop.permute.xlu0 %2186
              %2188 = vrot.lane.b32.xlu0 %v2173, 76
              %v2189 = vpop.permute.xlu0 %2188
              %2190 = vrot.lane.b32.xlu0 %v2174, 76
              %v2191 = vpop.permute.xlu0 %2190
              %2192 = vrot.lane.b32.xlu0 %v2175, 76
              %v2193 = vpop.permute.xlu0 %2192
              %2194 = vrot.lane.b32.xlu0 %v2176, 76
              %v2195 = vpop.permute.xlu0 %2194
              %2196 = vrot.lane.b32.xlu0 %v2177, 76
              %v2197 = vpop.permute.xlu0 %2196
              %2198 = vrot.lane.b32.xlu0 %v2178, 76
              %v2199 = vpop.permute.xlu0 %2198
              %2207 = vst.msk [vmem:[%s380] sm:$0xff] %vm831, %v2187
              %2208 = vst.msk [vmem:[%s380 + $0x8] sm:$0xff] %vm831, %v2189
              %2209 = vst.msk [vmem:[%s380 + $0x10] sm:$0xff] %vm831, %v2191
              %2210 = vst.msk [vmem:[%s380 + $0x18] sm:$0xff] %vm831, %v2193
              %2211 = vst.msk [vmem:[%s380 + $0x20] sm:$0xff] %vm831, %v2195
              %2212 = vst.msk [vmem:[%s380 + $0x28] sm:$0xff] %vm831, %v2197
              %2213 = vst.msk [vmem:[%s380 + $0x30] sm:$0xff] %vm831, %v2199
              %v2214 = vld [vmem:[%s2129 + $0x1] sm:$0x7f]
              %v2215 = vld [vmem:[%s2129 + $0x9] sm:$0x7f]
              %v2216 = vld [vmem:[%s2129 + $0x11] sm:$0x7f]
              %v2217 = vld [vmem:[%s2129 + $0x19] sm:$0x7f]
              %v2218 = vld [vmem:[%s2129 + $0x21] sm:$0x7f]
              %v2219 = vld [vmem:[%s2129 + $0x29] sm:$0x7f]
              %v2220 = vld [vmem:[%s2129 + $0x31] sm:$0x7f]
              %2228 = vrot.lane.b32.xlu0 %v2214, 80
              %v2229 = vpop.permute.xlu0 %2228
              %2230 = vrot.lane.b32.xlu0 %v2215, 80
              %v2231 = vpop.permute.xlu0 %2230
              %2232 = vrot.lane.b32.xlu0 %v2216, 80
              %v2233 = vpop.permute.xlu0 %2232
              %2234 = vrot.lane.b32.xlu0 %v2217, 80
              %v2235 = vpop.permute.xlu0 %2234
              %2236 = vrot.lane.b32.xlu0 %v2218, 80
              %v2237 = vpop.permute.xlu0 %2236
              %2238 = vrot.lane.b32.xlu0 %v2219, 80
              %v2239 = vpop.permute.xlu0 %2238
              %2240 = vrot.lane.b32.xlu0 %v2220, 80
              %v2241 = vpop.permute.xlu0 %2240
              %2249 = vst.msk [vmem:[%s380] sm:$0x7f] %vm874, %v2229
              %2250 = vst.msk [vmem:[%s380 + $0x8] sm:$0x7f] %vm874, %v2231
              %2251 = vst.msk [vmem:[%s380 + $0x10] sm:$0x7f] %vm874, %v2233
              %2252 = vst.msk [vmem:[%s380 + $0x18] sm:$0x7f] %vm874, %v2235
              %2253 = vst.msk [vmem:[%s380 + $0x20] sm:$0x7f] %vm874, %v2237
              %2254 = vst.msk [vmem:[%s380 + $0x28] sm:$0x7f] %vm874, %v2239
              %2255 = vst.msk [vmem:[%s380 + $0x30] sm:$0x7f] %vm874, %v2241
              %v2256 = vld [vmem:[%s2129] sm:$0x7f]
              %v2257 = vld [vmem:[%s2129 + $0x8] sm:$0x7f]
              %v2258 = vld [vmem:[%s2129 + $0x10] sm:$0x7f]
              %v2259 = vld [vmem:[%s2129 + $0x18] sm:$0x7f]
              %v2260 = vld [vmem:[%s2129 + $0x20] sm:$0x7f]
              %v2261 = vld [vmem:[%s2129 + $0x28] sm:$0x7f]
              %v2262 = vld [vmem:[%s2129 + $0x30] sm:$0x7f]
              %v2263 = vld [vmem:[%s2129 + $0x38] sm:$0x7f]
              %2272 = vrot.lane.b32.xlu0 %v2256, 84
              %v2273 = vpop.permute.xlu0 %2272
              %2274 = vrot.lane.b32.xlu0 %v2257, 84
              %v2275 = vpop.permute.xlu0 %2274
              %2276 = vrot.lane.b32.xlu0 %v2258, 84
              %v2277 = vpop.permute.xlu0 %2276
              %2278 = vrot.lane.b32.xlu0 %v2259, 84
              %v2279 = vpop.permute.xlu0 %2278
              %2280 = vrot.lane.b32.xlu0 %v2260, 84
              %v2281 = vpop.permute.xlu0 %2280
              %2282 = vrot.lane.b32.xlu0 %v2261, 84
              %v2283 = vpop.permute.xlu0 %2282
              %2284 = vrot.lane.b32.xlu0 %v2262, 84
              %v2285 = vpop.permute.xlu0 %2284
              %2286 = vrot.lane.b32.xlu0 %v2263, 84
              %v2287 = vpop.permute.xlu0 %2286
              %2296 = vst.msk [vmem:[#allocation2 + $0x1] sm:$0x7f] %vm922, %v2273
              %2297 = vst.msk [vmem:[#allocation2 + $0x9] sm:$0x7f] %vm922, %v2275
              %2298 = vst.msk [vmem:[#allocation2 + $0x11] sm:$0x7f] %vm922, %v2277
              %2299 = vst.msk [vmem:[#allocation2 + $0x19] sm:$0x7f] %vm922, %v2279
              %2300 = vst.msk [vmem:[#allocation2 + $0x21] sm:$0x7f] %vm922, %v2281
              %2301 = vst.msk [vmem:[#allocation2 + $0x29] sm:$0x7f] %vm922, %v2283
              %2302 = vst.msk [vmem:[#allocation2 + $0x31] sm:$0x7f] %vm922, %v2285
              %2303 = vst.msk [vmem:[#allocation2 + $0x39] sm:$0x7f] %vm922, %v2287
              %v2304 = vld [vmem:[%s2129] sm:$0xff]
              %v2305 = vld [vmem:[%s2129 + $0x8] sm:$0xff]
              %v2306 = vld [vmem:[%s2129 + $0x10] sm:$0xff]
              %v2307 = vld [vmem:[%s2129 + $0x18] sm:$0xff]
              %v2308 = vld [vmem:[%s2129 + $0x20] sm:$0xff]
              %v2309 = vld [vmem:[%s2129 + $0x28] sm:$0xff]
              %v2310 = vld [vmem:[%s2129 + $0x30] sm:$0xff]
              %v2311 = vld [vmem:[%s2129 + $0x38] sm:$0xff]
              %2320 = vrot.lane.b32.xlu0 %v2304, 88
              %v2321 = vpop.permute.xlu0 %2320
              %2322 = vrot.lane.b32.xlu0 %v2305, 88
              %v2323 = vpop.permute.xlu0 %2322
              %2324 = vrot.lane.b32.xlu0 %v2306, 88
              %v2325 = vpop.permute.xlu0 %2324
              %2326 = vrot.lane.b32.xlu0 %v2307, 88
              %v2327 = vpop.permute.xlu0 %2326
              %2328 = vrot.lane.b32.xlu0 %v2308, 88
              %v2329 = vpop.permute.xlu0 %2328
              %2330 = vrot.lane.b32.xlu0 %v2309, 88
              %v2331 = vpop.permute.xlu0 %2330
              %2332 = vrot.lane.b32.xlu0 %v2310, 88
              %v2333 = vpop.permute.xlu0 %2332
              %2334 = vrot.lane.b32.xlu0 %v2311, 88
              %v2335 = vpop.permute.xlu0 %2334
              %2344 = vst.msk [vmem:[#allocation2] sm:$0xff] %vm971, %v2321
              %2345 = vst.msk [vmem:[#allocation2 + $0x8] sm:$0xff] %vm971, %v2323
              %2346 = vst.msk [vmem:[#allocation2 + $0x10] sm:$0xff] %vm971, %v2325
              %2347 = vst.msk [vmem:[#allocation2 + $0x18] sm:$0xff] %vm971, %v2327
              %2348 = vst.msk [vmem:[#allocation2 + $0x20] sm:$0xff] %vm971, %v2329
              %2349 = vst.msk [vmem:[#allocation2 + $0x28] sm:$0xff] %vm971, %v2331
              %2350 = vst.msk [vmem:[#allocation2 + $0x30] sm:$0xff] %vm971, %v2333
              %2351 = vst.msk [vmem:[#allocation2 + $0x38] sm:$0xff] %vm971, %v2335
              %v2352 = vld [vmem:[%s2129 + $0x1] sm:$0x7f]
              %v2353 = vld [vmem:[%s2129 + $0x9] sm:$0x7f]
              %v2354 = vld [vmem:[%s2129 + $0x11] sm:$0x7f]
              %v2355 = vld [vmem:[%s2129 + $0x19] sm:$0x7f]
              %v2356 = vld [vmem:[%s2129 + $0x21] sm:$0x7f]
              %v2357 = vld [vmem:[%s2129 + $0x29] sm:$0x7f]
              %v2358 = vld [vmem:[%s2129 + $0x31] sm:$0x7f]
              %v2359 = vld [vmem:[%s2129 + $0x39] sm:$0x7f]
              %2368 = vrot.lane.b32.xlu0 %v2352, 92
              %v2369 = vpop.permute.xlu0 %2368
              %2370 = vrot.lane.b32.xlu0 %v2353, 92
              %v2371 = vpop.permute.xlu0 %2370
              %2372 = vrot.lane.b32.xlu0 %v2354, 92
              %v2373 = vpop.permute.xlu0 %2372
              %2374 = vrot.lane.b32.xlu0 %v2355, 92
              %v2375 = vpop.permute.xlu0 %2374
              %2376 = vrot.lane.b32.xlu0 %v2356, 92
              %v2377 = vpop.permute.xlu0 %2376
              %2378 = vrot.lane.b32.xlu0 %v2357, 92
              %v2379 = vpop.permute.xlu0 %2378
              %2380 = vrot.lane.b32.xlu0 %v2358, 92
              %v2381 = vpop.permute.xlu0 %2380
              %2382 = vrot.lane.b32.xlu0 %v2359, 92
              %v2383 = vpop.permute.xlu0 %2382
              %2392 = vst.msk [vmem:[#allocation2] sm:$0x7f] %vm1020, %v2369
              %2393 = vst.msk [vmem:[#allocation2 + $0x8] sm:$0x7f] %vm1020, %v2371
              %2394 = vst.msk [vmem:[#allocation2 + $0x10] sm:$0x7f] %vm1020, %v2373
              %2395 = vst.msk [vmem:[#allocation2 + $0x18] sm:$0x7f] %vm1020, %v2375
              %2396 = vst.msk [vmem:[#allocation2 + $0x20] sm:$0x7f] %vm1020, %v2377
              %2397 = vst.msk [vmem:[#allocation2 + $0x28] sm:$0x7f] %vm1020, %v2379
              %2398 = vst.msk [vmem:[#allocation2 + $0x30] sm:$0x7f] %vm1020, %v2381
              %2399 = vst.msk [vmem:[#allocation2 + $0x38] sm:$0x7f] %vm1020, %v2383
              %s2400 = sadd.s32 8, %s2128
              %s2401 = scalar_lea.vmem %s222, %s2400
              %v2402 = vld [vmem:[%s2401] sm:$0x7f]
              %v2403 = vld [vmem:[%s2401 + $0x8] sm:$0x7f]
              %v2404 = vld [vmem:[%s2401 + $0x10] sm:$0x7f]
              %v2405 = vld [vmem:[%s2401 + $0x18] sm:$0x7f]
              %v2406 = vld [vmem:[%s2401 + $0x20] sm:$0x7f]
              %v2407 = vld [vmem:[%s2401 + $0x28] sm:$0x7f]
              %v2408 = vld [vmem:[%s2401 + $0x30] sm:$0x7f]
              %2416 = vrot.lane.b32.xlu0 %v2402, 96
              %v2417 = vpop.permute.xlu0 %2416
              %2418 = vrot.lane.b32.xlu0 %v2403, 96
              %v2419 = vpop.permute.xlu0 %2418
              %2420 = vrot.lane.b32.xlu0 %v2404, 96
              %v2421 = vpop.permute.xlu0 %2420
              %2422 = vrot.lane.b32.xlu0 %v2405, 96
              %v2423 = vpop.permute.xlu0 %2422
              %2424 = vrot.lane.b32.xlu0 %v2406, 96
              %v2425 = vpop.permute.xlu0 %2424
              %2426 = vrot.lane.b32.xlu0 %v2407, 96
              %v2427 = vpop.permute.xlu0 %2426
              %2428 = vrot.lane.b32.xlu0 %v2408, 96
              %v2429 = vpop.permute.xlu0 %2428
              %2437 = vst.msk [vmem:[#allocation2 + $0x1] sm:$0x7f] %vm1065, %v2417
              %2438 = vst.msk [vmem:[#allocation2 + $0x9] sm:$0x7f] %vm1065, %v2419
              %2439 = vst.msk [vmem:[#allocation2 + $0x11] sm:$0x7f] %vm1065, %v2421
              %2440 = vst.msk [vmem:[#allocation2 + $0x19] sm:$0x7f] %vm1065, %v2423
              %2441 = vst.msk [vmem:[#allocation2 + $0x21] sm:$0x7f] %vm1065, %v2425
              %2442 = vst.msk [vmem:[#allocation2 + $0x29] sm:$0x7f] %vm1065, %v2427
              %2443 = vst.msk [vmem:[#allocation2 + $0x31] sm:$0x7f] %vm1065, %v2429
              %v2444 = vld [vmem:[%s2401] sm:$0xff]
              %v2445 = vld [vmem:[%s2401 + $0x8] sm:$0xff]
              %v2446 = vld [vmem:[%s2401 + $0x10] sm:$0xff]
              %v2447 = vld [vmem:[%s2401 + $0x18] sm:$0xff]
              %v2448 = vld [vmem:[%s2401 + $0x20] sm:$0xff]
              %v2449 = vld [vmem:[%s2401 + $0x28] sm:$0xff]
              %v2450 = vld [vmem:[%s2401 + $0x30] sm:$0xff]
              %2458 = vrot.lane.b32.xlu0 %v2444, 100
              %v2459 = vpop.permute.xlu0 %2458
              %2460 = vrot.lane.b32.xlu0 %v2445, 100
              %v2461 = vpop.permute.xlu0 %2460
              %2462 = vrot.lane.b32.xlu0 %v2446, 100
              %v2463 = vpop.permute.xlu0 %2462
              %2464 = vrot.lane.b32.xlu0 %v2447, 100
              %v2465 = vpop.permute.xlu0 %2464
              %2466 = vrot.lane.b32.xlu0 %v2448, 100
              %v2467 = vpop.permute.xlu0 %2466
              %2468 = vrot.lane.b32.xlu0 %v2449, 100
              %v2469 = vpop.permute.xlu0 %2468
              %2470 = vrot.lane.b32.xlu0 %v2450, 100
              %v2471 = vpop.permute.xlu0 %2470
              %2479 = vst.msk [vmem:[#allocation2] sm:$0xff] %vm1108, %v2459
              %2480 = vst.msk [vmem:[#allocation2 + $0x8] sm:$0xff] %vm1108, %v2461
              %2481 = vst.msk [vmem:[#allocation2 + $0x10] sm:$0xff] %vm1108, %v2463
              %2482 = vst.msk [vmem:[#allocation2 + $0x18] sm:$0xff] %vm1108, %v2465
              %2483 = vst.msk [vmem:[#allocation2 + $0x20] sm:$0xff] %vm1108, %v2467
              %2484 = vst.msk [vmem:[#allocation2 + $0x28] sm:$0xff] %vm1108, %v2469
              %2485 = vst.msk [vmem:[#allocation2 + $0x30] sm:$0xff] %vm1108, %v2471
              %v2486 = vld [vmem:[%s2401 + $0x1] sm:$0x7f]
              %v2487 = vld [vmem:[%s2401 + $0x9] sm:$0x7f]
              %v2488 = vld [vmem:[%s2401 + $0x11] sm:$0x7f]
              %v2489 = vld [vmem:[%s2401 + $0x19] sm:$0x7f]
              %v2490 = vld [vmem:[%s2401 + $0x21] sm:$0x7f]
              %v2491 = vld [vmem:[%s2401 + $0x29] sm:$0x7f]
              %v2492 = vld [vmem:[%s2401 + $0x31] sm:$0x7f]
              %2500 = vrot.lane.b32.xlu0 %v2486, 104
              %v2501 = vpop.permute.xlu0 %2500
              %2502 = vrot.lane.b32.xlu0 %v2487, 104
              %v2503 = vpop.permute.xlu0 %2502
              %2504 = vrot.lane.b32.xlu0 %v2488, 104
              %v2505 = vpop.permute.xlu0 %2504
              %2506 = vrot.lane.b32.xlu0 %v2489, 104
              %v2507 = vpop.permute.xlu0 %2506
              %2508 = vrot.lane.b32.xlu0 %v2490, 104
              %v2509 = vpop.permute.xlu0 %2508
              %2510 = vrot.lane.b32.xlu0 %v2491, 104
              %v2511 = vpop.permute.xlu0 %2510
              %2512 = vrot.lane.b32.xlu0 %v2492, 104
              %v2513 = vpop.permute.xlu0 %2512
              %2521 = vst.msk [vmem:[#allocation2] sm:$0x7f] %vm1151, %v2501
              %2522 = vst.msk [vmem:[#allocation2 + $0x8] sm:$0x7f] %vm1151, %v2503
              %2523 = vst.msk [vmem:[#allocation2 + $0x10] sm:$0x7f] %vm1151, %v2505
              %2524 = vst.msk [vmem:[#allocation2 + $0x18] sm:$0x7f] %vm1151, %v2507
              %2525 = vst.msk [vmem:[#allocation2 + $0x20] sm:$0x7f] %vm1151, %v2509
              %2526 = vst.msk [vmem:[#allocation2 + $0x28] sm:$0x7f] %vm1151, %v2511
              %2527 = vst.msk [vmem:[#allocation2 + $0x30] sm:$0x7f] %vm1151, %v2513
            $region55: #{basic_block_forward.1} parent=50 // pred_fallthru
              _
            %p2528 = scmp.ge.s32.totalorder %s2123, 8
            // Predicated region
            $region56: #{basic_block_forward.1} parent=50 // pred_check
              %p2529 = pneg %p2528
            $region57: #{basic_block_forward.1} parent=50 // pred_check_branch
              %2531 = sbr.rel (%p2529) target = $region59
            $region58: #{basic_block_forward.1} parent=50 // pred_region
              %vm2532 = vcmask 884288
              %2533 = vst.msk [vmem:[#allocation2] sm:$0xff] %vm2532, 0.0
              %2534 = vst.msk [vmem:[#allocation2 + $0x8] sm:$0xff] %vm2532, 0.0
              %2535 = vst.msk [vmem:[#allocation2 + $0x10] sm:$0xff] %vm2532, 0.0
              %2536 = vst.msk [vmem:[#allocation2 + $0x18] sm:$0xff] %vm2532, 0.0
              %2537 = vst.msk [vmem:[#allocation2 + $0x20] sm:$0xff] %vm2532, 0.0
              %2538 = vst.msk [vmem:[#allocation2 + $0x28] sm:$0xff] %vm2532, 0.0
              %2539 = vst.msk [vmem:[#allocation2 + $0x30] sm:$0xff] %vm2532, 0.0
              %2540 = vst.msk [vmem:[#allocation2 + $0x38] sm:$0xff] %vm2532, 0.0
            $region59: #{basic_block_forward.1} parent=50 // pred_fallthru
              _
            %s2541 = sand.u32 %s2123, 3
            %v2542 = vld [vmem:[#allocation2] sm:$0xff]
            %v2543 = vld [vmem:[#allocation2 + $0x8] sm:$0xff]
            %v2544 = vld [vmem:[#allocation2 + $0x10] sm:$0xff]
            %v2545 = vld [vmem:[#allocation2 + $0x18] sm:$0xff]
            %v2546 = vld [vmem:[#allocation2 + $0x20] sm:$0xff]
            %v2547 = vld [vmem:[#allocation2 + $0x28] sm:$0xff]
            %v2548 = vld [vmem:[#allocation2 + $0x30] sm:$0xff]
            %v2549 = vld [vmem:[#allocation2 + $0x38] sm:$0xff]
            %v2550 = vld [vmem:[%s1] sm:$0xff]
            %v2551 = vld [vmem:[%s1 + $0x8] sm:$0xff]
            %v2552 = vld [vmem:[%s1 + $0x10] sm:$0xff]
            %v2553 = vld [vmem:[%s1 + $0x18] sm:$0xff]
            %v2554 = vld [vmem:[%s1 + $0x20] sm:$0xff]
            %v2555 = vld [vmem:[%s1 + $0x28] sm:$0xff]
            %v2556 = vld [vmem:[%s1 + $0x30] sm:$0xff]
            %v2557 = vld [vmem:[%s1 + $0x38] sm:$0xff]
            %v2558 = vld [vmem:[%s1 + $0x40] sm:$0xff]
            %v2559 = vld [vmem:[%s1 + $0x48] sm:$0xff]
            %v2560 = vld [vmem:[%s1 + $0x50] sm:$0xff]
            %v2561 = vld [vmem:[%s1 + $0x58] sm:$0xff]
            %v2562 = vld [vmem:[%s1 + $0x60] sm:$0xff]
            %v2563 = vld [vmem:[%s1 + $0x68] sm:$0xf]
            %v2565 = vsel %vm223, %v2542, 0
            %v2568 = vsel %vm223, %v2543, 0
            %v2571 = vsel %vm223, %v2544, 0
            %v2574 = vsel %vm223, %v2545, 0
            %v2577 = vsel %vm223, %v2546, 0
            %v2580 = vsel %vm223, %v2547, 0
            %v2583 = vsel %vm223, %v2548, 0
            %v2586 = vsel %vm223, %v2549, 0
            %v2589 = vsel %vm1205, %v2563, 0
            %2591 = vmatprep.subr.mxu0 0.0
            %2592 = vmatpush1.msra.mxu0 %v2550
            %2593 = vmatprep.subr.mxu0 0.0
            %2594 = vmatpush1.msra.mxu0 %v2551
            %2595 = vmatprep.subr.mxu0 0.0
            %2596 = vmatpush1.msra.mxu0 %v2552
            %2597 = vmatprep.subr.mxu0 0.0
            %2598 = vmatpush1.msra.mxu0 %v2553
            %2599 = vmatprep.subr.mxu0 0.0
            %2600 = vmatpush1.msra.mxu0 %v2554
            %2601 = vmatprep.subr.mxu0 0.0
            %2602 = vmatpush1.msra.mxu0 %v2555
            %2603 = vmatprep.subr.mxu0 0.0
            %2604 = vmatpush1.msra.mxu0 %v2556
            %2605 = vmatprep.subr.mxu0 0.0
            %2606 = vmatpush1.msra.mxu0 %v2557
            %2607 = vmatprep.subr.mxu0 0.0
            %2608 = vmatpush1.msra.mxu0 %v2558
            %2609 = vmatprep.subr.mxu0 0.0
            %2610 = vmatpush1.msra.mxu0 %v2559
            %2611 = vmatprep.subr.mxu0 0.0
            %2612 = vmatpush1.msra.mxu0 %v2560
            %2613 = vmatprep.subr.mxu0 0.0
            %2614 = vmatpush1.msra.mxu0 %v2561
            %2615 = vmatprep.subr.mxu0 0.0
            %2616 = vmatpush1.msra.mxu0 %v2562
            %2617 = vmatprep.subr.mxu0 0.0
            %2618 = vmatpush1.msra.mxu0 %v2589
            %2619 = vmatprep.subr.mxu0 0.0
            %2620 = vmatpush1.msra.mxu0 0.0
            %2621 = vmatprep.subr.mxu0 0.0
            %2622 = vmatpush1.msra.mxu0 0.0
            %2623 = vmatprep.subr.mxu0 0.0
            %2624 = vmatpush1.msra.mxu0 0.0
            %2625 = vmatprep.subr.mxu0 0.0
            %2626 = vmatpush1.msra.mxu0 0.0
            %2627 = vmatprep.subr.mxu0 0.0
            %2628 = vmatpush1.msra.mxu0 0.0
            %2629 = vmatprep.subr.mxu0 0.0
            %2630 = vmatpush1.msra.mxu0 0.0
            %2631 = vmatprep.subr.mxu0 0.0
            %2632 = vmatpush1.msra.mxu0 0.0
            %2633 = vmatprep.subr.mxu0 0.0
            %2634 = vmatpush1.msra.mxu0 0.0
            %2635 = vmatprep.subr.mxu0 0.0
            %2636 = vmatpush1.msra.mxu0 0.0
            %2637 = vmatprep.subr.mxu0 0.0
            %2638 = vmatpush1.msra.mxu0 0.0
            %2639 = vmatprep.subr.mxu0 0.0
            %2640 = vmatpush1.msra.mxu0 0.0
            %2641 = vmatprep.subr.mxu0 0.0
            %2642 = vmatpush1.msra.mxu0 0.0
            %2643 = vmatprep.subr.mxu0 0.0
            %2644 = vmatpush1.msra.mxu0 0.0
            %2645 = vmatprep.subr.mxu0 0.0
            %2646 = vmatpush1.msra.mxu0 0.0
            %2647 = vmatprep.subr.mxu0 0.0
            %2648 = vmatpush1.msra.mxu0 0.0
            %2649 = vmatprep.subr.mxu0 0.0
            %2650 = vmatpush1.msra.mxu0 0.0
            %2651 = vmatprep.subr.mxu0 0.0
            %2652 = vmatpush1.msra.mxu0 0.0
            %2653 = vmatprep.subr.mxu0 0.0
            %2654 = vmatpush1.msra.mxu0 0.0
            %2655 = vmatprep.mubr.f32.mxu0 0.0
            %2656 = vmatmul.mubr.f32.gmra.mrb[0].mxu0 %v2565
            %v2657 = vpop.f32.mrb[0].mxu0
            %v2658 = vadd.f32 %v336, %v2657
            %v2659 = vpop.f32.mrb[0].mxu0
            %2660 = vmatprep.mubr.f32.mxu0 0.0
            %2661 = vmatmul.mubr.f32.gmra.mrb[0].mxu0 %v2568
            %v2662 = vpop.f32.mrb[0].mxu0
            %v2663 = vadd.f32 %v336, %v2662
            %v2664 = vpop.f32.mrb[0].mxu0
            %2665 = vmatprep.mubr.f32.mxu0 0.0
            %2666 = vmatmul.mubr.f32.gmra.mrb[0].mxu0 %v2571
            %v2667 = vpop.f32.mrb[0].mxu0
            %v2668 = vadd.f32 %v336, %v2667
            %v2669 = vpop.f32.mrb[0].mxu0
            %2670 = vmatprep.mubr.f32.mxu0 0.0
            %2671 = vmatmul.mubr.f32.gmra.mrb[0].mxu0 %v2574
            %v2672 = vpop.f32.mrb[0].mxu0
            %v2673 = vadd.f32 %v336, %v2672
            %v2674 = vpop.f32.mrb[0].mxu0
            %2675 = vmatprep.mubr.f32.mxu0 0.0
            %2676 = vmatmul.mubr.f32.gmra.mrb[0].mxu0 %v2577
            %v2677 = vpop.f32.mrb[0].mxu0
            %v2678 = vadd.f32 %v336, %v2677
            %v2679 = vpop.f32.mrb[0].mxu0
            %2680 = vmatprep.mubr.f32.mxu0 0.0
            %2681 = vmatmul.mubr.f32.gmra.mrb[0].mxu0 %v2580
            %v2682 = vpop.f32.mrb[0].mxu0
            %v2683 = vadd.f32 %v336, %v2682
            %v2684 = vpop.f32.mrb[0].mxu0
            %2685 = vmatprep.mubr.f32.mxu0 0.0
            %2686 = vmatmul.mubr.f32.gmra.mrb[0].mxu0 %v2583
            %v2687 = vpop.f32.mrb[0].mxu0
            %v2688 = vadd.f32 %v336, %v2687
            %v2689 = vpop.f32.mrb[0].mxu0
            %2690 = vmatprep.mubr.f32.mxu0 0.0
            %2691 = vmatmul.mubr.f32.gmra.mrb[0].mxu0 %v2586
            %v2692 = vpop.f32.mrb[0].mxu0
            %v2693 = vadd.f32 %v336, %v2692
            %v2694 = vpop.f32.mrb[0].mxu0
            %2695 = vdwg.mxu0
            %v2696 = vmax.f32 %v2658, 0.0
            %v2697 = vmax.f32 %v2663, 0.0
            %v2698 = vmax.f32 %v2668, 0.0
            %v2699 = vmax.f32 %v2673, 0.0
            %v2700 = vmax.f32 %v2678, 0.0
            %v2701 = vmax.f32 %v2683, 0.0
            %v2702 = vmax.f32 %v2688, 0.0
            %v2703 = vmax.f32 %v2693, 0.0
            %s2704 = smul.u32 %s2541, 240
            %s2705 = sadd.s32 24, %s2704
            %s2706 = scalar_lea.vmem [#allocation4], %s2705
            %2707 = vst.msk [vmem:[%s2706 + $0x8] sm:$0xff] %vm232, %v2696
            %2708 = vst.msk [vmem:[%s2706 + $0x20] sm:$0xff] %vm232, %v2697
            %2709 = vst.msk [vmem:[%s2706 + $0x38] sm:$0xff] %vm232, %v2698
            %2710 = vst.msk [vmem:[%s2706 + $0x50] sm:$0xff] %vm232, %v2699
            %2711 = vst.msk [vmem:[%s2706 + $0x68] sm:$0xff] %vm232, %v2700
            %2712 = vst.msk [vmem:[%s2706 + $0x80] sm:$0xff] %vm232, %v2701
            %2713 = vst.msk [vmem:[%s2706 + $0x98] sm:$0xff] %vm232, %v2702
            %2714 = vst.msk [vmem:[%s2706 + $0xb0] sm:$0xff] %vm232, %v2703
          $region51: #{basic_block_forward.1} parent=44 // pred_fallthru
            _
          %p2715 = scmp.ge.s32.totalorder %s1337, 8
          // Predicated region
          $region60: #{basic_block_forward.1} parent=44 // pred_check
            %p2716 = pneg %p2715
          $region61: #{basic_block_forward.1} parent=44 // pred_check_branch
            %2718 = sbr.rel (%p2716) target = $region63
          $region62: #{basic_block_forward.1} parent=44 // pred_region
            %s2719 = sadd.s32 %s1332, 2
            %s2720 = sand.u32 %s2719, 3
            %s2721 = smul.u32 %s2720, 240
            %s2722 = sadd.s32 24, %s2721
            %s2723 = scalar_lea.vmem [#allocation4], %s2722
            %2724 = vst.msk [vmem:[%s2723 + $0x8] sm:$0xff] %vm232, 0.0
            %2725 = vst.msk [vmem:[%s2723 + $0x20] sm:$0xff] %vm232, 0.0
            %2726 = vst.msk [vmem:[%s2723 + $0x38] sm:$0xff] %vm232, 0.0
            %2727 = vst.msk [vmem:[%s2723 + $0x50] sm:$0xff] %vm232, 0.0
            %2728 = vst.msk [vmem:[%s2723 + $0x68] sm:$0xff] %vm232, 0.0
            %2729 = vst.msk [vmem:[%s2723 + $0x80] sm:$0xff] %vm232, 0.0
            %2730 = vst.msk [vmem:[%s2723 + $0x98] sm:$0xff] %vm232, 0.0
            %2731 = vst.msk [vmem:[%s2723 + $0xb0] sm:$0xff] %vm232, 0.0
          $region63: #{basic_block_forward.1} parent=44 // pred_fallthru
            _
          %s2732 = sand.u32 %s1332, 3
          %s2733 = smul.u32 %s2732, 240
          %s2734 = scalar_lea.vmem [#allocation4], %s2733
          %v2735 = vld [vmem:[%s2734 + $0x7] sm:$0xff]
          %v2736 = vld [vmem:[%s2734 + $0x1f] sm:$0xff]
          %v2737 = vld [vmem:[%s2734 + $0x37] sm:$0xff]
          %v2738 = vld [vmem:[%s2734 + $0x4f] sm:$0xff]
          %v2739 = vld [vmem:[%s2734 + $0x67] sm:$0xff]
          %v2740 = vld [vmem:[%s2734 + $0x7f] sm:$0xff]
          %v2741 = vld [vmem:[%s2734 + $0x97] sm:$0xff]
          %v2742 = vld [vmem:[%s2734 + $0xaf] sm:$0xff]
          %2743 = vst.msk [vmem:[#allocation3] sm:$0xff] %vm232, %v2735
          %2744 = vst.msk [vmem:[#allocation3 + $0x38] sm:$0xff] %vm232, %v2736
          %2745 = vst.msk [vmem:[#allocation3 + $0x70] sm:$0xff] %vm232, %v2737
          %2746 = vst.msk [vmem:[#allocation3 + $0xa8] sm:$0xff] %vm232, %v2738
          %2747 = vst.msk [vmem:[#allocation3 + $0xe0] sm:$0xff] %vm232, %v2739
          %2748 = vst.msk [vmem:[#allocation3 + $0x118] sm:$0xff] %vm232, %v2740
          %2749 = vst.msk [vmem:[#allocation3 + $0x150] sm:$0xff] %vm232, %v2741
          %2750 = vst.msk [vmem:[#allocation3 + $0x188] sm:$0xff] %vm232, %v2742
          %v2751 = vld [vmem:[%s2734 + $0x8] sm:$0xff]
          %v2752 = vld [vmem:[%s2734 + $0x20] sm:$0xff]
          %v2753 = vld [vmem:[%s2734 + $0x38] sm:$0xff]
          %v2754 = vld [vmem:[%s2734 + $0x50] sm:$0xff]
          %v2755 = vld [vmem:[%s2734 + $0x68] sm:$0xff]
          %v2756 = vld [vmem:[%s2734 + $0x80] sm:$0xff]
          %v2757 = vld [vmem:[%s2734 + $0x98] sm:$0xff]
          %v2758 = vld [vmem:[%s2734 + $0xb0] sm:$0xff]
          %2767 = vrot.lane.b32.xlu0 %v2751, 32
          %v2768 = vpop.permute.xlu0 %2767
          %2769 = vrot.lane.b32.xlu0 %v2752, 32
          %v2770 = vpop.permute.xlu0 %2769
          %2771 = vrot.lane.b32.xlu0 %v2753, 32
          %v2772 = vpop.permute.xlu0 %2771
          %2773 = vrot.lane.b32.xlu0 %v2754, 32
          %v2774 = vpop.permute.xlu0 %2773
          %2775 = vrot.lane.b32.xlu0 %v2755, 32
          %v2776 = vpop.permute.xlu0 %2775
          %2777 = vrot.lane.b32.xlu0 %v2756, 32
          %v2778 = vpop.permute.xlu0 %2777
          %2779 = vrot.lane.b32.xlu0 %v2757, 32
          %v2780 = vpop.permute.xlu0 %2779
          %2781 = vrot.lane.b32.xlu0 %v2758, 32
          %v2782 = vpop.permute.xlu0 %2781
          %vm2791 = vcmask 523520
          %2792 = vst.msk [vmem:[#allocation3] sm:$0xff] %vm2791, %v2768
          %2793 = vst.msk [vmem:[#allocation3 + $0x38] sm:$0xff] %vm2791, %v2770
          %2794 = vst.msk [vmem:[#allocation3 + $0x70] sm:$0xff] %vm2791, %v2772
          %2795 = vst.msk [vmem:[#allocation3 + $0xa8] sm:$0xff] %vm2791, %v2774
          %2796 = vst.msk [vmem:[#allocation3 + $0xe0] sm:$0xff] %vm2791, %v2776
          %2797 = vst.msk [vmem:[#allocation3 + $0x118] sm:$0xff] %vm2791, %v2778
          %2798 = vst.msk [vmem:[#allocation3 + $0x150] sm:$0xff] %vm2791, %v2780
          %2799 = vst.msk [vmem:[#allocation3 + $0x188] sm:$0xff] %vm2791, %v2782
          %v2800 = vld [vmem:[%s2734 + $0x9] sm:$0xff]
          %v2801 = vld [vmem:[%s2734 + $0x21] sm:$0xff]
          %v2802 = vld [vmem:[%s2734 + $0x39] sm:$0xff]
          %v2803 = vld [vmem:[%s2734 + $0x51] sm:$0xff]
          %v2804 = vld [vmem:[%s2734 + $0x69] sm:$0xff]
          %v2805 = vld [vmem:[%s2734 + $0x81] sm:$0xff]
          %v2806 = vld [vmem:[%s2734 + $0x99] sm:$0xff]
          %v2807 = vld [vmem:[%s2734 + $0xb1] sm:$0xff]
          %2816 = vrot.lane.b32.xlu0 %v2800, 64
          %v2817 = vpop.permute.xlu0 %2816
          %2818 = vrot.lane.b32.xlu0 %v2801, 64
          %v2819 = vpop.permute.xlu0 %2818
          %2820 = vrot.lane.b32.xlu0 %v2802, 64
          %v2821 = vpop.permute.xlu0 %2820
          %2822 = vrot.lane.b32.xlu0 %v2803, 64
          %v2823 = vpop.permute.xlu0 %2822
          %2824 = vrot.lane.b32.xlu0 %v2804, 64
          %v2825 = vpop.permute.xlu0 %2824
          %2826 = vrot.lane.b32.xlu0 %v2805, 64
          %v2827 = vpop.permute.xlu0 %2826
          %2828 = vrot.lane.b32.xlu0 %v2806, 64
          %v2829 = vpop.permute.xlu0 %2828
          %2830 = vrot.lane.b32.xlu0 %v2807, 64
          %v2831 = vpop.permute.xlu0 %2830
          %vm2840 = vcmask 785920
          %2841 = vst.msk [vmem:[#allocation3] sm:$0xff] %vm2840, %v2817
          %2842 = vst.msk [vmem:[#allocation3 + $0x38] sm:$0xff] %vm2840, %v2819
          %2843 = vst.msk [vmem:[#allocation3 + $0x70] sm:$0xff] %vm2840, %v2821
          %2844 = vst.msk [vmem:[#allocation3 + $0xa8] sm:$0xff] %vm2840, %v2823
          %2845 = vst.msk [vmem:[#allocation3 + $0xe0] sm:$0xff] %vm2840, %v2825
          %2846 = vst.msk [vmem:[#allocation3 + $0x118] sm:$0xff] %vm2840, %v2827
          %2847 = vst.msk [vmem:[#allocation3 + $0x150] sm:$0xff] %vm2840, %v2829
          %2848 = vst.msk [vmem:[#allocation3 + $0x188] sm:$0xff] %vm2840, %v2831
          %s2849 = sadd.s32 24, %s2733
          %s2850 = scalar_lea.vmem [#allocation4], %s2849
          %v2851 = vld [vmem:[%s2850 + $0x7] sm:$0xff]
          %v2852 = vld [vmem:[%s2850 + $0x1f] sm:$0xff]
          %v2853 = vld [vmem:[%s2850 + $0x37] sm:$0xff]
          %v2854 = vld [vmem:[%s2850 + $0x4f] sm:$0xff]
          %v2855 = vld [vmem:[%s2850 + $0x67] sm:$0xff]
          %v2856 = vld [vmem:[%s2850 + $0x7f] sm:$0xff]
          %v2857 = vld [vmem:[%s2850 + $0x97] sm:$0xff]
          %v2858 = vld [vmem:[%s2850 + $0xaf] sm:$0xff]
          %2867 = vrot.lane.b32.xlu0 %v2851, 96
          %v2868 = vpop.permute.xlu0 %2867
          %2869 = vrot.lane.b32.xlu0 %v2852, 96
          %v2870 = vpop.permute.xlu0 %2869
          %2871 = vrot.lane.b32.xlu0 %v2853, 96
          %v2872 = vpop.permute.xlu0 %2871
          %2873 = vrot.lane.b32.xlu0 %v2854, 96
          %v2874 = vpop.permute.xlu0 %2873
          %2875 = vrot.lane.b32.xlu0 %v2855, 96
          %v2876 = vpop.permute.xlu0 %2875
          %2877 = vrot.lane.b32.xlu0 %v2856, 96
          %v2878 = vpop.permute.xlu0 %2877
          %2879 = vrot.lane.b32.xlu0 %v2857, 96
          %v2880 = vpop.permute.xlu0 %2879
          %2881 = vrot.lane.b32.xlu0 %v2858, 96
          %v2882 = vpop.permute.xlu0 %2881
          %vm2891 = vcmask 1048320
          %2892 = vst.msk [vmem:[#allocation3] sm:$0xff] %vm2891, %v2868
          %2893 = vst.msk [vmem:[#allocation3 + $0x38] sm:$0xff] %vm2891, %v2870
          %2894 = vst.msk [vmem:[#allocation3 + $0x70] sm:$0xff] %vm2891, %v2872
          %2895 = vst.msk [vmem:[#allocation3 + $0xa8] sm:$0xff] %vm2891, %v2874
          %2896 = vst.msk [vmem:[#allocation3 + $0xe0] sm:$0xff] %vm2891, %v2876
          %2897 = vst.msk [vmem:[#allocation3 + $0x118] sm:$0xff] %vm2891, %v2878
          %2898 = vst.msk [vmem:[#allocation3 + $0x150] sm:$0xff] %vm2891, %v2880
          %2899 = vst.msk [vmem:[#allocation3 + $0x188] sm:$0xff] %vm2891, %v2882
          %v2900 = vld [vmem:[%s2850 + $0x8] sm:$0xff]
          %v2901 = vld [vmem:[%s2850 + $0x20] sm:$0xff]
          %v2902 = vld [vmem:[%s2850 + $0x38] sm:$0xff]
          %v2903 = vld [vmem:[%s2850 + $0x50] sm:$0xff]
          %v2904 = vld [vmem:[%s2850 + $0x68] sm:$0xff]
          %v2905 = vld [vmem:[%s2850 + $0x80] sm:$0xff]
          %v2906 = vld [vmem:[%s2850 + $0x98] sm:$0xff]
          %v2907 = vld [vmem:[%s2850 + $0xb0] sm:$0xff]
          %2908 = vst.msk [vmem:[#allocation3 + $0x8] sm:$0xff] %vm232, %v2900
          %2909 = vst.msk [vmem:[#allocation3 + $0x40] sm:$0xff] %vm232, %v2901
          %2910 = vst.msk [vmem:[#allocation3 + $0x78] sm:$0xff] %vm232, %v2902
          %2911 = vst.msk [vmem:[#allocation3 + $0xb0] sm:$0xff] %vm232, %v2903
          %2912 = vst.msk [vmem:[#allocation3 + $0xe8] sm:$0xff] %vm232, %v2904
          %2913 = vst.msk [vmem:[#allocation3 + $0x120] sm:$0xff] %vm232, %v2905
          %2914 = vst.msk [vmem:[#allocation3 + $0x158] sm:$0xff] %vm232, %v2906
          %2915 = vst.msk [vmem:[#allocation3 + $0x190] sm:$0xff] %vm232, %v2907
          %v2916 = vld [vmem:[%s2850 + $0x9] sm:$0xff]
          %v2917 = vld [vmem:[%s2850 + $0x21] sm:$0xff]
          %v2918 = vld [vmem:[%s2850 + $0x39] sm:$0xff]
          %v2919 = vld [vmem:[%s2850 + $0x51] sm:$0xff]
          %v2920 = vld [vmem:[%s2850 + $0x69] sm:$0xff]
          %v2921 = vld [vmem:[%s2850 + $0x81] sm:$0xff]
          %v2922 = vld [vmem:[%s2850 + $0x99] sm:$0xff]
          %v2923 = vld [vmem:[%s2850 + $0xb1] sm:$0xff]
          %2932 = vrot.lane.b32.xlu0 %v2916, 32
          %v2933 = vpop.permute.xlu0 %2932
          %2934 = vrot.lane.b32.xlu0 %v2917, 32
          %v2935 = vpop.permute.xlu0 %2934
          %2936 = vrot.lane.b32.xlu0 %v2918, 32
          %v2937 = vpop.permute.xlu0 %2936
          %2938 = vrot.lane.b32.xlu0 %v2919, 32
          %v2939 = vpop.permute.xlu0 %2938
          %2940 = vrot.lane.b32.xlu0 %v2920, 32
          %v2941 = vpop.permute.xlu0 %2940
          %2942 = vrot.lane.b32.xlu0 %v2921, 32
          %v2943 = vpop.permute.xlu0 %2942
          %2944 = vrot.lane.b32.xlu0 %v2922, 32
          %v2945 = vpop.permute.xlu0 %2944
          %2946 = vrot.lane.b32.xlu0 %v2923, 32
          %v2947 = vpop.permute.xlu0 %2946
          %2956 = vst.msk [vmem:[#allocation3 + $0x8] sm:$0xff] %vm2791, %v2933
          %2957 = vst.msk [vmem:[#allocation3 + $0x40] sm:$0xff] %vm2791, %v2935
          %2958 = vst.msk [vmem:[#allocation3 + $0x78] sm:$0xff] %vm2791, %v2937
          %2959 = vst.msk [vmem:[#allocation3 + $0xb0] sm:$0xff] %vm2791, %v2939
          %2960 = vst.msk [vmem:[#allocation3 + $0xe8] sm:$0xff] %vm2791, %v2941
          %2961 = vst.msk [vmem:[#allocation3 + $0x120] sm:$0xff] %vm2791, %v2943
          %2962 = vst.msk [vmem:[#allocation3 + $0x158] sm:$0xff] %vm2791, %v2945
          %2963 = vst.msk [vmem:[#allocation3 + $0x190] sm:$0xff] %vm2791, %v2947
          %s2964 = sadd.s32 48, %s2733
          %s2965 = scalar_lea.vmem [#allocation4], %s2964
          %v2966 = vld [vmem:[%s2965 + $0x7] sm:$0xff]
          %v2967 = vld [vmem:[%s2965 + $0x1f] sm:$0xff]
          %v2968 = vld [vmem:[%s2965 + $0x37] sm:$0xff]
          %v2969 = vld [vmem:[%s2965 + $0x4f] sm:$0xff]
          %v2970 = vld [vmem:[%s2965 + $0x67] sm:$0xff]
          %v2971 = vld [vmem:[%s2965 + $0x7f] sm:$0xff]
          %v2972 = vld [vmem:[%s2965 + $0x97] sm:$0xff]
          %v2973 = vld [vmem:[%s2965 + $0xaf] sm:$0xff]
          %2982 = vrot.lane.b32.xlu0 %v2966, 64
          %v2983 = vpop.permute.xlu0 %2982
          %2984 = vrot.lane.b32.xlu0 %v2967, 64
          %v2985 = vpop.permute.xlu0 %2984
          %2986 = vrot.lane.b32.xlu0 %v2968, 64
          %v2987 = vpop.permute.xlu0 %2986
          %2988 = vrot.lane.b32.xlu0 %v2969, 64
          %v2989 = vpop.permute.xlu0 %2988
          %2990 = vrot.lane.b32.xlu0 %v2970, 64
          %v2991 = vpop.permute.xlu0 %2990
          %2992 = vrot.lane.b32.xlu0 %v2971, 64
          %v2993 = vpop.permute.xlu0 %2992
          %2994 = vrot.lane.b32.xlu0 %v2972, 64
          %v2995 = vpop.permute.xlu0 %2994
          %2996 = vrot.lane.b32.xlu0 %v2973, 64
          %v2997 = vpop.permute.xlu0 %2996
          %3006 = vst.msk [vmem:[#allocation3 + $0x8] sm:$0xff] %vm2840, %v2983
          %3007 = vst.msk [vmem:[#allocation3 + $0x40] sm:$0xff] %vm2840, %v2985
          %3008 = vst.msk [vmem:[#allocation3 + $0x78] sm:$0xff] %vm2840, %v2987
          %3009 = vst.msk [vmem:[#allocation3 + $0xb0] sm:$0xff] %vm2840, %v2989
          %3010 = vst.msk [vmem:[#allocation3 + $0xe8] sm:$0xff] %vm2840, %v2991
          %3011 = vst.msk [vmem:[#allocation3 + $0x120] sm:$0xff] %vm2840, %v2993
          %3012 = vst.msk [vmem:[#allocation3 + $0x158] sm:$0xff] %vm2840, %v2995
          %3013 = vst.msk [vmem:[#allocation3 + $0x190] sm:$0xff] %vm2840, %v2997
          %v3014 = vld [vmem:[%s2965 + $0x8] sm:$0xff]
          %v3015 = vld [vmem:[%s2965 + $0x20] sm:$0xff]
          %v3016 = vld [vmem:[%s2965 + $0x38] sm:$0xff]
          %v3017 = vld [vmem:[%s2965 + $0x50] sm:$0xff]
          %v3018 = vld [vmem:[%s2965 + $0x68] sm:$0xff]
          %v3019 = vld [vmem:[%s2965 + $0x80] sm:$0xff]
          %v3020 = vld [vmem:[%s2965 + $0x98] sm:$0xff]
          %v3021 = vld [vmem:[%s2965 + $0xb0] sm:$0xff]
          %3030 = vrot.lane.b32.xlu0 %v3014, 96
          %v3031 = vpop.permute.xlu0 %3030
          %3032 = vrot.lane.b32.xlu0 %v3015, 96
          %v3033 = vpop.permute.xlu0 %3032
          %3034 = vrot.lane.b32.xlu0 %v3016, 96
          %v3035 = vpop.permute.xlu0 %3034
          %3036 = vrot.lane.b32.xlu0 %v3017, 96
          %v3037 = vpop.permute.xlu0 %3036
          %3038 = vrot.lane.b32.xlu0 %v3018, 96
          %v3039 = vpop.permute.xlu0 %3038
          %3040 = vrot.lane.b32.xlu0 %v3019, 96
          %v3041 = vpop.permute.xlu0 %3040
          %3042 = vrot.lane.b32.xlu0 %v3020, 96
          %v3043 = vpop.permute.xlu0 %3042
          %3044 = vrot.lane.b32.xlu0 %v3021, 96
          %v3045 = vpop.permute.xlu0 %3044
          %3054 = vst.msk [vmem:[#allocation3 + $0x8] sm:$0xff] %vm2891, %v3031
          %3055 = vst.msk [vmem:[#allocation3 + $0x40] sm:$0xff] %vm2891, %v3033
          %3056 = vst.msk [vmem:[#allocation3 + $0x78] sm:$0xff] %vm2891, %v3035
          %3057 = vst.msk [vmem:[#allocation3 + $0xb0] sm:$0xff] %vm2891, %v3037
          %3058 = vst.msk [vmem:[#allocation3 + $0xe8] sm:$0xff] %vm2891, %v3039
          %3059 = vst.msk [vmem:[#allocation3 + $0x120] sm:$0xff] %vm2891, %v3041
          %3060 = vst.msk [vmem:[#allocation3 + $0x158] sm:$0xff] %vm2891, %v3043
          %3061 = vst.msk [vmem:[#allocation3 + $0x190] sm:$0xff] %vm2891, %v3045
          %v3062 = vld [vmem:[%s2965 + $0x9] sm:$0xff]
          %v3063 = vld [vmem:[%s2965 + $0x21] sm:$0xff]
          %v3064 = vld [vmem:[%s2965 + $0x39] sm:$0xff]
          %v3065 = vld [vmem:[%s2965 + $0x51] sm:$0xff]
          %v3066 = vld [vmem:[%s2965 + $0x69] sm:$0xff]
          %v3067 = vld [vmem:[%s2965 + $0x81] sm:$0xff]
          %v3068 = vld [vmem:[%s2965 + $0x99] sm:$0xff]
          %v3069 = vld [vmem:[%s2965 + $0xb1] sm:$0xff]
          %3070 = vst.msk [vmem:[#allocation3 + $0x10] sm:$0xff] %vm232, %v3062
          %3071 = vst.msk [vmem:[#allocation3 + $0x48] sm:$0xff] %vm232, %v3063
          %3072 = vst.msk [vmem:[#allocation3 + $0x80] sm:$0xff] %vm232, %v3064
          %3073 = vst.msk [vmem:[#allocation3 + $0xb8] sm:$0xff] %vm232, %v3065
          %3074 = vst.msk [vmem:[#allocation3 + $0xf0] sm:$0xff] %vm232, %v3066
          %3075 = vst.msk [vmem:[#allocation3 + $0x128] sm:$0xff] %vm232, %v3067
          %3076 = vst.msk [vmem:[#allocation3 + $0x160] sm:$0xff] %vm232, %v3068
          %3077 = vst.msk [vmem:[#allocation3 + $0x198] sm:$0xff] %vm232, %v3069
          %s3078 = sand.u32 %s1337, 3
          %s3079 = smul.u32 %s3078, 240
          %s3080 = scalar_lea.vmem [#allocation4], %s3079
          %v3081 = vld [vmem:[%s3080 + $0x7] sm:$0xff]
          %v3082 = vld [vmem:[%s3080 + $0x1f] sm:$0xff]
          %v3083 = vld [vmem:[%s3080 + $0x37] sm:$0xff]
          %v3084 = vld [vmem:[%s3080 + $0x4f] sm:$0xff]
          %v3085 = vld [vmem:[%s3080 + $0x67] sm:$0xff]
          %v3086 = vld [vmem:[%s3080 + $0x7f] sm:$0xff]
          %v3087 = vld [vmem:[%s3080 + $0x97] sm:$0xff]
          %v3088 = vld [vmem:[%s3080 + $0xaf] sm:$0xff]
          %3097 = vrot.lane.b32.xlu0 %v3081, 32
          %v3098 = vpop.permute.xlu0 %3097
          %3099 = vrot.lane.b32.xlu0 %v3082, 32
          %v3100 = vpop.permute.xlu0 %3099
          %3101 = vrot.lane.b32.xlu0 %v3083, 32
          %v3102 = vpop.permute.xlu0 %3101
          %3103 = vrot.lane.b32.xlu0 %v3084, 32
          %v3104 = vpop.permute.xlu0 %3103
          %3105 = vrot.lane.b32.xlu0 %v3085, 32
          %v3106 = vpop.permute.xlu0 %3105
          %3107 = vrot.lane.b32.xlu0 %v3086, 32
          %v3108 = vpop.permute.xlu0 %3107
          %3109 = vrot.lane.b32.xlu0 %v3087, 32
          %v3110 = vpop.permute.xlu0 %3109
          %3111 = vrot.lane.b32.xlu0 %v3088, 32
          %v3112 = vpop.permute.xlu0 %3111
          %3121 = vst.msk [vmem:[#allocation3 + $0x10] sm:$0xff] %vm2791, %v3098
          %3122 = vst.msk [vmem:[#allocation3 + $0x48] sm:$0xff] %vm2791, %v3100
          %3123 = vst.msk [vmem:[#allocation3 + $0x80] sm:$0xff] %vm2791, %v3102
          %3124 = vst.msk [vmem:[#allocation3 + $0xb8] sm:$0xff] %vm2791, %v3104
          %3125 = vst.msk [vmem:[#allocation3 + $0xf0] sm:$0xff] %vm2791, %v3106
          %3126 = vst.msk [vmem:[#allocation3 + $0x128] sm:$0xff] %vm2791, %v3108
          %3127 = vst.msk [vmem:[#allocation3 + $0x160] sm:$0xff] %vm2791, %v3110
          %3128 = vst.msk [vmem:[#allocation3 + $0x198] sm:$0xff] %vm2791, %v3112
          %v3129 = vld [vmem:[%s3080 + $0x8] sm:$0xff]
          %v3130 = vld [vmem:[%s3080 + $0x20] sm:$0xff]
          %v3131 = vld [vmem:[%s3080 + $0x38] sm:$0xff]
          %v3132 = vld [vmem:[%s3080 + $0x50] sm:$0xff]
          %v3133 = vld [vmem:[%s3080 + $0x68] sm:$0xff]
          %v3134 = vld [vmem:[%s3080 + $0x80] sm:$0xff]
          %v3135 = vld [vmem:[%s3080 + $0x98] sm:$0xff]
          %v3136 = vld [vmem:[%s3080 + $0xb0] sm:$0xff]
          %3145 = vrot.lane.b32.xlu0 %v3129, 64
          %v3146 = vpop.permute.xlu0 %3145
          %3147 = vrot.lane.b32.xlu0 %v3130, 64
          %v3148 = vpop.permute.xlu0 %3147
          %3149 = vrot.lane.b32.xlu0 %v3131, 64
          %v3150 = vpop.permute.xlu0 %3149
          %3151 = vrot.lane.b32.xlu0 %v3132, 64
          %v3152 = vpop.permute.xlu0 %3151
          %3153 = vrot.lane.b32.xlu0 %v3133, 64
          %v3154 = vpop.permute.xlu0 %3153
          %3155 = vrot.lane.b32.xlu0 %v3134, 64
          %v3156 = vpop.permute.xlu0 %3155
          %3157 = vrot.lane.b32.xlu0 %v3135, 64
          %v3158 = vpop.permute.xlu0 %3157
          %3159 = vrot.lane.b32.xlu0 %v3136, 64
          %v3160 = vpop.permute.xlu0 %3159
          %3169 = vst.msk [vmem:[#allocation3 + $0x10] sm:$0xff] %vm2840, %v3146
          %3170 = vst.msk [vmem:[#allocation3 + $0x48] sm:$0xff] %vm2840, %v3148
          %3171 = vst.msk [vmem:[#allocation3 + $0x80] sm:$0xff] %vm2840, %v3150
          %3172 = vst.msk [vmem:[#allocation3 + $0xb8] sm:$0xff] %vm2840, %v3152
          %3173 = vst.msk [vmem:[#allocation3 + $0xf0] sm:$0xff] %vm2840, %v3154
          %3174 = vst.msk [vmem:[#allocation3 + $0x128] sm:$0xff] %vm2840, %v3156
          %3175 = vst.msk [vmem:[#allocation3 + $0x160] sm:$0xff] %vm2840, %v3158
          %3176 = vst.msk [vmem:[#allocation3 + $0x198] sm:$0xff] %vm2840, %v3160
          %v3177 = vld [vmem:[%s3080 + $0x9] sm:$0xff]
          %v3178 = vld [vmem:[%s3080 + $0x21] sm:$0xff]
          %v3179 = vld [vmem:[%s3080 + $0x39] sm:$0xff]
          %v3180 = vld [vmem:[%s3080 + $0x51] sm:$0xff]
          %v3181 = vld [vmem:[%s3080 + $0x69] sm:$0xff]
          %v3182 = vld [vmem:[%s3080 + $0x81] sm:$0xff]
          %v3183 = vld [vmem:[%s3080 + $0x99] sm:$0xff]
          %v3184 = vld [vmem:[%s3080 + $0xb1] sm:$0xff]
          %3193 = vrot.lane.b32.xlu0 %v3177, 96
          %v3194 = vpop.permute.xlu0 %3193
          %3195 = vrot.lane.b32.xlu0 %v3178, 96
          %v3196 = vpop.permute.xlu0 %3195
          %3197 = vrot.lane.b32.xlu0 %v3179, 96
          %v3198 = vpop.permute.xlu0 %3197
          %3199 = vrot.lane.b32.xlu0 %v3180, 96
          %v3200 = vpop.permute.xlu0 %3199
          %3201 = vrot.lane.b32.xlu0 %v3181, 96
          %v3202 = vpop.permute.xlu0 %3201
          %3203 = vrot.lane.b32.xlu0 %v3182, 96
          %v3204 = vpop.permute.xlu0 %3203
          %3205 = vrot.lane.b32.xlu0 %v3183, 96
          %v3206 = vpop.permute.xlu0 %3205
          %3207 = vrot.lane.b32.xlu0 %v3184, 96
          %v3208 = vpop.permute.xlu0 %3207
          %3217 = vst.msk [vmem:[#allocation3 + $0x10] sm:$0xff] %vm2891, %v3194
          %3218 = vst.msk [vmem:[#allocation3 + $0x48] sm:$0xff] %vm2891, %v3196
          %3219 = vst.msk [vmem:[#allocation3 + $0x80] sm:$0xff] %vm2891, %v3198
          %3220 = vst.msk [vmem:[#allocation3 + $0xb8] sm:$0xff] %vm2891, %v3200
          %3221 = vst.msk [vmem:[#allocation3 + $0xf0] sm:$0xff] %vm2891, %v3202
          %3222 = vst.msk [vmem:[#allocation3 + $0x128] sm:$0xff] %vm2891, %v3204
          %3223 = vst.msk [vmem:[#allocation3 + $0x160] sm:$0xff] %vm2891, %v3206
          %3224 = vst.msk [vmem:[#allocation3 + $0x198] sm:$0xff] %vm2891, %v3208
          %s3225 = sadd.s32 24, %s3079
          %s3226 = scalar_lea.vmem [#allocation4], %s3225
          %v3227 = vld [vmem:[%s3226 + $0x7] sm:$0xff]
          %v3228 = vld [vmem:[%s3226 + $0x1f] sm:$0xff]
          %v3229 = vld [vmem:[%s3226 + $0x37] sm:$0xff]
          %v3230 = vld [vmem:[%s3226 + $0x4f] sm:$0xff]
          %v3231 = vld [vmem:[%s3226 + $0x67] sm:$0xff]
          %v3232 = vld [vmem:[%s3226 + $0x7f] sm:$0xff]
          %v3233 = vld [vmem:[%s3226 + $0x97] sm:$0xff]
          %v3234 = vld [vmem:[%s3226 + $0xaf] sm:$0xff]
          %3235 = vst.msk [vmem:[#allocation3 + $0x18] sm:$0xff] %vm232, %v3227
          %3236 = vst.msk [vmem:[#allocation3 + $0x50] sm:$0xff] %vm232, %v3228
          %3237 = vst.msk [vmem:[#allocation3 + $0x88] sm:$0xff] %vm232, %v3229
          %3238 = vst.msk [vmem:[#allocation3 + $0xc0] sm:$0xff] %vm232, %v3230
          %3239 = vst.msk [vmem:[#allocation3 + $0xf8] sm:$0xff] %vm232, %v3231
          %3240 = vst.msk [vmem:[#allocation3 + $0x130] sm:$0xff] %vm232, %v3232
          %3241 = vst.msk [vmem:[#allocation3 + $0x168] sm:$0xff] %vm232, %v3233
          %3242 = vst.msk [vmem:[#allocation3 + $0x1a0] sm:$0xff] %vm232, %v3234
          %v3243 = vld [vmem:[%s3226 + $0x8] sm:$0xff]
          %v3244 = vld [vmem:[%s3226 + $0x20] sm:$0xff]
          %v3245 = vld [vmem:[%s3226 + $0x38] sm:$0xff]
          %v3246 = vld [vmem:[%s3226 + $0x50] sm:$0xff]
          %v3247 = vld [vmem:[%s3226 + $0x68] sm:$0xff]
          %v3248 = vld [vmem:[%s3226 + $0x80] sm:$0xff]
          %v3249 = vld [vmem:[%s3226 + $0x98] sm:$0xff]
          %v3250 = vld [vmem:[%s3226 + $0xb0] sm:$0xff]
          %3259 = vrot.lane.b32.xlu0 %v3243, 32
          %v3260 = vpop.permute.xlu0 %3259
          %3261 = vrot.lane.b32.xlu0 %v3244, 32
          %v3262 = vpop.permute.xlu0 %3261
          %3263 = vrot.lane.b32.xlu0 %v3245, 32
          %v3264 = vpop.permute.xlu0 %3263
          %3265 = vrot.lane.b32.xlu0 %v3246, 32
          %v3266 = vpop.permute.xlu0 %3265
          %3267 = vrot.lane.b32.xlu0 %v3247, 32
          %v3268 = vpop.permute.xlu0 %3267
          %3269 = vrot.lane.b32.xlu0 %v3248, 32
          %v3270 = vpop.permute.xlu0 %3269
          %3271 = vrot.lane.b32.xlu0 %v3249, 32
          %v3272 = vpop.permute.xlu0 %3271
          %3273 = vrot.lane.b32.xlu0 %v3250, 32
          %v3274 = vpop.permute.xlu0 %3273
          %3283 = vst.msk [vmem:[#allocation3 + $0x18] sm:$0xff] %vm2791, %v3260
          %3284 = vst.msk [vmem:[#allocation3 + $0x50] sm:$0xff] %vm2791, %v3262
          %3285 = vst.msk [vmem:[#allocation3 + $0x88] sm:$0xff] %vm2791, %v3264
          %3286 = vst.msk [vmem:[#allocation3 + $0xc0] sm:$0xff] %vm2791, %v3266
          %3287 = vst.msk [vmem:[#allocation3 + $0xf8] sm:$0xff] %vm2791, %v3268
          %3288 = vst.msk [vmem:[#allocation3 + $0x130] sm:$0xff] %vm2791, %v3270
          %3289 = vst.msk [vmem:[#allocation3 + $0x168] sm:$0xff] %vm2791, %v3272
          %3290 = vst.msk [vmem:[#allocation3 + $0x1a0] sm:$0xff] %vm2791, %v3274
          %v3291 = vld [vmem:[%s3226 + $0x9] sm:$0xff]
          %v3292 = vld [vmem:[%s3226 + $0x21] sm:$0xff]
          %v3293 = vld [vmem:[%s3226 + $0x39] sm:$0xff]
          %v3294 = vld [vmem:[%s3226 + $0x51] sm:$0xff]
          %v3295 = vld [vmem:[%s3226 + $0x69] sm:$0xff]
          %v3296 = vld [vmem:[%s3226 + $0x81] sm:$0xff]
          %v3297 = vld [vmem:[%s3226 + $0x99] sm:$0xff]
          %v3298 = vld [vmem:[%s3226 + $0xb1] sm:$0xff]
          %3307 = vrot.lane.b32.xlu0 %v3291, 64
          %v3308 = vpop.permute.xlu0 %3307
          %3309 = vrot.lane.b32.xlu0 %v3292, 64
          %v3310 = vpop.permute.xlu0 %3309
          %3311 = vrot.lane.b32.xlu0 %v3293, 64
          %v3312 = vpop.permute.xlu0 %3311
          %3313 = vrot.lane.b32.xlu0 %v3294, 64
          %v3314 = vpop.permute.xlu0 %3313
          %3315 = vrot.lane.b32.xlu0 %v3295, 64
          %v3316 = vpop.permute.xlu0 %3315
          %3317 = vrot.lane.b32.xlu0 %v3296, 64
          %v3318 = vpop.permute.xlu0 %3317
          %3319 = vrot.lane.b32.xlu0 %v3297, 64
          %v3320 = vpop.permute.xlu0 %3319
          %3321 = vrot.lane.b32.xlu0 %v3298, 64
          %v3322 = vpop.permute.xlu0 %3321
          %3331 = vst.msk [vmem:[#allocation3 + $0x18] sm:$0xff] %vm2840, %v3308
          %3332 = vst.msk [vmem:[#allocation3 + $0x50] sm:$0xff] %vm2840, %v3310
          %3333 = vst.msk [vmem:[#allocation3 + $0x88] sm:$0xff] %vm2840, %v3312
          %3334 = vst.msk [vmem:[#allocation3 + $0xc0] sm:$0xff] %vm2840, %v3314
          %3335 = vst.msk [vmem:[#allocation3 + $0xf8] sm:$0xff] %vm2840, %v3316
          %3336 = vst.msk [vmem:[#allocation3 + $0x130] sm:$0xff] %vm2840, %v3318
          %3337 = vst.msk [vmem:[#allocation3 + $0x168] sm:$0xff] %vm2840, %v3320
          %3338 = vst.msk [vmem:[#allocation3 + $0x1a0] sm:$0xff] %vm2840, %v3322
          %s3339 = sadd.s32 48, %s3079
          %s3340 = scalar_lea.vmem [#allocation4], %s3339
          %v3341 = vld [vmem:[%s3340 + $0x7] sm:$0xff]
          %v3342 = vld [vmem:[%s3340 + $0x1f] sm:$0xff]
          %v3343 = vld [vmem:[%s3340 + $0x37] sm:$0xff]
          %v3344 = vld [vmem:[%s3340 + $0x4f] sm:$0xff]
          %v3345 = vld [vmem:[%s3340 + $0x67] sm:$0xff]
          %v3346 = vld [vmem:[%s3340 + $0x7f] sm:$0xff]
          %v3347 = vld [vmem:[%s3340 + $0x97] sm:$0xff]
          %v3348 = vld [vmem:[%s3340 + $0xaf] sm:$0xff]
          %3357 = vrot.lane.b32.xlu0 %v3341, 96
          %v3358 = vpop.permute.xlu0 %3357
          %3359 = vrot.lane.b32.xlu0 %v3342, 96
          %v3360 = vpop.permute.xlu0 %3359
          %3361 = vrot.lane.b32.xlu0 %v3343, 96
          %v3362 = vpop.permute.xlu0 %3361
          %3363 = vrot.lane.b32.xlu0 %v3344, 96
          %v3364 = vpop.permute.xlu0 %3363
          %3365 = vrot.lane.b32.xlu0 %v3345, 96
          %v3366 = vpop.permute.xlu0 %3365
          %3367 = vrot.lane.b32.xlu0 %v3346, 96
          %v3368 = vpop.permute.xlu0 %3367
          %3369 = vrot.lane.b32.xlu0 %v3347, 96
          %v3370 = vpop.permute.xlu0 %3369
          %3371 = vrot.lane.b32.xlu0 %v3348, 96
          %v3372 = vpop.permute.xlu0 %3371
          %3381 = vst.msk [vmem:[#allocation3 + $0x18] sm:$0xff] %vm2891, %v3358
          %3382 = vst.msk [vmem:[#allocation3 + $0x50] sm:$0xff] %vm2891, %v3360
          %3383 = vst.msk [vmem:[#allocation3 + $0x88] sm:$0xff] %vm2891, %v3362
          %3384 = vst.msk [vmem:[#allocation3 + $0xc0] sm:$0xff] %vm2891, %v3364
          %3385 = vst.msk [vmem:[#allocation3 + $0xf8] sm:$0xff] %vm2891, %v3366
          %3386 = vst.msk [vmem:[#allocation3 + $0x130] sm:$0xff] %vm2891, %v3368
          %3387 = vst.msk [vmem:[#allocation3 + $0x168] sm:$0xff] %vm2891, %v3370
          %3388 = vst.msk [vmem:[#allocation3 + $0x1a0] sm:$0xff] %vm2891, %v3372
          %v3389 = vld [vmem:[%s3340 + $0x8] sm:$0xff]
          %v3390 = vld [vmem:[%s3340 + $0x20] sm:$0xff]
          %v3391 = vld [vmem:[%s3340 + $0x38] sm:$0xff]
          %v3392 = vld [vmem:[%s3340 + $0x50] sm:$0xff]
          %v3393 = vld [vmem:[%s3340 + $0x68] sm:$0xff]
          %v3394 = vld [vmem:[%s3340 + $0x80] sm:$0xff]
          %v3395 = vld [vmem:[%s3340 + $0x98] sm:$0xff]
          %v3396 = vld [vmem:[%s3340 + $0xb0] sm:$0xff]
          %3397 = vst.msk [vmem:[#allocation3 + $0x20] sm:$0xff] %vm232, %v3389
          %3398 = vst.msk [vmem:[#allocation3 + $0x58] sm:$0xff] %vm232, %v3390
          %3399 = vst.msk [vmem:[#allocation3 + $0x90] sm:$0xff] %vm232, %v3391
          %3400 = vst.msk [vmem:[#allocation3 + $0xc8] sm:$0xff] %vm232, %v3392
          %3401 = vst.msk [vmem:[#allocation3 + $0x100] sm:$0xff] %vm232, %v3393
          %3402 = vst.msk [vmem:[#allocation3 + $0x138] sm:$0xff] %vm232, %v3394
          %3403 = vst.msk [vmem:[#allocation3 + $0x170] sm:$0xff] %vm232, %v3395
          %3404 = vst.msk [vmem:[#allocation3 + $0x1a8] sm:$0xff] %vm232, %v3396
          %v3405 = vld [vmem:[%s3340 + $0x9] sm:$0xff]
          %v3406 = vld [vmem:[%s3340 + $0x21] sm:$0xff]
          %v3407 = vld [vmem:[%s3340 + $0x39] sm:$0xff]
          %v3408 = vld [vmem:[%s3340 + $0x51] sm:$0xff]
          %v3409 = vld [vmem:[%s3340 + $0x69] sm:$0xff]
          %v3410 = vld [vmem:[%s3340 + $0x81] sm:$0xff]
          %v3411 = vld [vmem:[%s3340 + $0x99] sm:$0xff]
          %v3412 = vld [vmem:[%s3340 + $0xb1] sm:$0xff]
          %3421 = vrot.lane.b32.xlu0 %v3405, 32
          %v3422 = vpop.permute.xlu0 %3421
          %3423 = vrot.lane.b32.xlu0 %v3406, 32
          %v3424 = vpop.permute.xlu0 %3423
          %3425 = vrot.lane.b32.xlu0 %v3407, 32
          %v3426 = vpop.permute.xlu0 %3425
          %3427 = vrot.lane.b32.xlu0 %v3408, 32
          %v3428 = vpop.permute.xlu0 %3427
          %3429 = vrot.lane.b32.xlu0 %v3409, 32
          %v3430 = vpop.permute.xlu0 %3429
          %3431 = vrot.lane.b32.xlu0 %v3410, 32
          %v3432 = vpop.permute.xlu0 %3431
          %3433 = vrot.lane.b32.xlu0 %v3411, 32
          %v3434 = vpop.permute.xlu0 %3433
          %3435 = vrot.lane.b32.xlu0 %v3412, 32
          %v3436 = vpop.permute.xlu0 %3435
          %3445 = vst.msk [vmem:[#allocation3 + $0x20] sm:$0xff] %vm2791, %v3422
          %3446 = vst.msk [vmem:[#allocation3 + $0x58] sm:$0xff] %vm2791, %v3424
          %3447 = vst.msk [vmem:[#allocation3 + $0x90] sm:$0xff] %vm2791, %v3426
          %3448 = vst.msk [vmem:[#allocation3 + $0xc8] sm:$0xff] %vm2791, %v3428
          %3449 = vst.msk [vmem:[#allocation3 + $0x100] sm:$0xff] %vm2791, %v3430
          %3450 = vst.msk [vmem:[#allocation3 + $0x138] sm:$0xff] %vm2791, %v3432
          %3451 = vst.msk [vmem:[#allocation3 + $0x170] sm:$0xff] %vm2791, %v3434
          %3452 = vst.msk [vmem:[#allocation3 + $0x1a8] sm:$0xff] %vm2791, %v3436
          %s3453 = sadd.s32 %s1332, 2
          %s3454 = sand.u32 %s3453, 3
          %s3455 = smul.u32 %s3454, 240
          %s3456 = scalar_lea.vmem [#allocation4], %s3455
          %v3457 = vld [vmem:[%s3456 + $0x7] sm:$0xff]
          %v3458 = vld [vmem:[%s3456 + $0x1f] sm:$0xff]
          %v3459 = vld [vmem:[%s3456 + $0x37] sm:$0xff]
          %v3460 = vld [vmem:[%s3456 + $0x4f] sm:$0xff]
          %v3461 = vld [vmem:[%s3456 + $0x67] sm:$0xff]
          %v3462 = vld [vmem:[%s3456 + $0x7f] sm:$0xff]
          %v3463 = vld [vmem:[%s3456 + $0x97] sm:$0xff]
          %v3464 = vld [vmem:[%s3456 + $0xaf] sm:$0xff]
          %3473 = vrot.lane.b32.xlu0 %v3457, 64
          %v3474 = vpop.permute.xlu0 %3473
          %3475 = vrot.lane.b32.xlu0 %v3458, 64
          %v3476 = vpop.permute.xlu0 %3475
          %3477 = vrot.lane.b32.xlu0 %v3459, 64
          %v3478 = vpop.permute.xlu0 %3477
          %3479 = vrot.lane.b32.xlu0 %v3460, 64
          %v3480 = vpop.permute.xlu0 %3479
          %3481 = vrot.lane.b32.xlu0 %v3461, 64
          %v3482 = vpop.permute.xlu0 %3481
          %3483 = vrot.lane.b32.xlu0 %v3462, 64
          %v3484 = vpop.permute.xlu0 %3483
          %3485 = vrot.lane.b32.xlu0 %v3463, 64
          %v3486 = vpop.permute.xlu0 %3485
          %3487 = vrot.lane.b32.xlu0 %v3464, 64
          %v3488 = vpop.permute.xlu0 %3487
          %3497 = vst.msk [vmem:[#allocation3 + $0x20] sm:$0xff] %vm2840, %v3474
          %3498 = vst.msk [vmem:[#allocation3 + $0x58] sm:$0xff] %vm2840, %v3476
          %3499 = vst.msk [vmem:[#allocation3 + $0x90] sm:$0xff] %vm2840, %v3478
          %3500 = vst.msk [vmem:[#allocation3 + $0xc8] sm:$0xff] %vm2840, %v3480
          %3501 = vst.msk [vmem:[#allocation3 + $0x100] sm:$0xff] %vm2840, %v3482
          %3502 = vst.msk [vmem:[#allocation3 + $0x138] sm:$0xff] %vm2840, %v3484
          %3503 = vst.msk [vmem:[#allocation3 + $0x170] sm:$0xff] %vm2840, %v3486
          %3504 = vst.msk [vmem:[#allocation3 + $0x1a8] sm:$0xff] %vm2840, %v3488
          %v3505 = vld [vmem:[%s3456 + $0x8] sm:$0xff]
          %v3506 = vld [vmem:[%s3456 + $0x20] sm:$0xff]
          %v3507 = vld [vmem:[%s3456 + $0x38] sm:$0xff]
          %v3508 = vld [vmem:[%s3456 + $0x50] sm:$0xff]
          %v3509 = vld [vmem:[%s3456 + $0x68] sm:$0xff]
          %v3510 = vld [vmem:[%s3456 + $0x80] sm:$0xff]
          %v3511 = vld [vmem:[%s3456 + $0x98] sm:$0xff]
          %v3512 = vld [vmem:[%s3456 + $0xb0] sm:$0xff]
          %3521 = vrot.lane.b32.xlu0 %v3505, 96
          %v3522 = vpop.permute.xlu0 %3521
          %3523 = vrot.lane.b32.xlu0 %v3506, 96
          %v3524 = vpop.permute.xlu0 %3523
          %3525 = vrot.lane.b32.xlu0 %v3507, 96
          %v3526 = vpop.permute.xlu0 %3525
          %3527 = vrot.lane.b32.xlu0 %v3508, 96
          %v3528 = vpop.permute.xlu0 %3527
          %3529 = vrot.lane.b32.xlu0 %v3509, 96
          %v3530 = vpop.permute.xlu0 %3529
          %3531 = vrot.lane.b32.xlu0 %v3510, 96
          %v3532 = vpop.permute.xlu0 %3531
          %3533 = vrot.lane.b32.xlu0 %v3511, 96
          %v3534 = vpop.permute.xlu0 %3533
          %3535 = vrot.lane.b32.xlu0 %v3512, 96
          %v3536 = vpop.permute.xlu0 %3535
          %3545 = vst.msk [vmem:[#allocation3 + $0x20] sm:$0xff] %vm2891, %v3522
          %3546 = vst.msk [vmem:[#allocation3 + $0x58] sm:$0xff] %vm2891, %v3524
          %3547 = vst.msk [vmem:[#allocation3 + $0x90] sm:$0xff] %vm2891, %v3526
          %3548 = vst.msk [vmem:[#allocation3 + $0xc8] sm:$0xff] %vm2891, %v3528
          %3549 = vst.msk [vmem:[#allocation3 + $0x100] sm:$0xff] %vm2891, %v3530
          %3550 = vst.msk [vmem:[#allocation3 + $0x138] sm:$0xff] %vm2891, %v3532
          %3551 = vst.msk [vmem:[#allocation3 + $0x170] sm:$0xff] %vm2891, %v3534
          %3552 = vst.msk [vmem:[#allocation3 + $0x1a8] sm:$0xff] %vm2891, %v3536
          %v3553 = vld [vmem:[%s3456 + $0x9] sm:$0xff]
          %v3554 = vld [vmem:[%s3456 + $0x21] sm:$0xff]
          %v3555 = vld [vmem:[%s3456 + $0x39] sm:$0xff]
          %v3556 = vld [vmem:[%s3456 + $0x51] sm:$0xff]
          %v3557 = vld [vmem:[%s3456 + $0x69] sm:$0xff]
          %v3558 = vld [vmem:[%s3456 + $0x81] sm:$0xff]
          %v3559 = vld [vmem:[%s3456 + $0x99] sm:$0xff]
          %v3560 = vld [vmem:[%s3456 + $0xb1] sm:$0xff]
          %3561 = vst.msk [vmem:[#allocation3 + $0x28] sm:$0xff] %vm232, %v3553
          %3562 = vst.msk [vmem:[#allocation3 + $0x60] sm:$0xff] %vm232, %v3554
          %3563 = vst.msk [vmem:[#allocation3 + $0x98] sm:$0xff] %vm232, %v3555
          %3564 = vst.msk [vmem:[#allocation3 + $0xd0] sm:$0xff] %vm232, %v3556
          %3565 = vst.msk [vmem:[#allocation3 + $0x108] sm:$0xff] %vm232, %v3557
          %3566 = vst.msk [vmem:[#allocation3 + $0x140] sm:$0xff] %vm232, %v3558
          %3567 = vst.msk [vmem:[#allocation3 + $0x178] sm:$0xff] %vm232, %v3559
          %3568 = vst.msk [vmem:[#allocation3 + $0x1b0] sm:$0xff] %vm232, %v3560
          %s3569 = sadd.s32 24, %s3455
          %s3570 = scalar_lea.vmem [#allocation4], %s3569
          %v3571 = vld [vmem:[%s3570 + $0x7] sm:$0xff]
          %v3572 = vld [vmem:[%s3570 + $0x1f] sm:$0xff]
          %v3573 = vld [vmem:[%s3570 + $0x37] sm:$0xff]
          %v3574 = vld [vmem:[%s3570 + $0x4f] sm:$0xff]
          %v3575 = vld [vmem:[%s3570 + $0x67] sm:$0xff]
          %v3576 = vld [vmem:[%s3570 + $0x7f] sm:$0xff]
          %v3577 = vld [vmem:[%s3570 + $0x97] sm:$0xff]
          %v3578 = vld [vmem:[%s3570 + $0xaf] sm:$0xff]
          %3587 = vrot.lane.b32.xlu0 %v3571, 32
          %v3588 = vpop.permute.xlu0 %3587
          %3589 = vrot.lane.b32.xlu0 %v3572, 32
          %v3590 = vpop.permute.xlu0 %3589
          %3591 = vrot.lane.b32.xlu0 %v3573, 32
          %v3592 = vpop.permute.xlu0 %3591
          %3593 = vrot.lane.b32.xlu0 %v3574, 32
          %v3594 = vpop.permute.xlu0 %3593
          %3595 = vrot.lane.b32.xlu0 %v3575, 32
          %v3596 = vpop.permute.xlu0 %3595
          %3597 = vrot.lane.b32.xlu0 %v3576, 32
          %v3598 = vpop.permute.xlu0 %3597
          %3599 = vrot.lane.b32.xlu0 %v3577, 32
          %v3600 = vpop.permute.xlu0 %3599
          %3601 = vrot.lane.b32.xlu0 %v3578, 32
          %v3602 = vpop.permute.xlu0 %3601
          %3611 = vst.msk [vmem:[#allocation3 + $0x28] sm:$0xff] %vm2791, %v3588
          %3612 = vst.msk [vmem:[#allocation3 + $0x60] sm:$0xff] %vm2791, %v3590
          %3613 = vst.msk [vmem:[#allocation3 + $0x98] sm:$0xff] %vm2791, %v3592
          %3614 = vst.msk [vmem:[#allocation3 + $0xd0] sm:$0xff] %vm2791, %v3594
          %3615 = vst.msk [vmem:[#allocation3 + $0x108] sm:$0xff] %vm2791, %v3596
          %3616 = vst.msk [vmem:[#allocation3 + $0x140] sm:$0xff] %vm2791, %v3598
          %3617 = vst.msk [vmem:[#allocation3 + $0x178] sm:$0xff] %vm2791, %v3600
          %3618 = vst.msk [vmem:[#allocation3 + $0x1b0] sm:$0xff] %vm2791, %v3602
          %v3619 = vld [vmem:[%s3570 + $0x8] sm:$0xff]
          %v3620 = vld [vmem:[%s3570 + $0x20] sm:$0xff]
          %v3621 = vld [vmem:[%s3570 + $0x38] sm:$0xff]
          %v3622 = vld [vmem:[%s3570 + $0x50] sm:$0xff]
          %v3623 = vld [vmem:[%s3570 + $0x68] sm:$0xff]
          %v3624 = vld [vmem:[%s3570 + $0x80] sm:$0xff]
          %v3625 = vld [vmem:[%s3570 + $0x98] sm:$0xff]
          %v3626 = vld [vmem:[%s3570 + $0xb0] sm:$0xff]
          %3635 = vrot.lane.b32.xlu0 %v3619, 64
          %v3636 = vpop.permute.xlu0 %3635
          %3637 = vrot.lane.b32.xlu0 %v3620, 64
          %v3638 = vpop.permute.xlu0 %3637
          %3639 = vrot.lane.b32.xlu0 %v3621, 64
          %v3640 = vpop.permute.xlu0 %3639
          %3641 = vrot.lane.b32.xlu0 %v3622, 64
          %v3642 = vpop.permute.xlu0 %3641
          %3643 = vrot.lane.b32.xlu0 %v3623, 64
          %v3644 = vpop.permute.xlu0 %3643
          %3645 = vrot.lane.b32.xlu0 %v3624, 64
          %v3646 = vpop.permute.xlu0 %3645
          %3647 = vrot.lane.b32.xlu0 %v3625, 64
          %v3648 = vpop.permute.xlu0 %3647
          %3649 = vrot.lane.b32.xlu0 %v3626, 64
          %v3650 = vpop.permute.xlu0 %3649
          %3659 = vst.msk [vmem:[#allocation3 + $0x28] sm:$0xff] %vm2840, %v3636
          %3660 = vst.msk [vmem:[#allocation3 + $0x60] sm:$0xff] %vm2840, %v3638
          %3661 = vst.msk [vmem:[#allocation3 + $0x98] sm:$0xff] %vm2840, %v3640
          %3662 = vst.msk [vmem:[#allocation3 + $0xd0] sm:$0xff] %vm2840, %v3642
          %3663 = vst.msk [vmem:[#allocation3 + $0x108] sm:$0xff] %vm2840, %v3644
          %3664 = vst.msk [vmem:[#allocation3 + $0x140] sm:$0xff] %vm2840, %v3646
          %3665 = vst.msk [vmem:[#allocation3 + $0x178] sm:$0xff] %vm2840, %v3648
          %3666 = vst.msk [vmem:[#allocation3 + $0x1b0] sm:$0xff] %vm2840, %v3650
          %v3667 = vld [vmem:[%s3570 + $0x9] sm:$0xff]
          %v3668 = vld [vmem:[%s3570 + $0x21] sm:$0xff]
          %v3669 = vld [vmem:[%s3570 + $0x39] sm:$0xff]
          %v3670 = vld [vmem:[%s3570 + $0x51] sm:$0xff]
          %v3671 = vld [vmem:[%s3570 + $0x69] sm:$0xff]
          %v3672 = vld [vmem:[%s3570 + $0x81] sm:$0xff]
          %v3673 = vld [vmem:[%s3570 + $0x99] sm:$0xff]
          %v3674 = vld [vmem:[%s3570 + $0xb1] sm:$0xff]
          %3683 = vrot.lane.b32.xlu0 %v3667, 96
          %v3684 = vpop.permute.xlu0 %3683
          %3685 = vrot.lane.b32.xlu0 %v3668, 96
          %v3686 = vpop.permute.xlu0 %3685
          %3687 = vrot.lane.b32.xlu0 %v3669, 96
          %v3688 = vpop.permute.xlu0 %3687
          %3689 = vrot.lane.b32.xlu0 %v3670, 96
          %v3690 = vpop.permute.xlu0 %3689
          %3691 = vrot.lane.b32.xlu0 %v3671, 96
          %v3692 = vpop.permute.xlu0 %3691
          %3693 = vrot.lane.b32.xlu0 %v3672, 96
          %v3694 = vpop.permute.xlu0 %3693
          %3695 = vrot.lane.b32.xlu0 %v3673, 96
          %v3696 = vpop.permute.xlu0 %3695
          %3697 = vrot.lane.b32.xlu0 %v3674, 96
          %v3698 = vpop.permute.xlu0 %3697
          %3707 = vst.msk [vmem:[#allocation3 + $0x28] sm:$0xff] %vm2891, %v3684
          %3708 = vst.msk [vmem:[#allocation3 + $0x60] sm:$0xff] %vm2891, %v3686
          %3709 = vst.msk [vmem:[#allocation3 + $0x98] sm:$0xff] %vm2891, %v3688
          %3710 = vst.msk [vmem:[#allocation3 + $0xd0] sm:$0xff] %vm2891, %v3690
          %3711 = vst.msk [vmem:[#allocation3 + $0x108] sm:$0xff] %vm2891, %v3692
          %3712 = vst.msk [vmem:[#allocation3 + $0x140] sm:$0xff] %vm2891, %v3694
          %3713 = vst.msk [vmem:[#allocation3 + $0x178] sm:$0xff] %vm2891, %v3696
          %3714 = vst.msk [vmem:[#allocation3 + $0x1b0] sm:$0xff] %vm2891, %v3698
          %s3715 = sadd.s32 48, %s3455
          %s3716 = scalar_lea.vmem [#allocation4], %s3715
          %v3717 = vld [vmem:[%s3716 + $0x7] sm:$0xff]
          %v3718 = vld [vmem:[%s3716 + $0x1f] sm:$0xff]
          %v3719 = vld [vmem:[%s3716 + $0x37] sm:$0xff]
          %v3720 = vld [vmem:[%s3716 + $0x4f] sm:$0xff]
          %v3721 = vld [vmem:[%s3716 + $0x67] sm:$0xff]
          %v3722 = vld [vmem:[%s3716 + $0x7f] sm:$0xff]
          %v3723 = vld [vmem:[%s3716 + $0x97] sm:$0xff]
          %v3724 = vld [vmem:[%s3716 + $0xaf] sm:$0xff]
          %3725 = vst.msk [vmem:[#allocation3 + $0x30] sm:$0xff] %vm232, %v3717
          %3726 = vst.msk [vmem:[#allocation3 + $0x68] sm:$0xff] %vm232, %v3718
          %3727 = vst.msk [vmem:[#allocation3 + $0xa0] sm:$0xff] %vm232, %v3719
          %3728 = vst.msk [vmem:[#allocation3 + $0xd8] sm:$0xff] %vm232, %v3720
          %3729 = vst.msk [vmem:[#allocation3 + $0x110] sm:$0xff] %vm232, %v3721
          %3730 = vst.msk [vmem:[#allocation3 + $0x148] sm:$0xff] %vm232, %v3722
          %3731 = vst.msk [vmem:[#allocation3 + $0x180] sm:$0xff] %vm232, %v3723
          %3732 = vst.msk [vmem:[#allocation3 + $0x1b8] sm:$0xff] %vm232, %v3724
          %v3733 = vld [vmem:[%s3716 + $0x8] sm:$0xff]
          %v3734 = vld [vmem:[%s3716 + $0x20] sm:$0xff]
          %v3735 = vld [vmem:[%s3716 + $0x38] sm:$0xff]
          %v3736 = vld [vmem:[%s3716 + $0x50] sm:$0xff]
          %v3737 = vld [vmem:[%s3716 + $0x68] sm:$0xff]
          %v3738 = vld [vmem:[%s3716 + $0x80] sm:$0xff]
          %v3739 = vld [vmem:[%s3716 + $0x98] sm:$0xff]
          %v3740 = vld [vmem:[%s3716 + $0xb0] sm:$0xff]
          %3749 = vrot.lane.b32.xlu0 %v3733, 32
          %v3750 = vpop.permute.xlu0 %3749
          %3751 = vrot.lane.b32.xlu0 %v3734, 32
          %v3752 = vpop.permute.xlu0 %3751
          %3753 = vrot.lane.b32.xlu0 %v3735, 32
          %v3754 = vpop.permute.xlu0 %3753
          %3755 = vrot.lane.b32.xlu0 %v3736, 32
          %v3756 = vpop.permute.xlu0 %3755
          %3757 = vrot.lane.b32.xlu0 %v3737, 32
          %v3758 = vpop.permute.xlu0 %3757
          %3759 = vrot.lane.b32.xlu0 %v3738, 32
          %v3760 = vpop.permute.xlu0 %3759
          %3761 = vrot.lane.b32.xlu0 %v3739, 32
          %v3762 = vpop.permute.xlu0 %3761
          %3763 = vrot.lane.b32.xlu0 %v3740, 32
          %v3764 = vpop.permute.xlu0 %3763
          %3773 = vst.msk [vmem:[#allocation3 + $0x30] sm:$0xff] %vm2791, %v3750
          %3774 = vst.msk [vmem:[#allocation3 + $0x68] sm:$0xff] %vm2791, %v3752
          %3775 = vst.msk [vmem:[#allocation3 + $0xa0] sm:$0xff] %vm2791, %v3754
          %3776 = vst.msk [vmem:[#allocation3 + $0xd8] sm:$0xff] %vm2791, %v3756
          %3777 = vst.msk [vmem:[#allocation3 + $0x110] sm:$0xff] %vm2791, %v3758
          %3778 = vst.msk [vmem:[#allocation3 + $0x148] sm:$0xff] %vm2791, %v3760
          %3779 = vst.msk [vmem:[#allocation3 + $0x180] sm:$0xff] %vm2791, %v3762
          %3780 = vst.msk [vmem:[#allocation3 + $0x1b8] sm:$0xff] %vm2791, %v3764
          %v3781 = vld [vmem:[%s3716 + $0x9] sm:$0xff]
          %v3782 = vld [vmem:[%s3716 + $0x21] sm:$0xff]
          %v3783 = vld [vmem:[%s3716 + $0x39] sm:$0xff]
          %v3784 = vld [vmem:[%s3716 + $0x51] sm:$0xff]
          %v3785 = vld [vmem:[%s3716 + $0x69] sm:$0xff]
          %v3786 = vld [vmem:[%s3716 + $0x81] sm:$0xff]
          %v3787 = vld [vmem:[%s3716 + $0x99] sm:$0xff]
          %v3788 = vld [vmem:[%s3716 + $0xb1] sm:$0xff]
          %3797 = vrot.lane.b32.xlu0 %v3781, 64
          %v3798 = vpop.permute.xlu0 %3797
          %3799 = vrot.lane.b32.xlu0 %v3782, 64
          %v3800 = vpop.permute.xlu0 %3799
          %3801 = vrot.lane.b32.xlu0 %v3783, 64
          %v3802 = vpop.permute.xlu0 %3801
          %3803 = vrot.lane.b32.xlu0 %v3784, 64
          %v3804 = vpop.permute.xlu0 %3803
          %3805 = vrot.lane.b32.xlu0 %v3785, 64
          %v3806 = vpop.permute.xlu0 %3805
          %3807 = vrot.lane.b32.xlu0 %v3786, 64
          %v3808 = vpop.permute.xlu0 %3807
          %3809 = vrot.lane.b32.xlu0 %v3787, 64
          %v3810 = vpop.permute.xlu0 %3809
          %3811 = vrot.lane.b32.xlu0 %v3788, 64
          %v3812 = vpop.permute.xlu0 %3811
          %3821 = vst.msk [vmem:[#allocation3 + $0x30] sm:$0xff] %vm2840, %v3798
          %3822 = vst.msk [vmem:[#allocation3 + $0x68] sm:$0xff] %vm2840, %v3800
          %3823 = vst.msk [vmem:[#allocation3 + $0xa0] sm:$0xff] %vm2840, %v3802
          %3824 = vst.msk [vmem:[#allocation3 + $0xd8] sm:$0xff] %vm2840, %v3804
          %3825 = vst.msk [vmem:[#allocation3 + $0x110] sm:$0xff] %vm2840, %v3806
          %3826 = vst.msk [vmem:[#allocation3 + $0x148] sm:$0xff] %vm2840, %v3808
          %3827 = vst.msk [vmem:[#allocation3 + $0x180] sm:$0xff] %vm2840, %v3810
          %3828 = vst.msk [vmem:[#allocation3 + $0x1b8] sm:$0xff] %vm2840, %v3812
          %v3829 = vld [vmem:[#allocation3] sm:$0xff]
          %v3830 = vld [vmem:[#allocation3 + $0x8] sm:$0xff]
          %v3831 = vld [vmem:[#allocation3 + $0x10] sm:$0xff]
          %v3832 = vld [vmem:[#allocation3 + $0x18] sm:$0xff]
          %v3833 = vld [vmem:[#allocation3 + $0x20] sm:$0xff]
          %v3834 = vld [vmem:[#allocation3 + $0x28] sm:$0xff]
          %v3835 = vld [vmem:[#allocation3 + $0x30] sm:$0xff]
          %v3836 = vld [vmem:[#allocation3 + $0x38] sm:$0xff]
          %v3837 = vld [vmem:[#allocation3 + $0x40] sm:$0xff]
          %v3838 = vld [vmem:[#allocation3 + $0x48] sm:$0xff]
          %v3839 = vld [vmem:[#allocation3 + $0x50] sm:$0xff]
          %v3840 = vld [vmem:[#allocation3 + $0x58] sm:$0xff]
          %v3841 = vld [vmem:[#allocation3 + $0x60] sm:$0xff]
          %v3842 = vld [vmem:[#allocation3 + $0x68] sm:$0xff]
          %v3843 = vld [vmem:[#allocation3 + $0x70] sm:$0xff]
          %v3844 = vld [vmem:[#allocation3 + $0x78] sm:$0xff]
          %v3845 = vld [vmem:[#allocation3 + $0x80] sm:$0xff]
          %v3846 = vld [vmem:[#allocation3 + $0x88] sm:$0xff]
          %v3847 = vld [vmem:[#allocation3 + $0x90] sm:$0xff]
          %v3848 = vld [vmem:[#allocation3 + $0x98] sm:$0xff]
          %v3849 = vld [vmem:[#allocation3 + $0xa0] sm:$0xff]
          %v3850 = vld [vmem:[#allocation3 + $0xa8] sm:$0xff]
          %v3851 = vld [vmem:[#allocation3 + $0xb0] sm:$0xff]
          %v3852 = vld [vmem:[#allocation3 + $0xb8] sm:$0xff]
          %v3853 = vld [vmem:[#allocation3 + $0xc0] sm:$0xff]
          %v3854 = vld [vmem:[#allocation3 + $0xc8] sm:$0xff]
          %v3855 = vld [vmem:[#allocation3 + $0xd0] sm:$0xff]
          %v3856 = vld [vmem:[#allocation3 + $0xd8] sm:$0xff]
          %v3857 = vld [vmem:[#allocation3 + $0xe0] sm:$0xff]
          %v3858 = vld [vmem:[#allocation3 + $0xe8] sm:$0xff]
          %v3859 = vld [vmem:[#allocation3 + $0xf0] sm:$0xff]
          %v3860 = vld [vmem:[#allocation3 + $0xf8] sm:$0xff]
          %v3861 = vld [vmem:[#allocation3 + $0x100] sm:$0xff]
          %v3862 = vld [vmem:[#allocation3 + $0x108] sm:$0xff]
          %v3863 = vld [vmem:[#allocation3 + $0x110] sm:$0xff]
          %v3864 = vld [vmem:[#allocation3 + $0x118] sm:$0xff]
          %v3865 = vld [vmem:[#allocation3 + $0x120] sm:$0xff]
          %v3866 = vld [vmem:[#allocation3 + $0x128] sm:$0xff]
          %v3867 = vld [vmem:[#allocation3 + $0x130] sm:$0xff]
          %v3868 = vld [vmem:[#allocation3 + $0x138] sm:$0xff]
          %v3869 = vld [vmem:[#allocation3 + $0x140] sm:$0xff]
          %v3870 = vld [vmem:[#allocation3 + $0x148] sm:$0xff]
          %v3871 = vld [vmem:[#allocation3 + $0x150] sm:$0xff]
          %v3872 = vld [vmem:[#allocation3 + $0x158] sm:$0xff]
          %v3873 = vld [vmem:[#allocation3 + $0x160] sm:$0xff]
          %v3874 = vld [vmem:[#allocation3 + $0x168] sm:$0xff]
          %v3875 = vld [vmem:[#allocation3 + $0x170] sm:$0xff]
          %v3876 = vld [vmem:[#allocation3 + $0x178] sm:$0xff]
          %v3877 = vld [vmem:[#allocation3 + $0x180] sm:$0xff]
          %v3878 = vld [vmem:[#allocation3 + $0x188] sm:$0xff]
          %v3879 = vld [vmem:[#allocation3 + $0x190] sm:$0xff]
          %v3880 = vld [vmem:[#allocation3 + $0x198] sm:$0xff]
          %v3881 = vld [vmem:[#allocation3 + $0x1a0] sm:$0xff]
          %v3882 = vld [vmem:[#allocation3 + $0x1a8] sm:$0xff]
          %v3883 = vld [vmem:[#allocation3 + $0x1b0] sm:$0xff]
          %v3884 = vld [vmem:[#allocation3 + $0x1b8] sm:$0xff]
          %v3885 = vld [vmem:[%s3] sm:$0xff]
          %v3886 = vld [vmem:[%s3 + $0x8] sm:$0xff]
          %v3887 = vld [vmem:[%s3 + $0x10] sm:$0xff]
          %v3888 = vld [vmem:[%s3 + $0x18] sm:$0xff]
          %v3889 = vld [vmem:[%s3 + $0x20] sm:$0xff]
          %v3890 = vld [vmem:[%s3 + $0x28] sm:$0xff]
          %v3891 = vld [vmem:[%s3 + $0x30] sm:$0xff]
          %v3892 = vld [vmem:[%s3 + $0x38] sm:$0xff]
          %v3893 = vld [vmem:[%s3 + $0x40] sm:$0xff]
          %v3894 = vld [vmem:[%s3 + $0x48] sm:$0xff]
          %v3895 = vld [vmem:[%s3 + $0x50] sm:$0xff]
          %v3896 = vld [vmem:[%s3 + $0x58] sm:$0xff]
          %v3897 = vld [vmem:[%s3 + $0x60] sm:$0xff]
          %v3898 = vld [vmem:[%s3 + $0x68] sm:$0xff]
          %v3899 = vld [vmem:[%s3 + $0x70] sm:$0xff]
          %v3900 = vld [vmem:[%s3 + $0x78] sm:$0xff]
          %v3901 = vld [vmem:[%s3 + $0x80] sm:$0xff]
          %v3902 = vld [vmem:[%s3 + $0x88] sm:$0xff]
          %v3903 = vld [vmem:[%s3 + $0x90] sm:$0xff]
          %v3904 = vld [vmem:[%s3 + $0x98] sm:$0xff]
          %v3905 = vld [vmem:[%s3 + $0xa0] sm:$0xff]
          %v3906 = vld [vmem:[%s3 + $0xa8] sm:$0xff]
          %v3907 = vld [vmem:[%s3 + $0xb0] sm:$0xff]
          %v3908 = vld [vmem:[%s3 + $0xb8] sm:$0xff]
          %v3909 = vld [vmem:[%s3 + $0xc0] sm:$0xff]
          %v3910 = vld [vmem:[%s3 + $0xc8] sm:$0xff]
          %v3911 = vld [vmem:[%s3 + $0xd0] sm:$0xff]
          %v3912 = vld [vmem:[%s3 + $0xd8] sm:$0xff]
          %v3913 = vld [vmem:[%s3 + $0xe0] sm:$0xff]
          %v3914 = vld [vmem:[%s3 + $0xe8] sm:$0xff]
          %v3915 = vld [vmem:[%s3 + $0xf0] sm:$0xff]
          %v3916 = vld [vmem:[%s3 + $0xf8] sm:$0xff]
          %v3917 = vld [vmem:[%s3 + $0x100] sm:$0xff]
          %v3918 = vld [vmem:[%s3 + $0x108] sm:$0xff]
          %v3919 = vld [vmem:[%s3 + $0x110] sm:$0xff]
          %v3920 = vld [vmem:[%s3 + $0x118] sm:$0xff]
          %v3921 = vld [vmem:[%s3 + $0x120] sm:$0xff]
          %v3922 = vld [vmem:[%s3 + $0x128] sm:$0xff]
          %v3923 = vld [vmem:[%s3 + $0x130] sm:$0xff]
          %v3924 = vld [vmem:[%s3 + $0x138] sm:$0xff]
          %v3925 = vld [vmem:[%s3 + $0x140] sm:$0xff]
          %v3926 = vld [vmem:[%s3 + $0x148] sm:$0xff]
          %v3927 = vld [vmem:[%s3 + $0x150] sm:$0xff]
          %v3928 = vld [vmem:[%s3 + $0x158] sm:$0xff]
          %v3929 = vld [vmem:[%s3 + $0x160] sm:$0xff]
          %v3930 = vld [vmem:[%s3 + $0x168] sm:$0xff]
          %v3931 = vld [vmem:[%s3 + $0x170] sm:$0xff]
          %v3932 = vld [vmem:[%s3 + $0x178] sm:$0xff]
          %v3933 = vld [vmem:[%s3 + $0x180] sm:$0xff]
          %v3934 = vld [vmem:[%s3 + $0x188] sm:$0xff]
          %v3935 = vld [vmem:[%s3 + $0x190] sm:$0xff]
          %v3936 = vld [vmem:[%s3 + $0x198] sm:$0xff]
          %v3937 = vld [vmem:[%s3 + $0x1a0] sm:$0xff]
          %v3938 = vld [vmem:[%s3 + $0x1a8] sm:$0xff]
          %v3939 = vld [vmem:[%s3 + $0x1b0] sm:$0xff]
          %v3940 = vld [vmem:[%s3 + $0x1b8] sm:$0xff]
          %v3941 = vld [vmem:[%s3 + $0x1c0] sm:$0xff]
          %v3942 = vld [vmem:[%s3 + $0x1c8] sm:$0xff]
          %v3943 = vld [vmem:[%s3 + $0x1d0] sm:$0xff]
          %v3944 = vld [vmem:[%s3 + $0x1d8] sm:$0xff]
          %v3945 = vld [vmem:[%s3 + $0x1e0] sm:$0xff]
          %v3946 = vld [vmem:[%s3 + $0x1e8] sm:$0xff]
          %v3947 = vld [vmem:[%s3 + $0x1f0] sm:$0xff]
          %v3948 = vld [vmem:[%s3 + $0x1f8] sm:$0xff]
          %v3949 = vld [vmem:[%s3 + $0x200] sm:$0xff]
          %v3950 = vld [vmem:[%s3 + $0x208] sm:$0xff]
          %v3951 = vld [vmem:[%s3 + $0x210] sm:$0xff]
          %v3952 = vld [vmem:[%s3 + $0x218] sm:$0xff]
          %v3953 = vld [vmem:[%s3 + $0x220] sm:$0xff]
          %v3954 = vld [vmem:[%s3 + $0x228] sm:$0xff]
          %v3955 = vld [vmem:[%s3 + $0x230] sm:$0xff]
          %v3956 = vld [vmem:[%s3 + $0x238] sm:$0xff]
          %v3957 = vld [vmem:[%s3 + $0x240] sm:$0xff]
          %v3958 = vld [vmem:[%s3 + $0x248] sm:$0xff]
          %v3959 = vld [vmem:[%s3 + $0x250] sm:$0xff]
          %v3960 = vld [vmem:[%s3 + $0x258] sm:$0xff]
          %v3961 = vld [vmem:[%s3 + $0x260] sm:$0xff]
          %v3962 = vld [vmem:[%s3 + $0x268] sm:$0xff]
          %v3963 = vld [vmem:[%s3 + $0x270] sm:$0xff]
          %v3964 = vld [vmem:[%s3 + $0x278] sm:$0xff]
          %v3965 = vld [vmem:[%s3 + $0x280] sm:$0xff]
          %v3966 = vld [vmem:[%s3 + $0x288] sm:$0xff]
          %v3967 = vld [vmem:[%s3 + $0x290] sm:$0xff]
          %v3968 = vld [vmem:[%s3 + $0x298] sm:$0xff]
          %v3969 = vld [vmem:[%s3 + $0x2a0] sm:$0xff]
          %v3970 = vld [vmem:[%s3 + $0x2a8] sm:$0xff]
          %v3971 = vld [vmem:[%s3 + $0x2b0] sm:$0xff]
          %v3972 = vld [vmem:[%s3 + $0x2b8] sm:$0xff]
          %v3973 = vld [vmem:[%s3 + $0x2c0] sm:$0xff]
          %v3974 = vld [vmem:[%s3 + $0x2c8] sm:$0xff]
          %v3975 = vld [vmem:[%s3 + $0x2d0] sm:$0xff]
          %v3976 = vld [vmem:[%s3 + $0x2d8] sm:$0xff]
          %v3977 = vld [vmem:[%s3 + $0x2e0] sm:$0xff]
          %v3978 = vld [vmem:[%s3 + $0x2e8] sm:$0xff]
          %v3979 = vld [vmem:[%s3 + $0x2f0] sm:$0xff]
          %v3980 = vld [vmem:[%s3 + $0x2f8] sm:$0xff]
          %v3981 = vld [vmem:[%s3 + $0x300] sm:$0xff]
          %v3982 = vld [vmem:[%s3 + $0x308] sm:$0xff]
          %v3983 = vld [vmem:[%s3 + $0x310] sm:$0xff]
          %v3984 = vld [vmem:[%s3 + $0x318] sm:$0xff]
          %v3985 = vld [vmem:[%s3 + $0x320] sm:$0xff]
          %v3986 = vld [vmem:[%s3 + $0x328] sm:$0xff]
          %v3987 = vld [vmem:[%s3 + $0x330] sm:$0xff]
          %v3988 = vld [vmem:[%s3 + $0x338] sm:$0xff]
          %v3989 = vld [vmem:[%s3 + $0x340] sm:$0xff]
          %v3990 = vld [vmem:[%s3 + $0x348] sm:$0xff]
          %v3991 = vld [vmem:[%s3 + $0x350] sm:$0xff]
          %v3992 = vld [vmem:[%s3 + $0x358] sm:$0xff]
          %vm3993 = vcmask 785408
          %v3995 = vsel %vm3993, %v3835, 0
          %v3998 = vsel %vm3993, %v3842, 0
          %v4001 = vsel %vm3993, %v3849, 0
          %v4004 = vsel %vm3993, %v3856, 0
          %v4007 = vsel %vm3993, %v3863, 0
          %v4010 = vsel %vm3993, %v3870, 0
          %v4013 = vsel %vm3993, %v3877, 0
          %v4016 = vsel %vm3993, %v3884, 0
          %4018 = vmatprep.subr.mxu0 0.0
          %4019 = vmatpush1.msra.mxu0 %v3885
          %4020 = vmatprep.subr.mxu0 0.0
          %4021 = vmatpush1.msra.mxu0 %v3886
          %4022 = vmatprep.subr.mxu0 0.0
          %4023 = vmatpush1.msra.mxu0 %v3887
          %4024 = vmatprep.subr.mxu0 0.0
          %4025 = vmatpush1.msra.mxu0 %v3888
          %4026 = vmatprep.subr.mxu0 0.0
          %4027 = vmatpush1.msra.mxu0 %v3889
          %4028 = vmatprep.subr.mxu0 0.0
          %4029 = vmatpush1.msra.mxu0 %v3890
          %4030 = vmatprep.subr.mxu0 0.0
          %4031 = vmatpush1.msra.mxu0 %v3891
          %4032 = vmatprep.subr.mxu0 0.0
          %4033 = vmatpush1.msra.mxu0 %v3892
          %4034 = vmatprep.subr.mxu0 0.0
          %4035 = vmatpush1.msra.mxu0 %v3893
          %4036 = vmatprep.subr.mxu0 0.0
          %4037 = vmatpush1.msra.mxu0 %v3894
          %4038 = vmatprep.subr.mxu0 0.0
          %4039 = vmatpush1.msra.mxu0 %v3895
          %4040 = vmatprep.subr.mxu0 0.0
          %4041 = vmatpush1.msra.mxu0 %v3896
          %4042 = vmatprep.subr.mxu0 0.0
          %4043 = vmatpush1.msra.mxu0 %v3897
          %4044 = vmatprep.subr.mxu0 0.0
          %4045 = vmatpush1.msra.mxu0 %v3898
          %4046 = vmatprep.subr.mxu0 0.0
          %4047 = vmatpush1.msra.mxu0 %v3899
          %4048 = vmatprep.subr.mxu0 0.0
          %4049 = vmatpush1.msra.mxu0 %v3900
          %4050 = vmatprep.subr.mxu0 0.0
          %4051 = vmatpush1.msra.mxu0 %v3901
          %4052 = vmatprep.subr.mxu0 0.0
          %4053 = vmatpush1.msra.mxu0 %v3902
          %4054 = vmatprep.subr.mxu0 0.0
          %4055 = vmatpush1.msra.mxu0 %v3903
          %4056 = vmatprep.subr.mxu0 0.0
          %4057 = vmatpush1.msra.mxu0 %v3904
          %4058 = vmatprep.subr.mxu0 0.0
          %4059 = vmatpush1.msra.mxu0 %v3905
          %4060 = vmatprep.subr.mxu0 0.0
          %4061 = vmatpush1.msra.mxu0 %v3906
          %4062 = vmatprep.subr.mxu0 0.0
          %4063 = vmatpush1.msra.mxu0 %v3907
          %4064 = vmatprep.subr.mxu0 0.0
          %4065 = vmatpush1.msra.mxu0 %v3908
          %4066 = vmatprep.subr.mxu0 0.0
          %4067 = vmatpush1.msra.mxu0 %v3909
          %4068 = vmatprep.subr.mxu0 0.0
          %4069 = vmatpush1.msra.mxu0 %v3910
          %4070 = vmatprep.subr.mxu0 0.0
          %4071 = vmatpush1.msra.mxu0 %v3911
          %4072 = vmatprep.subr.mxu0 0.0
          %4073 = vmatpush1.msra.mxu0 %v3912
          %4074 = vmatprep.subr.mxu0 0.0
          %4075 = vmatpush1.msra.mxu0 %v3913
          %4076 = vmatprep.subr.mxu0 0.0
          %4077 = vmatpush1.msra.mxu0 %v3914
          %4078 = vmatprep.subr.mxu0 0.0
          %4079 = vmatpush1.msra.mxu0 %v3915
          %4080 = vmatprep.subr.mxu0 0.0
          %4081 = vmatpush1.msra.mxu0 %v3916
          %4082 = vmatprep.mubr.f32.mxu0 %v3830
          %4083 = vmatmul.mubr.f32.gmra.mrb[0].mxu0 %v3829
          %v4084 = vpop.f32.mrb[0].mxu0
          %v4085 = vadd.f32 %v343, %v4084
          %v4086 = vpop.f32.mrb[0].mxu0
          %4087 = vmatprep.mubr.f32.mxu0 %v3837
          %4088 = vmatmul.mubr.f32.gmra.mrb[0].mxu0 %v3836
          %v4089 = vpop.f32.mrb[0].mxu0
          %v4090 = vadd.f32 %v343, %v4089
          %v4091 = vpop.f32.mrb[0].mxu0
          %4092 = vmatprep.mubr.f32.mxu0 %v3844
          %4093 = vmatmul.mubr.f32.gmra.mrb[0].mxu0 %v3843
          %v4094 = vpop.f32.mrb[0].mxu0
          %v4095 = vadd.f32 %v343, %v4094
          %v4096 = vpop.f32.mrb[0].mxu0
          %4097 = vmatprep.mubr.f32.mxu0 %v3851
          %4098 = vmatmul.mubr.f32.gmra.mrb[0].mxu0 %v3850
          %v4099 = vpop.f32.mrb[0].mxu0
          %v4100 = vadd.f32 %v343, %v4099
          %v4101 = vpop.f32.mrb[0].mxu0
          %4102 = vmatprep.mubr.f32.mxu0 %v3858
          %4103 = vmatmul.mubr.f32.gmra.mrb[0].mxu0 %v3857
          %v4104 = vpop.f32.mrb[0].mxu0
          %v4105 = vadd.f32 %v343, %v4104
          %v4106 = vpop.f32.mrb[0].mxu0
          %4107 = vmatprep.mubr.f32.mxu0 %v3865
          %4108 = vmatmul.mubr.f32.gmra.mrb[0].mxu0 %v3864
          %v4109 = vpop.f32.mrb[0].mxu0
          %v4110 = vadd.f32 %v343, %v4109
          %v4111 = vpop.f32.mrb[0].mxu0
          %4112 = vmatprep.mubr.f32.mxu0 %v3872
          %4113 = vmatmul.mubr.f32.gmra.mrb[0].mxu0 %v3871
          %v4114 = vpop.f32.mrb[0].mxu0
          %v4115 = vadd.f32 %v343, %v4114
          %v4116 = vpop.f32.mrb[0].mxu0
          %4117 = vmatprep.mubr.f32.mxu0 %v3879
          %4118 = vmatmul.mubr.f32.gmra.mrb[0].mxu0 %v3878
          %v4119 = vpop.f32.mrb[0].mxu0
          %v4120 = vadd.f32 %v343, %v4119
          %v4121 = vpop.f32.mrb[0].mxu0
          %4122 = vdwg.mxu0
          %4123 = vmatprep.subr.mxu0 0.0
          %4124 = vmatpush1.msra.mxu0 %v3917
          %4125 = vmatprep.subr.mxu0 0.0
          %4126 = vmatpush1.msra.mxu0 %v3918
          %4127 = vmatprep.subr.mxu0 0.0
          %4128 = vmatpush1.msra.mxu0 %v3919
          %4129 = vmatprep.subr.mxu0 0.0
          %4130 = vmatpush1.msra.mxu0 %v3920
          %4131 = vmatprep.subr.mxu0 0.0
          %4132 = vmatpush1.msra.mxu0 %v3921
          %4133 = vmatprep.subr.mxu0 0.0
          %4134 = vmatpush1.msra.mxu0 %v3922
          %4135 = vmatprep.subr.mxu0 0.0
          %4136 = vmatpush1.msra.mxu0 %v3923
          %4137 = vmatprep.subr.mxu0 0.0
          %4138 = vmatpush1.msra.mxu0 %v3924
          %4139 = vmatprep.subr.mxu0 0.0
          %4140 = vmatpush1.msra.mxu0 %v3925
          %4141 = vmatprep.subr.mxu0 0.0
          %4142 = vmatpush1.msra.mxu0 %v3926
          %4143 = vmatprep.subr.mxu0 0.0
          %4144 = vmatpush1.msra.mxu0 %v3927
          %4145 = vmatprep.subr.mxu0 0.0
          %4146 = vmatpush1.msra.mxu0 %v3928
          %4147 = vmatprep.subr.mxu0 0.0
          %4148 = vmatpush1.msra.mxu0 %v3929
          %4149 = vmatprep.subr.mxu0 0.0
          %4150 = vmatpush1.msra.mxu0 %v3930
          %4151 = vmatprep.subr.mxu0 0.0
          %4152 = vmatpush1.msra.mxu0 %v3931
          %4153 = vmatprep.subr.mxu0 0.0
          %4154 = vmatpush1.msra.mxu0 %v3932
          %4155 = vmatprep.subr.mxu0 0.0
          %4156 = vmatpush1.msra.mxu0 %v3933
          %4157 = vmatprep.subr.mxu0 0.0
          %4158 = vmatpush1.msra.mxu0 %v3934
          %4159 = vmatprep.subr.mxu0 0.0
          %4160 = vmatpush1.msra.mxu0 %v3935
          %4161 = vmatprep.subr.mxu0 0.0
          %4162 = vmatpush1.msra.mxu0 %v3936
          %4163 = vmatprep.subr.mxu0 0.0
          %4164 = vmatpush1.msra.mxu0 %v3937
          %4165 = vmatprep.subr.mxu0 0.0
          %4166 = vmatpush1.msra.mxu0 %v3938
          %4167 = vmatprep.subr.mxu0 0.0
          %4168 = vmatpush1.msra.mxu0 %v3939
          %4169 = vmatprep.subr.mxu0 0.0
          %4170 = vmatpush1.msra.mxu0 %v3940
          %4171 = vmatprep.subr.mxu0 0.0
          %4172 = vmatpush1.msra.mxu0 %v3941
          %4173 = vmatprep.subr.mxu0 0.0
          %4174 = vmatpush1.msra.mxu0 %v3942
          %4175 = vmatprep.subr.mxu0 0.0
          %4176 = vmatpush1.msra.mxu0 %v3943
          %4177 = vmatprep.subr.mxu0 0.0
          %4178 = vmatpush1.msra.mxu0 %v3944
          %4179 = vmatprep.subr.mxu0 0.0
          %4180 = vmatpush1.msra.mxu0 %v3945
          %4181 = vmatprep.subr.mxu0 0.0
          %4182 = vmatpush1.msra.mxu0 %v3946
          %4183 = vmatprep.subr.mxu0 0.0
          %4184 = vmatpush1.msra.mxu0 %v3947
          %4185 = vmatprep.subr.mxu0 0.0
          %4186 = vmatpush1.msra.mxu0 %v3948
          %4187 = vmatprep.mubr.f32.mxu0 %v3832
          %4188 = vmatmul.mubr.f32.gmra.mrb[0].mxu0 %v3831
          %v4189 = vpop.f32.mrb[0].mxu0
          %v4190 = vadd.f32 %v4085, %v4189
          %v4191 = vpop.f32.mrb[0].mxu0
          %4192 = vmatprep.mubr.f32.mxu0 %v3839
          %4193 = vmatmul.mubr.f32.gmra.mrb[0].mxu0 %v3838
          %v4194 = vpop.f32.mrb[0].mxu0
          %v4195 = vadd.f32 %v4090, %v4194
          %v4196 = vpop.f32.mrb[0].mxu0
          %4197 = vmatprep.mubr.f32.mxu0 %v3846
          %4198 = vmatmul.mubr.f32.gmra.mrb[0].mxu0 %v3845
          %v4199 = vpop.f32.mrb[0].mxu0
          %v4200 = vadd.f32 %v4095, %v4199
          %v4201 = vpop.f32.mrb[0].mxu0
          %4202 = vmatprep.mubr.f32.mxu0 %v3853
          %4203 = vmatmul.mubr.f32.gmra.mrb[0].mxu0 %v3852
          %v4204 = vpop.f32.mrb[0].mxu0
          %v4205 = vadd.f32 %v4100, %v4204
          %v4206 = vpop.f32.mrb[0].mxu0
          %4207 = vmatprep.mubr.f32.mxu0 %v3860
          %4208 = vmatmul.mubr.f32.gmra.mrb[0].mxu0 %v3859
          %v4209 = vpop.f32.mrb[0].mxu0
          %v4210 = vadd.f32 %v4105, %v4209
          %v4211 = vpop.f32.mrb[0].mxu0
          %4212 = vmatprep.mubr.f32.mxu0 %v3867
          %4213 = vmatmul.mubr.f32.gmra.mrb[0].mxu0 %v3866
          %v4214 = vpop.f32.mrb[0].mxu0
          %v4215 = vadd.f32 %v4110, %v4214
          %v4216 = vpop.f32.mrb[0].mxu0
          %4217 = vmatprep.mubr.f32.mxu0 %v3874
          %4218 = vmatmul.mubr.f32.gmra.mrb[0].mxu0 %v3873
          %v4219 = vpop.f32.mrb[0].mxu0
          %v4220 = vadd.f32 %v4115, %v4219
          %v4221 = vpop.f32.mrb[0].mxu0
          %4222 = vmatprep.mubr.f32.mxu0 %v3881
          %4223 = vmatmul.mubr.f32.gmra.mrb[0].mxu0 %v3880
          %v4224 = vpop.f32.mrb[0].mxu0
          %v4225 = vadd.f32 %v4120, %v4224
          %v4226 = vpop.f32.mrb[0].mxu0
          %4227 = vdwg.mxu0
          %4228 = vmatprep.subr.mxu0 0.0
          %4229 = vmatpush1.msra.mxu0 %v3949
          %4230 = vmatprep.subr.mxu0 0.0
          %4231 = vmatpush1.msra.mxu0 %v3950
          %4232 = vmatprep.subr.mxu0 0.0
          %4233 = vmatpush1.msra.mxu0 %v3951
          %4234 = vmatprep.subr.mxu0 0.0
          %4235 = vmatpush1.msra.mxu0 %v3952
          %4236 = vmatprep.subr.mxu0 0.0
          %4237 = vmatpush1.msra.mxu0 %v3953
          %4238 = vmatprep.subr.mxu0 0.0
          %4239 = vmatpush1.msra.mxu0 %v3954
          %4240 = vmatprep.subr.mxu0 0.0
          %4241 = vmatpush1.msra.mxu0 %v3955
          %4242 = vmatprep.subr.mxu0 0.0
          %4243 = vmatpush1.msra.mxu0 %v3956
          %4244 = vmatprep.subr.mxu0 0.0
          %4245 = vmatpush1.msra.mxu0 %v3957
          %4246 = vmatprep.subr.mxu0 0.0
          %4247 = vmatpush1.msra.mxu0 %v3958
          %4248 = vmatprep.subr.mxu0 0.0
          %4249 = vmatpush1.msra.mxu0 %v3959
          %4250 = vmatprep.subr.mxu0 0.0
          %4251 = vmatpush1.msra.mxu0 %v3960
          %4252 = vmatprep.subr.mxu0 0.0
          %4253 = vmatpush1.msra.mxu0 %v3961
          %4254 = vmatprep.subr.mxu0 0.0
          %4255 = vmatpush1.msra.mxu0 %v3962
          %4256 = vmatprep.subr.mxu0 0.0
          %4257 = vmatpush1.msra.mxu0 %v3963
          %4258 = vmatprep.subr.mxu0 0.0
          %4259 = vmatpush1.msra.mxu0 %v3964
          %4260 = vmatprep.subr.mxu0 0.0
          %4261 = vmatpush1.msra.mxu0 %v3965
          %4262 = vmatprep.subr.mxu0 0.0
          %4263 = vmatpush1.msra.mxu0 %v3966
          %4264 = vmatprep.subr.mxu0 0.0
          %4265 = vmatpush1.msra.mxu0 %v3967
          %4266 = vmatprep.subr.mxu0 0.0
          %4267 = vmatpush1.msra.mxu0 %v3968
          %4268 = vmatprep.subr.mxu0 0.0
          %4269 = vmatpush1.msra.mxu0 %v3969
          %4270 = vmatprep.subr.mxu0 0.0
          %4271 = vmatpush1.msra.mxu0 %v3970
          %4272 = vmatprep.subr.mxu0 0.0
          %4273 = vmatpush1.msra.mxu0 %v3971
          %4274 = vmatprep.subr.mxu0 0.0
          %4275 = vmatpush1.msra.mxu0 %v3972
          %4276 = vmatprep.subr.mxu0 0.0
          %4277 = vmatpush1.msra.mxu0 %v3973
          %4278 = vmatprep.subr.mxu0 0.0
          %4279 = vmatpush1.msra.mxu0 %v3974
          %4280 = vmatprep.subr.mxu0 0.0
          %4281 = vmatpush1.msra.mxu0 %v3975
          %4282 = vmatprep.subr.mxu0 0.0
          %4283 = vmatpush1.msra.mxu0 %v3976
          %4284 = vmatprep.subr.mxu0 0.0
          %4285 = vmatpush1.msra.mxu0 %v3977
          %4286 = vmatprep.subr.mxu0 0.0
          %4287 = vmatpush1.msra.mxu0 %v3978
          %4288 = vmatprep.subr.mxu0 0.0
          %4289 = vmatpush1.msra.mxu0 %v3979
          %4290 = vmatprep.subr.mxu0 0.0
          %4291 = vmatpush1.msra.mxu0 %v3980
          %4292 = vmatprep.mubr.f32.mxu0 %v3834
          %4293 = vmatmul.mubr.f32.gmra.mrb[0].mxu0 %v3833
          %v4294 = vpop.f32.mrb[0].mxu0
          %v4295 = vadd.f32 %v4190, %v4294
          %v4296 = vpop.f32.mrb[0].mxu0
          %4297 = vmatprep.mubr.f32.mxu0 %v3841
          %4298 = vmatmul.mubr.f32.gmra.mrb[0].mxu0 %v3840
          %v4299 = vpop.f32.mrb[0].mxu0
          %v4300 = vadd.f32 %v4195, %v4299
          %v4301 = vpop.f32.mrb[0].mxu0
          %4302 = vmatprep.mubr.f32.mxu0 %v3848
          %4303 = vmatmul.mubr.f32.gmra.mrb[0].mxu0 %v3847
          %v4304 = vpop.f32.mrb[0].mxu0
          %v4305 = vadd.f32 %v4200, %v4304
          %v4306 = vpop.f32.mrb[0].mxu0
          %4307 = vmatprep.mubr.f32.mxu0 %v3855
          %4308 = vmatmul.mubr.f32.gmra.mrb[0].mxu0 %v3854
          %v4309 = vpop.f32.mrb[0].mxu0
          %v4310 = vadd.f32 %v4205, %v4309
          %v4311 = vpop.f32.mrb[0].mxu0
          %4312 = vmatprep.mubr.f32.mxu0 %v3862
          %4313 = vmatmul.mubr.f32.gmra.mrb[0].mxu0 %v3861
          %v4314 = vpop.f32.mrb[0].mxu0
          %v4315 = vadd.f32 %v4210, %v4314
          %v4316 = vpop.f32.mrb[0].mxu0
          %4317 = vmatprep.mubr.f32.mxu0 %v3869
          %4318 = vmatmul.mubr.f32.gmra.mrb[0].mxu0 %v3868
          %v4319 = vpop.f32.mrb[0].mxu0
          %v4320 = vadd.f32 %v4215, %v4319
          %v4321 = vpop.f32.mrb[0].mxu0
          %4322 = vmatprep.mubr.f32.mxu0 %v3876
          %4323 = vmatmul.mubr.f32.gmra.mrb[0].mxu0 %v3875
          %v4324 = vpop.f32.mrb[0].mxu0
          %v4325 = vadd.f32 %v4220, %v4324
          %v4326 = vpop.f32.mrb[0].mxu0
          %4327 = vmatprep.mubr.f32.mxu0 %v3883
          %4328 = vmatmul.mubr.f32.gmra.mrb[0].mxu0 %v3882
          %v4329 = vpop.f32.mrb[0].mxu0
          %v4330 = vadd.f32 %v4225, %v4329
          %v4331 = vpop.f32.mrb[0].mxu0
          %4332 = vdwg.mxu0
          %4333 = vmatprep.subr.mxu0 0.0
          %4334 = vmatpush1.msra.mxu0 %v3981
          %4335 = vmatprep.subr.mxu0 0.0
          %4336 = vmatpush1.msra.mxu0 %v3982
          %4337 = vmatprep.subr.mxu0 0.0
          %4338 = vmatpush1.msra.mxu0 %v3983
          %4339 = vmatprep.subr.mxu0 0.0
          %4340 = vmatpush1.msra.mxu0 %v3984
          %4341 = vmatprep.subr.mxu0 0.0
          %4342 = vmatpush1.msra.mxu0 %v3985
          %4343 = vmatprep.subr.mxu0 0.0
          %4344 = vmatpush1.msra.mxu0 %v3986
          %4345 = vmatprep.subr.mxu0 0.0
          %4346 = vmatpush1.msra.mxu0 %v3987
          %4347 = vmatprep.subr.mxu0 0.0
          %4348 = vmatpush1.msra.mxu0 %v3988
          %4349 = vmatprep.subr.mxu0 0.0
          %4350 = vmatpush1.msra.mxu0 %v3989
          %4351 = vmatprep.subr.mxu0 0.0
          %4352 = vmatpush1.msra.mxu0 %v3990
          %4353 = vmatprep.subr.mxu0 0.0
          %4354 = vmatpush1.msra.mxu0 %v3991
          %4355 = vmatprep.subr.mxu0 0.0
          %4356 = vmatpush1.msra.mxu0 %v3992
          %4357 = vmatprep.subr.mxu0 0.0
          %4358 = vmatpush1.msra.mxu0 0.0
          %4359 = vmatprep.subr.mxu0 0.0
          %4360 = vmatpush1.msra.mxu0 0.0
          %4361 = vmatprep.subr.mxu0 0.0
          %4362 = vmatpush1.msra.mxu0 0.0
          %4363 = vmatprep.subr.mxu0 0.0
          %4364 = vmatpush1.msra.mxu0 0.0
          %4365 = vmatprep.subr.mxu0 0.0
          %4366 = vmatpush1.msra.mxu0 0.0
          %4367 = vmatprep.subr.mxu0 0.0
          %4368 = vmatpush1.msra.mxu0 0.0
          %4369 = vmatprep.subr.mxu0 0.0
          %4370 = vmatpush1.msra.mxu0 0.0
          %4371 = vmatprep.subr.mxu0 0.0
          %4372 = vmatpush1.msra.mxu0 0.0
          %4373 = vmatprep.subr.mxu0 0.0
          %4374 = vmatpush1.msra.mxu0 0.0
          %4375 = vmatprep.subr.mxu0 0.0
          %4376 = vmatpush1.msra.mxu0 0.0
          %4377 = vmatprep.subr.mxu0 0.0
          %4378 = vmatpush1.msra.mxu0 0.0
          %4379 = vmatprep.subr.mxu0 0.0
          %4380 = vmatpush1.msra.mxu0 0.0
          %4381 = vmatprep.subr.mxu0 0.0
          %4382 = vmatpush1.msra.mxu0 0.0
          %4383 = vmatprep.subr.mxu0 0.0
          %4384 = vmatpush1.msra.mxu0 0.0
          %4385 = vmatprep.subr.mxu0 0.0
          %4386 = vmatpush1.msra.mxu0 0.0
          %4387 = vmatprep.subr.mxu0 0.0
          %4388 = vmatpush1.msra.mxu0 0.0
          %4389 = vmatprep.subr.mxu0 0.0
          %4390 = vmatpush1.msra.mxu0 0.0
          %4391 = vmatprep.subr.mxu0 0.0
          %4392 = vmatpush1.msra.mxu0 0.0
          %4393 = vmatprep.subr.mxu0 0.0
          %4394 = vmatpush1.msra.mxu0 0.0
          %4395 = vmatprep.subr.mxu0 0.0
          %4396 = vmatpush1.msra.mxu0 0.0
          %4397 = vmatprep.mubr.f32.mxu0 0.0
          %4398 = vmatmul.mubr.f32.gmra.mrb[0].mxu0 %v3995
          %v4399 = vpop.f32.mrb[0].mxu0
          %v4400 = vadd.f32 %v4295, %v4399
          %v4401 = vpop.f32.mrb[0].mxu0
          %4402 = vmatprep.mubr.f32.mxu0 0.0
          %4403 = vmatmul.mubr.f32.gmra.mrb[0].mxu0 %v3998
          %v4404 = vpop.f32.mrb[0].mxu0
          %v4405 = vadd.f32 %v4300, %v4404
          %v4406 = vpop.f32.mrb[0].mxu0
          %4407 = vmatprep.mubr.f32.mxu0 0.0
          %4408 = vmatmul.mubr.f32.gmra.mrb[0].mxu0 %v4001
          %v4409 = vpop.f32.mrb[0].mxu0
          %v4410 = vadd.f32 %v4305, %v4409
          %v4411 = vpop.f32.mrb[0].mxu0
          %4412 = vmatprep.mubr.f32.mxu0 0.0
          %4413 = vmatmul.mubr.f32.gmra.mrb[0].mxu0 %v4004
          %v4414 = vpop.f32.mrb[0].mxu0
          %v4415 = vadd.f32 %v4310, %v4414
          %v4416 = vpop.f32.mrb[0].mxu0
          %4417 = vmatprep.mubr.f32.mxu0 0.0
          %4418 = vmatmul.mubr.f32.gmra.mrb[0].mxu0 %v4007
          %v4419 = vpop.f32.mrb[0].mxu0
          %v4420 = vadd.f32 %v4315, %v4419
          %v4421 = vpop.f32.mrb[0].mxu0
          %4422 = vmatprep.mubr.f32.mxu0 0.0
          %4423 = vmatmul.mubr.f32.gmra.mrb[0].mxu0 %v4010
          %v4424 = vpop.f32.mrb[0].mxu0
          %v4425 = vadd.f32 %v4320, %v4424
          %v4426 = vpop.f32.mrb[0].mxu0
          %4427 = vmatprep.mubr.f32.mxu0 0.0
          %4428 = vmatmul.mubr.f32.gmra.mrb[0].mxu0 %v4013
          %v4429 = vpop.f32.mrb[0].mxu0
          %v4430 = vadd.f32 %v4325, %v4429
          %v4431 = vpop.f32.mrb[0].mxu0
          %4432 = vmatprep.mubr.f32.mxu0 0.0
          %4433 = vmatmul.mubr.f32.gmra.mrb[0].mxu0 %v4016
          %v4434 = vpop.f32.mrb[0].mxu0
          %v4435 = vadd.f32 %v4330, %v4434
          %v4436 = vpop.f32.mrb[0].mxu0
          %4437 = vdwg.mxu0
          %v4438 = vmax.f32 %v4400, 0.0
          %v4439 = vmax.f32 %v4405, 0.0
          %v4440 = vmax.f32 %v4410, 0.0
          %v4441 = vmax.f32 %v4415, 0.0
          %v4442 = vmax.f32 %v4420, 0.0
          %v4443 = vmax.f32 %v4425, 0.0
          %v4444 = vmax.f32 %v4430, 0.0
          %v4445 = vmax.f32 %v4435, 0.0
          %s4446 = smul.u32 %s1332, 64
          %s4447 = scalar_lea.vmem %s217, %s4446 [#allocation5]
          %4448 = vst.msk [vmem:[%s4447] sm:$0xff] %vm232, %v4438
          %4449 = vst.msk [vmem:[%s4447 + $0x8] sm:$0xff] %vm232, %v4439
          %4450 = vst.msk [vmem:[%s4447 + $0x10] sm:$0xff] %vm232, %v4440
          %4451 = vst.msk [vmem:[%s4447 + $0x18] sm:$0xff] %vm232, %v4441
          %4452 = vst.msk [vmem:[%s4447 + $0x20] sm:$0xff] %vm232, %v4442
          %4453 = vst.msk [vmem:[%s4447 + $0x28] sm:$0xff] %vm232, %v4443
          %4454 = vst.msk [vmem:[%s4447 + $0x30] sm:$0xff] %vm232, %v4444
          %4455 = vst.msk [vmem:[%s4447 + $0x38] sm:$0xff] %vm232, %v4445
        $region45: #{basic_block_forward.1} parent=39 // loop_footer
          %s1336 = sadd.s32 1, %s1332
        $region46: #{basic_block_forward.1} parent=39 // loop_footer_branch
          %1331 = sbr.rel target = $region42
        $region47: #{basic_block_forward.1} parent=39 // loop_exit
          _
        %s4456 = sand.u32 %s137, 1
        %s4457 = scalar_lea.sflag [#allocation6], %s4456
        %s4458 = sand.u32 %s137, 1
        %s4459 = smul.addr %s4458, 512
        %s4460 = scalar_lea.vmem [#allocation5], %s4459
        // Predicated region
        $region64: #{basic_block_forward.1} parent=39 // pred_check
          %p4461 = pneg %p147
        $region65: #{basic_block_forward.1} parent=39 // pred_check_branch
          %4463 = sbr.rel (%p4461) target = $region67
        $region66: #{basic_block_forward.1} parent=39 // pred_region
          %s4465 = ssub.s32 8192, 8192
          %4466 = vsyncadd %s4457, %s4465
          %s4467 = smul.addr %s19, 64
          %s4468 = smul.addr %s4467, 128
          %s4469 = scalar_lea.hbm %s5, %s4468
          %s4470 = sshll.u32 %s4460, 4
          %s4471 = int_to_ptr.vmem [resolvable:$true] %s4470
          %4476 = dma.vmem_to_hbm [thread:$0]  %s4471, 8192, %s4469, %s4457, 128, 128, 8
        $region67: #{basic_block_forward.1} parent=39 // pred_fallthru
          _
      $region40: #{basic_block_forward.1} parent=5 // pred_fallthru
        _
      %p4477 = scmp.le.s32.totalorder 2, %s14
      // Predicated region
      $region68: #{basic_block_forward.1} parent=5 // pred_check
        %p4478 = pneg %p4477
      $region69: #{basic_block_forward.1} parent=5 // pred_check_branch
        %4480 = sbr.rel (%p4478) target = $region71
      $region70: #{basic_block_forward.1} parent=5 // pred_region
        %s4481 = ssub.s32 %s14, 2
        // Predicated region
        $region72: #{basic_block_forward.1} parent=70 // pred_check
          %p4482 = pneg %p153
        $region73: #{basic_block_forward.1} parent=70 // pred_check_branch
          %4484 = sbr.rel (%p4482) target = $region75
        $region74: #{basic_block_forward.1} parent=70 // pred_region
          %s4485 = sand.u32 %s138, 1
          %s4486 = scalar_lea.sflag [#allocation6], %s4485
          %s4487 = sand.u32 %s138, 1
          %s4488 = smul.addr %s4487, 512
          %s4489 = scalar_lea.vmem [#allocation5], %s4488
          %4490 = dma.done %s4486, 8192
        $region75: #{basic_block_forward.1} parent=70 // pred_fallthru
          _
      $region71: #{basic_block_forward.1} parent=5 // pred_fallthru
        _
    $region6: #{basic_block_forward.1} parent=1 // loop_footer
      %s18 = sadd.s32 1, %s14
    $region7: #{basic_block_forward.1} parent=1 // loop_footer_branch
      %13 = sbr.rel target = $region3
    $region8: #{basic_block_forward.1} parent=1 // loop_exit
      _
    %4491 = vsyncpa [#allocation6], 1
    %s4492 = scalar_lea.sflag [#allocation6], 1
    %4493 = vsyncpa %s4492, 1

</llo_original>
